<compile_context>
chip_gen: v7x
topology: tpu7x:2x2x1
jax: 0.10.0
libtpu: 0.0.40
codegen_flags: <defaults>
</compile_context>

<pallas_src>
import functools

import jax
import jax.numpy as jnp
import numpy as np
from jax.experimental import pallas as pl
from jax.experimental.pallas import tpu as pltpu

_SUBLANE = 16  # multiple of 16 so bf16 sublane packing stays aligned


def _round_up(v, m):
    return (v + m - 1) // m * m


def _residual_sine_kernel(x_ref, w1_ref, b1_ref, w2_ref, b2_ref, o_ref, *,
                          weight_2, matmul_dtype):
    x = x_ref[...]                                          # [tm, in_f]

    # linear_1 (omega_0 and weight_1 already folded into w1/b1)
    h1 = jnp.dot(x.astype(matmul_dtype), w1_ref[...],
                 preferred_element_type=jnp.float32) + b1_ref[...]
    sine_1 = jnp.sin(h1)

    # linear_2 (omega_0 already folded into w2/b2)
    h2 = jnp.dot(sine_1.astype(matmul_dtype), w2_ref[...],
                 preferred_element_type=jnp.float32) + b2_ref[...]
    sine_2 = jnp.sin(h2)

    res = x.astype(jnp.float32) + sine_2
    if weight_2 != 1.0:                                     # trace-time check
        res = weight_2 * res
    o_ref[...] = res.astype(o_ref.dtype)


def residual_sine_block(x, w1, b1, w2, b2, *,
                        omega_0=30.0, weight_1=1.0, weight_2=1.0,
                        tile_rows=4096, matmul_dtype=jnp.bfloat16,
                        out_dtype=None):
    """x: [N, in_f], w1: [in_f, inter], b1: [1, inter] or [inter],
       w2: [inter, in_f], b2: [1, in_f] or [in_f]  ->  [N, in_f]"""
    N, in_f = x.shape
    inter = w1.shape[1]
    assert w1.shape == (in_f, inter)
    assert w2.shape == (inter, in_f)

    # Scalars must be concrete (folded at trace time), not traced values.
    omega_0 = float(omega_0)
    weight_1 = float(weight_1)
    weight_2 = float(weight_2)
    out_dtype = x.dtype if out_dtype is None else jnp.dtype(out_dtype)

    # --- Fold scalar scales into the parameters (tiny, one-time, in XLA). ---
    w1f = (jnp.asarray(w1, jnp.float32) * (weight_1 * omega_0)).astype(matmul_dtype)
    b1f = jnp.reshape(b1, (1, inter)).astype(jnp.float32) * omega_0
    w2f = (jnp.asarray(w2, jnp.float32) * omega_0).astype(matmul_dtype)
    b2f = jnp.reshape(b2, (1, in_f)).astype(jnp.float32) * omega_0

    # --- Row tiling: near-even split of N; >=2 blocks for v7x megacore. -----
    # Partial last block (<= 15 extra rows) is handled by Pallas out-of-bounds
    # masking -- no HBM-side batch padding, no output slicing.
    nb = max(pl.cdiv(N, int(tile_rows)), 2 if N >= 2 * _SUBLANE else 1)
    tm = _round_up(pl.cdiv(N, nb), _SUBLANE)
    grid = (pl.cdiv(N, tm),)

    kernel = functools.partial(_residual_sine_kernel,
                               weight_2=weight_2,
                               matmul_dtype=matmul_dtype)

    mm_b = np.dtype(matmul_dtype).itemsize
    cost = pl.CostEstimate(
        flops=int(4 * N * in_f * inter),                       # two matmuls
        transcendentals=int(N * (in_f + inter)),               # two sin passes
        bytes_accessed=int(N * in_f * (np.dtype(x.dtype).itemsize
                                       + np.dtype(out_dtype).itemsize)
                           + 2 * in_f * inter * mm_b
                           + (in_f + inter) * 4))

    return pl.pallas_call(
        kernel,
        out_shape=jax.ShapeDtypeStruct((N, in_f), out_dtype),
        grid_spec=pl.GridSpec(
            grid=grid,
            in_specs=[
                pl.BlockSpec((tm, in_f), lambda i: (i, 0)),       # x tile
                pl.BlockSpec((in_f, inter), lambda i: (0, 0)),    # W1 (resident)
                pl.BlockSpec((1, inter), lambda i: (0, 0)),       # b1
                pl.BlockSpec((inter, in_f), lambda i: (0, 0)),    # W2 (resident)
                pl.BlockSpec((1, in_f), lambda i: (0, 0)),        # b2
            ],
            out_specs=pl.BlockSpec((tm, in_f), lambda i: (i, 0)),
        ),
        compiler_params=pltpu.CompilerParams(
            dimension_semantics=("parallel",),
            vmem_limit_bytes=32 * 1024 * 1024),
        cost_estimate=cost,
    )(x, w1f, b1f, w2f, b2f)


def _reference(x, w1, b1, w2, b2, omega_0, weight_1, weight_2):
    x = x.astype(jnp.float32)
    s1 = jnp.sin(omega_0 * ((weight_1 * x) @ w1 + jnp.reshape(b1, (1, -1))))
    s2 = jnp.sin(omega_0 * (s1 @ w2 + jnp.reshape(b2, (1, -1))))
    return weight_2 * (x + s2)


if __name__ == "__main__":
    omega_0 = 30.0
    key = jax.random.PRNGKey(0)

    # Config 1 exercises non-128 feature dims + a partial last row block
    # (N=300 -> two blocks of 160); config 2 exercises ave_first/ave_second
    # scalar folding and an exact two-block split.
    configs = [
        dict(in_f=48, inter=96, N=300, weight_1=1.0, weight_2=1.0),
        dict(in_f=64, inter=128, N=1024, weight_1=0.5, weight_2=0.5),
    ]

    for cfg in configs:
        in_f, inter, N = cfg["in_f"], cfg["inter"], cfg["N"]
        key, kx, kw1, kb1, kw2, kb2 = jax.random.split(key, 6)

        # init_weights(): both weights ~ U(-sqrt(6/in_f)/omega_0, +...)
        bound_w = np.sqrt(6.0 / in_f) / omega_0
        w1 = jax.random.uniform(kw1, (in_f, inter), jnp.float32,
                                -bound_w, bound_w)
        w2 = jax.random.uniform(kw2, (inter, in_f), jnp.float32,
                                -bound_w, bound_w)
        # Biases: nn.Linear default U(-1/sqrt(fan_in), 1/sqrt(fan_in))
        b1 = jax.random.uniform(kb1, (1, inter), jnp.float32,
                                -1.0 / np.sqrt(in_f), 1.0 / np.sqrt(in_f))
        b2 = jax.random.uniform(kb2, (1, in_f), jnp.float32,
                                -1.0 / np.sqrt(inter), 1.0 / np.sqrt(inter))
        x = jax.random.normal(kx, (N, in_f), jnp.float32)

        ref = np.asarray(_reference(x, w1, b1, w2, b2, omega_0,
                                    cfg["weight_1"], cfg["weight_2"]))

        # f32 matmul path: tight tolerance.
        out32 = residual_sine_block(x, w1, b1, w2, b2,
                                    omega_0=omega_0,
                                    weight_1=cfg["weight_1"],
                                    weight_2=cfg["weight_2"],
                                    matmul_dtype=jnp.float32)
        out32 = jax.block_until_ready(out32)
        np.testing.assert_allclose(np.asarray(out32), ref,
                                   rtol=1e-4, atol=1e-4)

        # bf16 matmul path (default, perf-tuned): looser tolerance since
        # omega_0=30 folded into the weights amplifies operand rounding
        # before sin().
        outbf = residual_sine_block(x, w1, b1, w2, b2,
                                    omega_0=omega_0,
                                    weight_1=cfg["weight_1"],
                                    weight_2=cfg["weight_2"])
        outbf = jax.block_until_ready(outbf)
        np.testing.assert_allclose(np.asarray(outbf), ref,
                                   rtol=3e-2, atol=6e-2)

        # bf16 output stream option (v5e bandwidth saver): very loose check.
        outb16 = residual_sine_block(x, w1, b1, w2, b2,
                                     omega_0=omega_0,
                                     weight_1=cfg["weight_1"],
                                     weight_2=cfg["weight_2"],
                                     out_dtype=jnp.bfloat16)
        outb16 = jax.block_until_ready(outb16)
        np.testing.assert_allclose(np.asarray(outb16, dtype=np.float32), ref,
                                   rtol=5e-2, atol=1e-1)

    print("KERNEL_OK")
</pallas_src>

<mosaic_0001>
module attributes {stable_mosaic.version = 11 : i64} {
  func.func @_residual_sine_kernel(%arg0: i32, %arg1: memref<160x48xf32, #tpu.memory_space<vmem>>, %arg2: memref<48x96xf32, #tpu.memory_space<vmem>>, %arg3: memref<1x96xf32, #tpu.memory_space<vmem>>, %arg4: memref<96x48xf32, #tpu.memory_space<vmem>>, %arg5: memref<1x48xf32, #tpu.memory_space<vmem>>, %arg6: memref<160x48xf32, #tpu.memory_space<vmem>>) attributes {dimension_semantics = [#tpu.dimension_semantics<parallel>], iteration_bounds = array<i64: 2>, scalar_prefetch = 0 : i64, scratch_operands = 0 : i64, tpu.core_type = #tpu.core_type<tc>, window_params = [{transform_indices = @transform_0, window_bounds = array<i64: 160, 48>}, {pipeline_mode = #tpu.pipeline_mode<synchronous>, transform_indices = @transform_1, window_bounds = array<i64: 48, 96>}, {pipeline_mode = #tpu.pipeline_mode<synchronous>, transform_indices = @transform_2, window_bounds = array<i64: 1, 96>}, {pipeline_mode = #tpu.pipeline_mode<synchronous>, transform_indices = @transform_3, window_bounds = array<i64: 96, 48>}, {pipeline_mode = #tpu.pipeline_mode<synchronous>, transform_indices = @transform_4, window_bounds = array<i64: 1, 48>}, {transform_indices = @transform_5, window_bounds = array<i64: 160, 48>}]} {
    %c0 = arith.constant 0 : index
    %c0_0 = arith.constant 0 : index
    %0 = vector.load %arg1[%c0, %c0_0] : memref<160x48xf32, #tpu.memory_space<vmem>>, vector<160x48xf32>
    %c0_1 = arith.constant 0 : index
    %c0_2 = arith.constant 0 : index
    %1 = vector.load %arg2[%c0_1, %c0_2] : memref<48x96xf32, #tpu.memory_space<vmem>>, vector<48x96xf32>
    %cst = arith.constant dense<0.000000e+00> : vector<160x96xf32>
    %2 = tpu.matmul %0, %1, %cst {dimension_numbers = #tpu.dot_dimension_numbers<[1], [0], [0], [1], [0, 0, 1, 1], [], []>} : vector<160x48xf32>, vector<48x96xf32>, vector<160x96xf32> -> vector<160x96xf32>
    %c0_3 = arith.constant 0 : index
    %c0_4 = arith.constant 0 : index
    %3 = vector.load %arg3[%c0_3, %c0_4] : memref<1x96xf32, #tpu.memory_space<vmem>>, vector<1x96xf32>
    %4 = vector.broadcast %3 : vector<1x96xf32> to vector<160x96xf32>
    %5 = arith.addf %2, %4 : vector<160x96xf32>
    %6 = math.sin %5 : vector<160x96xf32>
    %c0_5 = arith.constant 0 : index
    %c0_6 = arith.constant 0 : index
    %7 = vector.load %arg4[%c0_5, %c0_6] : memref<96x48xf32, #tpu.memory_space<vmem>>, vector<96x48xf32>
    %cst_7 = arith.constant dense<0.000000e+00> : vector<160x48xf32>
    %8 = tpu.matmul %6, %7, %cst_7 {dimension_numbers = #tpu.dot_dimension_numbers<[1], [0], [0], [1], [0, 0, 1, 1], [], []>} : vector<160x96xf32>, vector<96x48xf32>, vector<160x48xf32> -> vector<160x48xf32>
    %c0_8 = arith.constant 0 : index
    %c0_9 = arith.constant 0 : index
    %9 = vector.load %arg5[%c0_8, %c0_9] : memref<1x48xf32, #tpu.memory_space<vmem>>, vector<1x48xf32>
    %10 = vector.broadcast %9 : vector<1x48xf32> to vector<160x48xf32>
    %11 = arith.addf %8, %10 : vector<160x48xf32>
    %12 = math.sin %11 : vector<160x48xf32>
    %13 = arith.addf %0, %12 : vector<160x48xf32>
    %c0_10 = arith.constant 0 : index
    %c0_11 = arith.constant 0 : index
    %14 = vector.load %arg6[%c0_10, %c0_11] : memref<160x48xf32, #tpu.memory_space<vmem>>, vector<160x48xf32>
    tpu.vector_store %arg6[%c0_10, %c0_11], %13 {strides = array<i32>} : memref<160x48xf32, #tpu.memory_space<vmem>>, vector<160x48xf32>,
    return
  }
  func.func @transform_0(%arg0: i32) -> (i32, i32) {
    %c0_i32 = arith.constant 0 : i32
    %c0_i32_0 = arith.constant 0 : i32
    return %arg0, %c0_i32 : i32, i32
  }
  func.func @transform_1(%arg0: i32) -> (i32, i32) {
    %c0_i32 = arith.constant 0 : i32
    %c0_i32_0 = arith.constant 0 : i32
    %c0_i32_1 = arith.constant 0 : i32
    return %c0_i32, %c0_i32_0 : i32, i32
  }
  func.func @transform_2(%arg0: i32) -> (i32, i32) {
    %c0_i32 = arith.constant 0 : i32
    %c0_i32_0 = arith.constant 0 : i32
    %c0_i32_1 = arith.constant 0 : i32
    return %c0_i32, %c0_i32_0 : i32, i32
  }
  func.func @transform_3(%arg0: i32) -> (i32, i32) {
    %c0_i32 = arith.constant 0 : i32
    %c0_i32_0 = arith.constant 0 : i32
    %c0_i32_1 = arith.constant 0 : i32
    return %c0_i32, %c0_i32_0 : i32, i32
  }
  func.func @transform_4(%arg0: i32) -> (i32, i32) {
    %c0_i32 = arith.constant 0 : i32
    %c0_i32_0 = arith.constant 0 : i32
    %c0_i32_1 = arith.constant 0 : i32
    return %c0_i32, %c0_i32_0 : i32, i32
  }
  func.func @transform_5(%arg0: i32) -> (i32, i32) {
    %c0_i32 = arith.constant 0 : i32
    %c0_i32_0 = arith.constant 0 : i32
    return %arg0, %c0_i32 : i32, i32
  }
}

</mosaic_0001>

<llo_original>
// kernel: tpu_custom_call.1
$region0: #{tpu_custom_call.1}
  #allocation0 [shape = 'u32[]', space=smem, size = 0x4, offset = 0x4, fixed_abs, tag = 'smem constant byte address 0x4 - core index']
  #allocation1 [shape = 'u32[144,128]{1,0:T(1,128)}', space=vmem, size = 0x12000, scoped, tag = 'internal scratch']
  %s0 = inlined_call_operand.vmem [shape: f32[300,48], index: 0, kind: input, shape index: {}]
  %s1 = inlined_call_operand.vmem [shape: f32[48,96], index: 1, kind: input, shape index: {}]
  %s2 = inlined_call_operand.vmem [shape: f32[1,96], index: 2, kind: input, shape index: {}]
  %s3 = inlined_call_operand.vmem [shape: f32[96,48], index: 3, kind: input, shape index: {}]
  %s4 = inlined_call_operand.vmem [shape: f32[1,48], index: 4, kind: input, shape index: {}]
  %s5 = inlined_call_operand.vmem [shape: f32[300,48], index: 5, kind: output, shape index: {}]
  %s6 = sld [smem:[#allocation0]]
  $region101: #{tpu_custom_call.1} parent=0
    _
  %s8 = ssub.s32 1, %s6
  %s9 = scalar_select 0, %s8, %s6
  $region1: #{tpu_custom_call.1} parent=0
    #allocation2 [shape = 'u8[163840]{0}', space=vmem, size = 0x28000, scoped, tag = 'output window, operand 0']
    loop: start=0, step=1, limit=4
    $region2: #{tpu_custom_call.1} parent=1 // loop_pre_header
      _
    $region3: #{tpu_custom_call.1} parent=1 // loop_header
      %s11 = sphi 0, %s15
      %p12 = scmp.ge.s32.totalorder %s11, 4
      %s21 = sphi 0, %s23
      %s24 = sphi 0, %s21
      %s25 = sphi 0, %s24
      %s41 = sphi 0, %s25
      %s45 = sphi 0, %s45
      %s47 = sphi 0, %s45
      %s48 = sphi 0, %s47
      %s62 = sphi 0, %s48
      %s66 = sphi 0, %s66
      %s68 = sphi 0, %s66
      %s69 = sphi 0, %s68
      %s83 = sphi 0, %s69
      %s87 = sphi 0, %s87
      %s89 = sphi 0, %s87
      %s90 = sphi 0, %s89
      %s104 = sphi 0, %s90
      %s108 = sphi 0, %s108
      %s110 = sphi 0, %s108
      %s111 = sphi 0, %s110
      %s125 = sphi 0, %s111
      %s131 = sphi 0, %s133
      %s134 = sphi 0, %s131
      %s135 = sphi 0, %s134
      %s151 = sphi 0, %s135
    $region4: #{tpu_custom_call.1} parent=1 // loop_header_branch
      %14 = sbr.rel (%p12) target = $region8
    $region5: #{tpu_custom_call.1} parent=1 // loop_body
      %s16 = ssub.s32 %s11, 1
      %s17 = ssub.s32 %s11, 2
      %s18 = sadd.s32 %s11, 1
      %s19 = ssub.s32 %s11, %s18
      %p20 = scmp.eq.s32.totalorder %s19, 0
      %s22 = sadd.s32 %s21, 1
      %s23 = scalar_select %p20, %s21, %s22
      %p26 = pneg %p20
      %p27 = scmp.eq.s32.totalorder %s11, 1
      %p28 = por %p26, %p27
      %p29 = scmp.ne.s32.totalorder %s21, %s24
      %p30 = scmp.eq.s32.totalorder %s11, 0
      %p31 = por %p29, %p30
      %p32 = scmp.ne.s32.totalorder %s21, %s24
      %p33 = scmp.eq.s32.totalorder %s16, 1
      %p34 = por %p32, %p33
      %p35 = scmp.ne.s32.totalorder %s24, %s25
      %p36 = scmp.eq.s32.totalorder %s16, 0
      %p37 = por %p35, %p36
      %p38 = scmp.ne.s32.totalorder %s24, %s25
      %p39 = scmp.eq.s32.totalorder %s17, 1
      %p40 = por %p38, %p39
      %p42 = scmp.ne.s32.totalorder %s25, %s41
      %p43 = scmp.eq.s32.totalorder %s17, 0
      %p44 = por %p42, %p43
      %s46 = sadd.s32 %s45, 1
      %p49 = scmp.eq.s32.totalorder %s11, 1
      %p50 = scmp.ne.s32.totalorder %s45, %s47
      %p51 = scmp.eq.s32.totalorder %s11, 0
      %p52 = por %p50, %p51
      %p53 = scmp.ne.s32.totalorder %s45, %s47
      %p54 = scmp.eq.s32.totalorder %s16, 1
      %p55 = por %p53, %p54
      %p56 = scmp.ne.s32.totalorder %s47, %s48
      %p57 = scmp.eq.s32.totalorder %s16, 0
      %p58 = por %p56, %p57
      %p59 = scmp.ne.s32.totalorder %s47, %s48
      %p60 = scmp.eq.s32.totalorder %s17, 1
      %p61 = por %p59, %p60
      %p63 = scmp.ne.s32.totalorder %s48, %s62
      %p64 = scmp.eq.s32.totalorder %s17, 0
      %p65 = por %p63, %p64
      %s67 = sadd.s32 %s66, 1
      %p70 = scmp.eq.s32.totalorder %s11, 1
      %p71 = scmp.ne.s32.totalorder %s66, %s68
      %p72 = scmp.eq.s32.totalorder %s11, 0
      %p73 = por %p71, %p72
      %p74 = scmp.ne.s32.totalorder %s66, %s68
      %p75 = scmp.eq.s32.totalorder %s16, 1
      %p76 = por %p74, %p75
      %p77 = scmp.ne.s32.totalorder %s68, %s69
      %p78 = scmp.eq.s32.totalorder %s16, 0
      %p79 = por %p77, %p78
      %p80 = scmp.ne.s32.totalorder %s68, %s69
      %p81 = scmp.eq.s32.totalorder %s17, 1
      %p82 = por %p80, %p81
      %p84 = scmp.ne.s32.totalorder %s69, %s83
      %p85 = scmp.eq.s32.totalorder %s17, 0
      %p86 = por %p84, %p85
      %s88 = sadd.s32 %s87, 1
      %p91 = scmp.eq.s32.totalorder %s11, 1
      %p92 = scmp.ne.s32.totalorder %s87, %s89
      %p93 = scmp.eq.s32.totalorder %s11, 0
      %p94 = por %p92, %p93
      %p95 = scmp.ne.s32.totalorder %s87, %s89
      %p96 = scmp.eq.s32.totalorder %s16, 1
      %p97 = por %p95, %p96
      %p98 = scmp.ne.s32.totalorder %s89, %s90
      %p99 = scmp.eq.s32.totalorder %s16, 0
      %p100 = por %p98, %p99
      %p101 = scmp.ne.s32.totalorder %s89, %s90
      %p102 = scmp.eq.s32.totalorder %s17, 1
      %p103 = por %p101, %p102
      %p105 = scmp.ne.s32.totalorder %s90, %s104
      %p106 = scmp.eq.s32.totalorder %s17, 0
      %p107 = por %p105, %p106
      %s109 = sadd.s32 %s108, 1
      %p112 = scmp.eq.s32.totalorder %s11, 1
      %p113 = scmp.ne.s32.totalorder %s108, %s110
      %p114 = scmp.eq.s32.totalorder %s11, 0
      %p115 = por %p113, %p114
      %p116 = scmp.ne.s32.totalorder %s108, %s110
      %p117 = scmp.eq.s32.totalorder %s16, 1
      %p118 = por %p116, %p117
      %p119 = scmp.ne.s32.totalorder %s110, %s111
      %p120 = scmp.eq.s32.totalorder %s16, 0
      %p121 = por %p119, %p120
      %p122 = scmp.ne.s32.totalorder %s110, %s111
      %p123 = scmp.eq.s32.totalorder %s17, 1
      %p124 = por %p122, %p123
      %p126 = scmp.ne.s32.totalorder %s111, %s125
      %p127 = scmp.eq.s32.totalorder %s17, 0
      %p128 = por %p126, %p127
      %s129 = ssub.s32 %s11, %s18
      %p130 = scmp.eq.s32.totalorder %s129, 0
      %s132 = sadd.s32 %s131, 1
      %s133 = scalar_select %p130, %s131, %s132
      %p136 = pneg %p130
      %p137 = scmp.eq.s32.totalorder %s11, 1
      %p138 = por %p136, %p137
      %p139 = scmp.ne.s32.totalorder %s131, %s134
      %p140 = scmp.eq.s32.totalorder %s11, 0
      %p141 = por %p139, %p140
      %p142 = scmp.ne.s32.totalorder %s131, %s134
      %p143 = scmp.eq.s32.totalorder %s16, 1
      %p144 = por %p142, %p143
      %p145 = scmp.ne.s32.totalorder %s134, %s135
      %p146 = scmp.eq.s32.totalorder %s16, 0
      %p147 = por %p145, %p146
      %p148 = scmp.ne.s32.totalorder %s134, %s135
      %p149 = scmp.eq.s32.totalorder %s17, 1
      %p150 = por %p148, %p149
      %p152 = scmp.ne.s32.totalorder %s135, %s151
      %p153 = scmp.eq.s32.totalorder %s17, 0
      %p154 = por %p152, %p153
      %p155 = scmp.le.s32.totalorder 1, %s11
      %p156 = scmp.lt.s32.totalorder %s11, 3
      %p157 = pnand %p155, %p156
      %p158 = pneg %p157
      // Predicated region
      $region9: #{tpu_custom_call.1} parent=5 // pred_check
        _
      $region10: #{tpu_custom_call.1} parent=5 // pred_check_branch
        %160 = sbr.rel (%p157) target = $region12
      $region11: #{tpu_custom_call.1} parent=5 // pred_region
        %s161 = ssub.s32 %s11, 1
        // Predicated region
        $region13: #{tpu_custom_call.1} parent=11 // pred_check
          %p162 = pneg %p58
        $region14: #{tpu_custom_call.1} parent=11 // pred_check_branch
          %164 = sbr.rel (%p162) target = $region16
        $region15: #{tpu_custom_call.1} parent=11 // pred_region
          _
        $region16: #{tpu_custom_call.1} parent=11 // pred_fallthru
          _
        // Predicated region
        $region17: #{tpu_custom_call.1} parent=11 // pred_check
          %p165 = pneg %p79
        $region18: #{tpu_custom_call.1} parent=11 // pred_check_branch
          %167 = sbr.rel (%p165) target = $region20
        $region19: #{tpu_custom_call.1} parent=11 // pred_region
          _
        $region20: #{tpu_custom_call.1} parent=11 // pred_fallthru
          _
        // Predicated region
        $region21: #{tpu_custom_call.1} parent=11 // pred_check
          %p168 = pneg %p100
        $region22: #{tpu_custom_call.1} parent=11 // pred_check_branch
          %170 = sbr.rel (%p168) target = $region24
        $region23: #{tpu_custom_call.1} parent=11 // pred_region
          _
        $region24: #{tpu_custom_call.1} parent=11 // pred_fallthru
          _
        // Predicated region
        $region25: #{tpu_custom_call.1} parent=11 // pred_check
          %p171 = pneg %p121
        $region26: #{tpu_custom_call.1} parent=11 // pred_check_branch
          %173 = sbr.rel (%p171) target = $region28
        $region27: #{tpu_custom_call.1} parent=11 // pred_region
          _
        $region28: #{tpu_custom_call.1} parent=11 // pred_fallthru
          _
      $region12: #{tpu_custom_call.1} parent=5 // pred_fallthru
        _
      %p174 = scmp.lt.s32.totalorder %s11, 2
      // Predicated region
      $region29: #{tpu_custom_call.1} parent=5 // pred_check
        %p175 = pneg %p174
      $region30: #{tpu_custom_call.1} parent=5 // pred_check_branch
        %177 = sbr.rel (%p175) target = $region32
      $region31: #{tpu_custom_call.1} parent=5 // pred_region
        // Predicated region
        $region33: #{tpu_custom_call.1} parent=31 // pred_check
          %p178 = pneg %p31
        $region34: #{tpu_custom_call.1} parent=31 // pred_check_branch
          %180 = sbr.rel (%p178) target = $region36
        $region35: #{tpu_custom_call.1} parent=31 // pred_region
          %s181 = smul.u32 20, %s11
          %s182 = ssub.s32 38, %s181
          %p183 = scmp.lt.s32.totalorder %s182, 20
          %s184 = scalar_select %p183, %s182, 20
          %s185 = smul.u32 128, %s184
          %p186 = scmp.lt.s32.totalorder %s181, 37
          %s187 = scalar_select %p186, %s181, 37
          %s188 = smul.addr %s187, 8
          %s189 = scalar_lea.vmem %s0, %s188
          %s190 = smul.u32 20, %s11
          %s191 = ssub.s32 38, %s190
          %p192 = scmp.lt.s32.totalorder %s191, 20
          %s193 = scalar_select %p192, %s191, 20
          %s194 = smul.u32 128, %s193
        $region36: #{tpu_custom_call.1} parent=31 // pred_fallthru
          _
      $region32: #{tpu_custom_call.1} parent=5 // pred_fallthru
        _
      %p195 = scmp.le.s32.totalorder 1, %s11
      %p196 = scmp.lt.s32.totalorder %s11, 3
      %p197 = pnand %p195, %p196
      %p198 = pneg %p197
      // Predicated region
      $region37: #{tpu_custom_call.1} parent=5 // pred_check
        _
      $region38: #{tpu_custom_call.1} parent=5 // pred_check_branch
        %200 = sbr.rel (%p197) target = $region40
      $region39: #{tpu_custom_call.1} parent=5 // pred_region
        %s201 = ssub.s32 %s11, 1
        %s202 = smul.u32 20, %s16
        %s203 = ssub.s32 38, %s202
        %p204 = scmp.lt.s32.totalorder %s203, 20
        %s205 = scalar_select %p204, %s203, 20
        %s206 = smul.u32 128, %s205
        %p207 = scmp.lt.s32.totalorder %s202, 37
        %s208 = scalar_select %p207, %s202, 37
        %s209 = smul.addr %s208, 8
        %s210 = scalar_lea.vmem %s0, %s209
        %p211 = pneg %p37
        %p212 = pneg %p34
        %p213 = pneg %p58
        %p214 = pneg %p55
        %p215 = pneg %p79
        %p216 = pneg %p76
        %p217 = pneg %p100
        %p218 = pneg %p97
        %p219 = pneg %p121
        %p220 = pneg %p118
        %p221 = pneg %p147
        %p222 = pneg %p144
        %s223 = sand.u32 %s134, 1
        %s224 = sand.u32 %s134, 1
        %s225 = smul.addr %s224, 160
        %s226 = scalar_lea.vmem [#allocation2], %s225
        %s227 = smul.u32 20, %s16
        %s228 = ssub.s32 38, %s227
        %p229 = scmp.lt.s32.totalorder %s228, 20
        %s230 = scalar_select %p229, %s228, 20
        %s231 = smul.u32 128, %s230
        %p232 = scmp.lt.s32.totalorder %s227, 37
        %s233 = scalar_select %p232, %s227, 37
        %s234 = smul.addr %s233, 8
        %s235 = scalar_lea.vmem %s0, %s234
        %s236 = smul.u32 20, %s16
        %s237 = ssub.s32 38, %s236
        %p238 = scmp.lt.s32.totalorder %s237, 20
        %s239 = scalar_select %p238, %s237, 20
        %s240 = smul.u32 128, %s239
        %s241 = smul.u32 20, %s16
        %s242 = ssub.s32 38, %s241
        %p243 = scmp.lt.s32.totalorder %s242, 20
        %s244 = scalar_select %p243, %s242, 20
        %s245 = smul.u32 128, %s244
        %v246 = vld [vmem:[%s235] sm:$0xff]
        %v247 = vld [vmem:[%s235 + $0x8] sm:$0xff]
        %v248 = vld [vmem:[%s235 + $0x10] sm:$0xff]
        %v249 = vld [vmem:[%s235 + $0x18] sm:$0xff]
        %v250 = vld [vmem:[%s235 + $0x20] sm:$0xff]
        %v251 = vld [vmem:[%s235 + $0x28] sm:$0xff]
        %v252 = vld [vmem:[%s235 + $0x30] sm:$0xff]
        %v253 = vld [vmem:[%s235 + $0x38] sm:$0xff]
        %v254 = vld [vmem:[%s235 + $0x40] sm:$0xff]
        %v255 = vld [vmem:[%s235 + $0x48] sm:$0xff]
        %v256 = vld [vmem:[%s235 + $0x50] sm:$0xff]
        %v257 = vld [vmem:[%s235 + $0x58] sm:$0xff]
        %v258 = vld [vmem:[%s235 + $0x60] sm:$0xff]
        %v259 = vld [vmem:[%s235 + $0x68] sm:$0xff]
        %v260 = vld [vmem:[%s235 + $0x70] sm:$0xff]
        %v261 = vld [vmem:[%s235 + $0x78] sm:$0xff]
        %v262 = vld [vmem:[%s235 + $0x80] sm:$0xff]
        %v263 = vld [vmem:[%s235 + $0x88] sm:$0xff]
        %v264 = vld [vmem:[%s235 + $0x90] sm:$0xff]
        %v265 = vld [vmem:[%s235 + $0x98] sm:$0xff]
        %v266 = vld [vmem:[%s1] sm:$0xff]
        %v267 = vld [vmem:[%s1 + $0x8] sm:$0xff]
        %v268 = vld [vmem:[%s1 + $0x10] sm:$0xff]
        %v269 = vld [vmem:[%s1 + $0x18] sm:$0xff]
        %v270 = vld [vmem:[%s1 + $0x20] sm:$0xff]
        %v271 = vld [vmem:[%s1 + $0x28] sm:$0xff]
        %v272 = vld [vmem:[%s2] sm:$0x1]
        %v274 = vlaneseq
        %v275 = vshrl.u32 %v274, 7
        %v276 = vsub.s32 0, %v275
        %v277 = vrot.slane %v272, %v276
        %vm279 = vcmask 392192
        %v281 = vsel %vm279, %v246, 0
        %v284 = vsel %vm279, %v247, 0
        %v287 = vsel %vm279, %v248, 0
        %v290 = vsel %vm279, %v249, 0
        %v293 = vsel %vm279, %v250, 0
        %v296 = vsel %vm279, %v251, 0
        %v299 = vsel %vm279, %v252, 0
        %v302 = vsel %vm279, %v253, 0
        %v305 = vsel %vm279, %v254, 0
        %v308 = vsel %vm279, %v255, 0
        %v311 = vsel %vm279, %v256, 0
        %v314 = vsel %vm279, %v257, 0
        %v317 = vsel %vm279, %v258, 0
        %v320 = vsel %vm279, %v259, 0
        %v323 = vsel %vm279, %v260, 0
        %v326 = vsel %vm279, %v261, 0
        %v329 = vsel %vm279, %v262, 0
        %v332 = vsel %vm279, %v263, 0
        %v335 = vsel %vm279, %v264, 0
        %v338 = vsel %vm279, %v265, 0
        %340 = vmatprep.subr.mxu0 0.0
        %341 = vmatpush1.msra.mxu0 %v266
        %342 = vmatprep.subr.mxu0 0.0
        %343 = vmatpush1.msra.mxu0 %v267
        %344 = vmatprep.subr.mxu0 0.0
        %345 = vmatpush1.msra.mxu0 %v268
        %346 = vmatprep.subr.mxu0 0.0
        %347 = vmatpush1.msra.mxu0 %v269
        %348 = vmatprep.subr.mxu0 0.0
        %349 = vmatpush1.msra.mxu0 %v270
        %350 = vmatprep.subr.mxu0 0.0
        %351 = vmatpush1.msra.mxu0 %v271
        %352 = vmatprep.subr.mxu0 0.0
        %353 = vmatpush1.msra.mxu0 0.0
        %354 = vmatprep.subr.mxu0 0.0
        %355 = vmatpush1.msra.mxu0 0.0
        %356 = vmatprep.subr.mxu0 0.0
        %357 = vmatpush1.msra.mxu0 0.0
        %358 = vmatprep.subr.mxu0 0.0
        %359 = vmatpush1.msra.mxu0 0.0
        %360 = vmatprep.subr.mxu0 0.0
        %361 = vmatpush1.msra.mxu0 0.0
        %362 = vmatprep.subr.mxu0 0.0
        %363 = vmatpush1.msra.mxu0 0.0
        %364 = vmatprep.subr.mxu0 0.0
        %365 = vmatpush1.msra.mxu0 0.0
        %366 = vmatprep.subr.mxu0 0.0
        %367 = vmatpush1.msra.mxu0 0.0
        %368 = vmatprep.subr.mxu0 0.0
        %369 = vmatpush1.msra.mxu0 0.0
        %370 = vmatprep.subr.mxu0 0.0
        %371 = vmatpush1.msra.mxu0 0.0
        %372 = vmatprep.subr.mxu0 0.0
        %373 = vmatpush1.msra.mxu0 0.0
        %374 = vmatprep.subr.mxu0 0.0
        %375 = vmatpush1.msra.mxu0 0.0
        %376 = vmatprep.subr.mxu0 0.0
        %377 = vmatpush1.msra.mxu0 0.0
        %378 = vmatprep.subr.mxu0 0.0
        %379 = vmatpush1.msra.mxu0 0.0
        %380 = vmatprep.subr.mxu0 0.0
        %381 = vmatpush1.msra.mxu0 0.0
        %382 = vmatprep.subr.mxu0 0.0
        %383 = vmatpush1.msra.mxu0 0.0
        %384 = vmatprep.subr.mxu0 0.0
        %385 = vmatpush1.msra.mxu0 0.0
        %386 = vmatprep.subr.mxu0 0.0
        %387 = vmatpush1.msra.mxu0 0.0
        %388 = vmatprep.subr.mxu0 0.0
        %389 = vmatpush1.msra.mxu0 0.0
        %390 = vmatprep.subr.mxu0 0.0
        %391 = vmatpush1.msra.mxu0 0.0
        %392 = vmatprep.subr.mxu0 0.0
        %393 = vmatpush1.msra.mxu0 0.0
        %394 = vmatprep.subr.mxu0 0.0
        %395 = vmatpush1.msra.mxu0 0.0
        %396 = vmatprep.subr.mxu0 0.0
        %397 = vmatpush1.msra.mxu0 0.0
        %398 = vmatprep.subr.mxu0 0.0
        %399 = vmatpush1.msra.mxu0 0.0
        %400 = vmatprep.subr.mxu0 0.0
        %401 = vmatpush1.msra.mxu0 0.0
        %402 = vmatprep.subr.mxu0 0.0
        %403 = vmatpush1.msra.mxu0 0.0
        %404 = vmatprep.mubr.f32.mxu0 0.0
        %405 = vmatmul.mubr.f32.gmra.mrb[0].mxu0 %v281
        %v406 = vpop.f32.mrb[0].mxu0
        %v407 = vadd.f32 %v277, %v406
        %v408 = vpop.f32.mrb[0].mxu0
        %409 = vmatprep.mubr.f32.mxu0 0.0
        %410 = vmatmul.mubr.f32.gmra.mrb[0].mxu0 %v284
        %v411 = vpop.f32.mrb[0].mxu0
        %v412 = vadd.f32 %v277, %v411
        %v413 = vpop.f32.mrb[0].mxu0
        %414 = vmatprep.mubr.f32.mxu0 0.0
        %415 = vmatmul.mubr.f32.gmra.mrb[0].mxu0 %v287
        %v416 = vpop.f32.mrb[0].mxu0
        %v417 = vadd.f32 %v277, %v416
        %v418 = vpop.f32.mrb[0].mxu0
        %419 = vmatprep.mubr.f32.mxu0 0.0
        %420 = vmatmul.mubr.f32.gmra.mrb[0].mxu0 %v290
        %v421 = vpop.f32.mrb[0].mxu0
        %v422 = vadd.f32 %v277, %v421
        %v423 = vpop.f32.mrb[0].mxu0
        %424 = vmatprep.mubr.f32.mxu0 0.0
        %425 = vmatmul.mubr.f32.gmra.mrb[0].mxu0 %v293
        %v426 = vpop.f32.mrb[0].mxu0
        %v427 = vadd.f32 %v277, %v426
        %v428 = vpop.f32.mrb[0].mxu0
        %429 = vmatprep.mubr.f32.mxu0 0.0
        %430 = vmatmul.mubr.f32.gmra.mrb[0].mxu0 %v296
        %v431 = vpop.f32.mrb[0].mxu0
        %v432 = vadd.f32 %v277, %v431
        %v433 = vpop.f32.mrb[0].mxu0
        %434 = vmatprep.mubr.f32.mxu0 0.0
        %435 = vmatmul.mubr.f32.gmra.mrb[0].mxu0 %v299
        %v436 = vpop.f32.mrb[0].mxu0
        %v437 = vadd.f32 %v277, %v436
        %v438 = vpop.f32.mrb[0].mxu0
        %439 = vmatprep.mubr.f32.mxu0 0.0
        %440 = vmatmul.mubr.f32.gmra.mrb[0].mxu0 %v302
        %v441 = vpop.f32.mrb[0].mxu0
        %v442 = vadd.f32 %v277, %v441
        %v443 = vpop.f32.mrb[0].mxu0
        %444 = vmatprep.mubr.f32.mxu0 0.0
        %445 = vmatmul.mubr.f32.gmra.mrb[0].mxu0 %v305
        %v446 = vpop.f32.mrb[0].mxu0
        %v447 = vadd.f32 %v277, %v446
        %v448 = vpop.f32.mrb[0].mxu0
        %449 = vmatprep.mubr.f32.mxu0 0.0
        %450 = vmatmul.mubr.f32.gmra.mrb[0].mxu0 %v308
        %v451 = vpop.f32.mrb[0].mxu0
        %v452 = vadd.f32 %v277, %v451
        %v453 = vpop.f32.mrb[0].mxu0
        %454 = vmatprep.mubr.f32.mxu0 0.0
        %455 = vmatmul.mubr.f32.gmra.mrb[0].mxu0 %v311
        %v456 = vpop.f32.mrb[0].mxu0
        %v457 = vadd.f32 %v277, %v456
        %v458 = vpop.f32.mrb[0].mxu0
        %459 = vmatprep.mubr.f32.mxu0 0.0
        %460 = vmatmul.mubr.f32.gmra.mrb[0].mxu0 %v314
        %v461 = vpop.f32.mrb[0].mxu0
        %v462 = vadd.f32 %v277, %v461
        %v463 = vpop.f32.mrb[0].mxu0
        %464 = vmatprep.mubr.f32.mxu0 0.0
        %465 = vmatmul.mubr.f32.gmra.mrb[0].mxu0 %v317
        %v466 = vpop.f32.mrb[0].mxu0
        %v467 = vadd.f32 %v277, %v466
        %v468 = vpop.f32.mrb[0].mxu0
        %469 = vmatprep.mubr.f32.mxu0 0.0
        %470 = vmatmul.mubr.f32.gmra.mrb[0].mxu0 %v320
        %v471 = vpop.f32.mrb[0].mxu0
        %v472 = vadd.f32 %v277, %v471
        %v473 = vpop.f32.mrb[0].mxu0
        %474 = vmatprep.mubr.f32.mxu0 0.0
        %475 = vmatmul.mubr.f32.gmra.mrb[0].mxu0 %v323
        %v476 = vpop.f32.mrb[0].mxu0
        %v477 = vadd.f32 %v277, %v476
        %v478 = vpop.f32.mrb[0].mxu0
        %479 = vmatprep.mubr.f32.mxu0 0.0
        %480 = vmatmul.mubr.f32.gmra.mrb[0].mxu0 %v326
        %v481 = vpop.f32.mrb[0].mxu0
        %v482 = vadd.f32 %v277, %v481
        %v483 = vpop.f32.mrb[0].mxu0
        %484 = vmatprep.mubr.f32.mxu0 0.0
        %485 = vmatmul.mubr.f32.gmra.mrb[0].mxu0 %v329
        %v486 = vpop.f32.mrb[0].mxu0
        %v487 = vadd.f32 %v277, %v486
        %v488 = vpop.f32.mrb[0].mxu0
        %489 = vmatprep.mubr.f32.mxu0 0.0
        %490 = vmatmul.mubr.f32.gmra.mrb[0].mxu0 %v332
        %v491 = vpop.f32.mrb[0].mxu0
        %v492 = vadd.f32 %v277, %v491
        %v493 = vpop.f32.mrb[0].mxu0
        %494 = vmatprep.mubr.f32.mxu0 0.0
        %495 = vmatmul.mubr.f32.gmra.mrb[0].mxu0 %v335
        %v496 = vpop.f32.mrb[0].mxu0
        %v497 = vadd.f32 %v277, %v496
        %v498 = vpop.f32.mrb[0].mxu0
        %499 = vmatprep.mubr.f32.mxu0 0.0
        %500 = vmatmul.mubr.f32.gmra.mrb[0].mxu0 %v338
        %v501 = vpop.f32.mrb[0].mxu0
        %v502 = vadd.f32 %v277, %v501
        %v503 = vpop.f32.mrb[0].mxu0
        %504 = vdwg.mxu0
        %v505 = vand.u32 2147483647, %v407
        %vm506 = vcmp.le.f32.partialorder %v505, 0.7853982
        %vm507 = vcmp.lt.s32.totalorder %v407, 0
        %v508 = vand.u32 %v407, 2139095040
        %v509 = vshrl.u32 %v508, 23
        %v510 = vsub.s32 %v509, 127
        %v511 = vand.u32 2147483647, %v407
        %v512 = vand.u32 %v511, 8388607
        %v513 = vor.u32 %v512, 8388608
        %v514 = vsub.s32 0, %v513
        %v515 = vadd.s32 %v510, 1
        %vm516 = vcmp.gt.s32.totalorder %v515, 0
        %v517 = vsel %vm516, %v515, 0
        %v518 = vshrl.u32 %v517, 5
        %v519 = vand.u32 %v517, 31
        %v520 = vsub.s32 32, %v519
        %v521 = vshrl.u32 683565275, %v520
        %v522 = vshll.u32 683565275, %v519
        %v523 = vshrl.u32 2475754826, %v520
        %v524 = vor.u32 %v522, %v523
        %v525 = vshll.u32 2475754826, %v519
        %v526 = vshrl.u32 2131351028, %v520
        %v527 = vor.u32 %v525, %v526
        %v528 = vshll.u32 2131351028, %v519
        %v529 = vshrl.u32 2102212464, %v520
        %v530 = vor.u32 %v528, %v529
        %v531 = vshll.u32 2102212464, %v519
        %v532 = vshrl.u32 920167782, %v520
        %v533 = vor.u32 %v531, %v532
        %v534 = vshll.u32 920167782, %v519
        %v535 = vshrl.u32 1326507024, %v520
        %v536 = vor.u32 %v534, %v535
        %vm537 = vcmp.lt.s32.totalorder %v518, 1
        %vm538 = vcmp.lt.s32.totalorder %v518, 2
        %vm539 = vcmp.lt.s32.totalorder %v518, 3
        %vm540 = vcmp.lt.s32.totalorder %v518, 4
        %v541 = vsel %vm537, %v521, %v524
        %v542 = vsel %vm540, %v530, 2102212464
        %v543 = vsel %vm539, %v527, %v542
        %v544 = vsel %vm538, %v541, %v543
        %v545 = vsel %vm537, %v524, %v527
        %v546 = vsel %vm540, %v533, 920167782
        %v547 = vsel %vm539, %v530, %v546
        %v548 = vsel %vm538, %v545, %v547
        %v549 = vsel %vm537, %v527, %v530
        %v550 = vsel %vm540, %v536, 1326507024
        %v551 = vsel %vm539, %v533, %v550
        %v552 = vsel %vm538, %v549, %v551
        %v553 = vshll.u32 %v513, 8
        %v554 = vmul.u32.u64.compose %v553, %v552
        %v555 = vextract.low.u32 %v554
        %v556 = vextract.high.u32 %v554
        %v557 = vmul.u32.u64.compose %v553, %v548
        %v558 = vextract.low.u32 %v557
        %v559 = vextract.high.u32 %v557
        %v560 = vmul.u32 %v553, %v544
        %v561 = vadd.s32 %v556, %v558
        %vm562 = vc.u32 %v556, %v558
        %v563 = vadd.s32 %v559, 1
        %v564 = vsel %vm562, %v563, %v559
        %v565 = vadd.s32 %v560, %v564
        %v566 = vadd.s32 %v565, 536870912
        %v567 = vshrl.u32 %v566, 30
        %v568 = vshll.u32 %v567, 30
        %v569 = vsub.s32 %v565, %v568
        %vm570 = vcmp.lt.s32.totalorder %v569, 0
        %v571 = vsub.s32 0, %v569
        %v572 = vsel %vm570, %v571, %v569
        %v573 = vclz %v572
        %v574 = vsub.s32 %v573, 2
        %vm575 = vcmp.gt.s32.totalorder 0, %v574
        %v576 = vsel %vm575, 0, %v574
        %v577 = vsub.s32 32, %v576
        %v578 = vshll.u32 %v569, %v576
        %v579 = vshrl.u32 %v561, %v577
        %v580 = vor.u32 %v578, %v579
        %v581 = vsub.s32 4294967266, %v576
        %v582 = vadd.s32 %v581, 127
        %v583 = vshll.u32 %v582, 23
        %v584 = vor.u32 4788187, %v583
        %v585 = vand.u32 2147483647, %v584
        %v587 = vcvt.s32.f32 %v580
        %v588 = vmul.f32 %v587, %v585
        %v589 = vxor.u32 %v588, 2147483648
        %v590 = vsel %vm507, %v589, %v588
        %v591 = vsub.s32 4, %v567
        %v592 = vsel %vm507, %v591, %v567
        %v593 = vsel %vm506, %v407, %v590
        %v594 = vsel %vm506, 0, %v592
        %v595 = vcosq.f32.pop %v593
        %v596 = vsinq.f32.pop %v593
        %vm597 = vweird.f32 %v407
        %v598 = vadd.s32 %v594, 3
        %v599 = vand.u32 %v598, 3
        %vm600 = vcmp.lt.s32.totalorder %v599, 2
        %vm601 = vcmp.eq.s32.totalorder %v599, 0
        %v602 = vxor.u32 %v596, 2147483648
        %v603 = vsel %vm601, %v595, %v602
        %vm604 = vcmp.eq.s32.totalorder %v599, 2
        %v605 = vxor.u32 %v595, 2147483648
        %v606 = vsel %vm604, %v605, %v596
        %v607 = vsel %vm600, %v603, %v606
        %v608 = vsel %vm597, nan, %v607
        %v609 = vand.u32 2147483647, %v412
        %vm610 = vcmp.le.f32.partialorder %v609, 0.7853982
        %vm611 = vcmp.lt.s32.totalorder %v412, 0
        %v612 = vand.u32 %v412, 2139095040
        %v613 = vshrl.u32 %v612, 23
        %v614 = vsub.s32 %v613, 127
        %v615 = vand.u32 2147483647, %v412
        %v616 = vand.u32 %v615, 8388607
        %v617 = vor.u32 %v616, 8388608
        %v618 = vsub.s32 0, %v617
        %v619 = vadd.s32 %v614, 1
        %vm620 = vcmp.gt.s32.totalorder %v619, 0
        %v621 = vsel %vm620, %v619, 0
        %v622 = vshrl.u32 %v621, 5
        %v623 = vand.u32 %v621, 31
        %v624 = vsub.s32 32, %v623
        %v625 = vshrl.u32 683565275, %v624
        %v626 = vshll.u32 683565275, %v623
        %v627 = vshrl.u32 2475754826, %v624
        %v628 = vor.u32 %v626, %v627
        %v629 = vshll.u32 2475754826, %v623
        %v630 = vshrl.u32 2131351028, %v624
        %v631 = vor.u32 %v629, %v630
        %v632 = vshll.u32 2131351028, %v623
        %v633 = vshrl.u32 2102212464, %v624
        %v634 = vor.u32 %v632, %v633
        %v635 = vshll.u32 2102212464, %v623
        %v636 = vshrl.u32 920167782, %v624
        %v637 = vor.u32 %v635, %v636
        %v638 = vshll.u32 920167782, %v623
        %v639 = vshrl.u32 1326507024, %v624
        %v640 = vor.u32 %v638, %v639
        %vm641 = vcmp.lt.s32.totalorder %v622, 1
        %vm642 = vcmp.lt.s32.totalorder %v622, 2
        %vm643 = vcmp.lt.s32.totalorder %v622, 3
        %vm644 = vcmp.lt.s32.totalorder %v622, 4
        %v645 = vsel %vm641, %v625, %v628
        %v646 = vsel %vm644, %v634, 2102212464
        %v647 = vsel %vm643, %v631, %v646
        %v648 = vsel %vm642, %v645, %v647
        %v649 = vsel %vm641, %v628, %v631
        %v650 = vsel %vm644, %v637, 920167782
        %v651 = vsel %vm643, %v634, %v650
        %v652 = vsel %vm642, %v649, %v651
        %v653 = vsel %vm641, %v631, %v634
        %v654 = vsel %vm644, %v640, 1326507024
        %v655 = vsel %vm643, %v637, %v654
        %v656 = vsel %vm642, %v653, %v655
        %v657 = vshll.u32 %v617, 8
        %v658 = vmul.u32.u64.compose %v657, %v656
        %v659 = vextract.low.u32 %v658
        %v660 = vextract.high.u32 %v658
        %v661 = vmul.u32.u64.compose %v657, %v652
        %v662 = vextract.low.u32 %v661
        %v663 = vextract.high.u32 %v661
        %v664 = vmul.u32 %v657, %v648
        %v665 = vadd.s32 %v660, %v662
        %vm666 = vc.u32 %v660, %v662
        %v667 = vadd.s32 %v663, 1
        %v668 = vsel %vm666, %v667, %v663
        %v669 = vadd.s32 %v664, %v668
        %v670 = vadd.s32 %v669, 536870912
        %v671 = vshrl.u32 %v670, 30
        %v672 = vshll.u32 %v671, 30
        %v673 = vsub.s32 %v669, %v672
        %vm674 = vcmp.lt.s32.totalorder %v673, 0
        %v675 = vsub.s32 0, %v673
        %v676 = vsel %vm674, %v675, %v673
        %v677 = vclz %v676
        %v678 = vsub.s32 %v677, 2
        %vm679 = vcmp.gt.s32.totalorder 0, %v678
        %v680 = vsel %vm679, 0, %v678
        %v681 = vsub.s32 32, %v680
        %v682 = vshll.u32 %v673, %v680
        %v683 = vshrl.u32 %v665, %v681
        %v684 = vor.u32 %v682, %v683
        %v685 = vsub.s32 4294967266, %v680
        %v686 = vadd.s32 %v685, 127
        %v687 = vshll.u32 %v686, 23
        %v688 = vor.u32 4788187, %v687
        %v689 = vand.u32 2147483647, %v688
        %v691 = vcvt.s32.f32 %v684
        %v692 = vmul.f32 %v691, %v689
        %v693 = vxor.u32 %v692, 2147483648
        %v694 = vsel %vm611, %v693, %v692
        %v695 = vsub.s32 4, %v671
        %v696 = vsel %vm611, %v695, %v671
        %v697 = vsel %vm610, %v412, %v694
        %v698 = vsel %vm610, 0, %v696
        %v699 = vcosq.f32.pop %v697
        %v700 = vsinq.f32.pop %v697
        %vm701 = vweird.f32 %v412
        %v702 = vadd.s32 %v698, 3
        %v703 = vand.u32 %v702, 3
        %vm704 = vcmp.lt.s32.totalorder %v703, 2
        %vm705 = vcmp.eq.s32.totalorder %v703, 0
        %v706 = vxor.u32 %v700, 2147483648
        %v707 = vsel %vm705, %v699, %v706
        %vm708 = vcmp.eq.s32.totalorder %v703, 2
        %v709 = vxor.u32 %v699, 2147483648
        %v710 = vsel %vm708, %v709, %v700
        %v711 = vsel %vm704, %v707, %v710
        %v712 = vsel %vm701, nan, %v711
        %v713 = vand.u32 2147483647, %v417
        %vm714 = vcmp.le.f32.partialorder %v713, 0.7853982
        %vm715 = vcmp.lt.s32.totalorder %v417, 0
        %v716 = vand.u32 %v417, 2139095040
        %v717 = vshrl.u32 %v716, 23
        %v718 = vsub.s32 %v717, 127
        %v719 = vand.u32 2147483647, %v417
        %v720 = vand.u32 %v719, 8388607
        %v721 = vor.u32 %v720, 8388608
        %v722 = vsub.s32 0, %v721
        %v723 = vadd.s32 %v718, 1
        %vm724 = vcmp.gt.s32.totalorder %v723, 0
        %v725 = vsel %vm724, %v723, 0
        %v726 = vshrl.u32 %v725, 5
        %v727 = vand.u32 %v725, 31
        %v728 = vsub.s32 32, %v727
        %v729 = vshrl.u32 683565275, %v728
        %v730 = vshll.u32 683565275, %v727
        %v731 = vshrl.u32 2475754826, %v728
        %v732 = vor.u32 %v730, %v731
        %v733 = vshll.u32 2475754826, %v727
        %v734 = vshrl.u32 2131351028, %v728
        %v735 = vor.u32 %v733, %v734
        %v736 = vshll.u32 2131351028, %v727
        %v737 = vshrl.u32 2102212464, %v728
        %v738 = vor.u32 %v736, %v737
        %v739 = vshll.u32 2102212464, %v727
        %v740 = vshrl.u32 920167782, %v728
        %v741 = vor.u32 %v739, %v740
        %v742 = vshll.u32 920167782, %v727
        %v743 = vshrl.u32 1326507024, %v728
        %v744 = vor.u32 %v742, %v743
        %vm745 = vcmp.lt.s32.totalorder %v726, 1
        %vm746 = vcmp.lt.s32.totalorder %v726, 2
        %vm747 = vcmp.lt.s32.totalorder %v726, 3
        %vm748 = vcmp.lt.s32.totalorder %v726, 4
        %v749 = vsel %vm745, %v729, %v732
        %v750 = vsel %vm748, %v738, 2102212464
        %v751 = vsel %vm747, %v735, %v750
        %v752 = vsel %vm746, %v749, %v751
        %v753 = vsel %vm745, %v732, %v735
        %v754 = vsel %vm748, %v741, 920167782
        %v755 = vsel %vm747, %v738, %v754
        %v756 = vsel %vm746, %v753, %v755
        %v757 = vsel %vm745, %v735, %v738
        %v758 = vsel %vm748, %v744, 1326507024
        %v759 = vsel %vm747, %v741, %v758
        %v760 = vsel %vm746, %v757, %v759
        %v761 = vshll.u32 %v721, 8
        %v762 = vmul.u32.u64.compose %v761, %v760
        %v763 = vextract.low.u32 %v762
        %v764 = vextract.high.u32 %v762
        %v765 = vmul.u32.u64.compose %v761, %v756
        %v766 = vextract.low.u32 %v765
        %v767 = vextract.high.u32 %v765
        %v768 = vmul.u32 %v761, %v752
        %v769 = vadd.s32 %v764, %v766
        %vm770 = vc.u32 %v764, %v766
        %v771 = vadd.s32 %v767, 1
        %v772 = vsel %vm770, %v771, %v767
        %v773 = vadd.s32 %v768, %v772
        %v774 = vadd.s32 %v773, 536870912
        %v775 = vshrl.u32 %v774, 30
        %v776 = vshll.u32 %v775, 30
        %v777 = vsub.s32 %v773, %v776
        %vm778 = vcmp.lt.s32.totalorder %v777, 0
        %v779 = vsub.s32 0, %v777
        %v780 = vsel %vm778, %v779, %v777
        %v781 = vclz %v780
        %v782 = vsub.s32 %v781, 2
        %vm783 = vcmp.gt.s32.totalorder 0, %v782
        %v784 = vsel %vm783, 0, %v782
        %v785 = vsub.s32 32, %v784
        %v786 = vshll.u32 %v777, %v784
        %v787 = vshrl.u32 %v769, %v785
        %v788 = vor.u32 %v786, %v787
        %v789 = vsub.s32 4294967266, %v784
        %v790 = vadd.s32 %v789, 127
        %v791 = vshll.u32 %v790, 23
        %v792 = vor.u32 4788187, %v791
        %v793 = vand.u32 2147483647, %v792
        %v795 = vcvt.s32.f32 %v788
        %v796 = vmul.f32 %v795, %v793
        %v797 = vxor.u32 %v796, 2147483648
        %v798 = vsel %vm715, %v797, %v796
        %v799 = vsub.s32 4, %v775
        %v800 = vsel %vm715, %v799, %v775
        %v801 = vsel %vm714, %v417, %v798
        %v802 = vsel %vm714, 0, %v800
        %v803 = vcosq.f32.pop %v801
        %v804 = vsinq.f32.pop %v801
        %vm805 = vweird.f32 %v417
        %v806 = vadd.s32 %v802, 3
        %v807 = vand.u32 %v806, 3
        %vm808 = vcmp.lt.s32.totalorder %v807, 2
        %vm809 = vcmp.eq.s32.totalorder %v807, 0
        %v810 = vxor.u32 %v804, 2147483648
        %v811 = vsel %vm809, %v803, %v810
        %vm812 = vcmp.eq.s32.totalorder %v807, 2
        %v813 = vxor.u32 %v803, 2147483648
        %v814 = vsel %vm812, %v813, %v804
        %v815 = vsel %vm808, %v811, %v814
        %v816 = vsel %vm805, nan, %v815
        %v817 = vand.u32 2147483647, %v422
        %vm818 = vcmp.le.f32.partialorder %v817, 0.7853982
        %vm819 = vcmp.lt.s32.totalorder %v422, 0
        %v820 = vand.u32 %v422, 2139095040
        %v821 = vshrl.u32 %v820, 23
        %v822 = vsub.s32 %v821, 127
        %v823 = vand.u32 2147483647, %v422
        %v824 = vand.u32 %v823, 8388607
        %v825 = vor.u32 %v824, 8388608
        %v826 = vsub.s32 0, %v825
        %v827 = vadd.s32 %v822, 1
        %vm828 = vcmp.gt.s32.totalorder %v827, 0
        %v829 = vsel %vm828, %v827, 0
        %v830 = vshrl.u32 %v829, 5
        %v831 = vand.u32 %v829, 31
        %v832 = vsub.s32 32, %v831
        %v833 = vshrl.u32 683565275, %v832
        %v834 = vshll.u32 683565275, %v831
        %v835 = vshrl.u32 2475754826, %v832
        %v836 = vor.u32 %v834, %v835
        %v837 = vshll.u32 2475754826, %v831
        %v838 = vshrl.u32 2131351028, %v832
        %v839 = vor.u32 %v837, %v838
        %v840 = vshll.u32 2131351028, %v831
        %v841 = vshrl.u32 2102212464, %v832
        %v842 = vor.u32 %v840, %v841
        %v843 = vshll.u32 2102212464, %v831
        %v844 = vshrl.u32 920167782, %v832
        %v845 = vor.u32 %v843, %v844
        %v846 = vshll.u32 920167782, %v831
        %v847 = vshrl.u32 1326507024, %v832
        %v848 = vor.u32 %v846, %v847
        %vm849 = vcmp.lt.s32.totalorder %v830, 1
        %vm850 = vcmp.lt.s32.totalorder %v830, 2
        %vm851 = vcmp.lt.s32.totalorder %v830, 3
        %vm852 = vcmp.lt.s32.totalorder %v830, 4
        %v853 = vsel %vm849, %v833, %v836
        %v854 = vsel %vm852, %v842, 2102212464
        %v855 = vsel %vm851, %v839, %v854
        %v856 = vsel %vm850, %v853, %v855
        %v857 = vsel %vm849, %v836, %v839
        %v858 = vsel %vm852, %v845, 920167782
        %v859 = vsel %vm851, %v842, %v858
        %v860 = vsel %vm850, %v857, %v859
        %v861 = vsel %vm849, %v839, %v842
        %v862 = vsel %vm852, %v848, 1326507024
        %v863 = vsel %vm851, %v845, %v862
        %v864 = vsel %vm850, %v861, %v863
        %v865 = vshll.u32 %v825, 8
        %v866 = vmul.u32.u64.compose %v865, %v864
        %v867 = vextract.low.u32 %v866
        %v868 = vextract.high.u32 %v866
        %v869 = vmul.u32.u64.compose %v865, %v860
        %v870 = vextract.low.u32 %v869
        %v871 = vextract.high.u32 %v869
        %v872 = vmul.u32 %v865, %v856
        %v873 = vadd.s32 %v868, %v870
        %vm874 = vc.u32 %v868, %v870
        %v875 = vadd.s32 %v871, 1
        %v876 = vsel %vm874, %v875, %v871
        %v877 = vadd.s32 %v872, %v876
        %v878 = vadd.s32 %v877, 536870912
        %v879 = vshrl.u32 %v878, 30
        %v880 = vshll.u32 %v879, 30
        %v881 = vsub.s32 %v877, %v880
        %vm882 = vcmp.lt.s32.totalorder %v881, 0
        %v883 = vsub.s32 0, %v881
        %v884 = vsel %vm882, %v883, %v881
        %v885 = vclz %v884
        %v886 = vsub.s32 %v885, 2
        %vm887 = vcmp.gt.s32.totalorder 0, %v886
        %v888 = vsel %vm887, 0, %v886
        %v889 = vsub.s32 32, %v888
        %v890 = vshll.u32 %v881, %v888
        %v891 = vshrl.u32 %v873, %v889
        %v892 = vor.u32 %v890, %v891
        %v893 = vsub.s32 4294967266, %v888
        %v894 = vadd.s32 %v893, 127
        %v895 = vshll.u32 %v894, 23
        %v896 = vor.u32 4788187, %v895
        %v897 = vand.u32 2147483647, %v896
        %v899 = vcvt.s32.f32 %v892
        %v900 = vmul.f32 %v899, %v897
        %v901 = vxor.u32 %v900, 2147483648
        %v902 = vsel %vm819, %v901, %v900
        %v903 = vsub.s32 4, %v879
        %v904 = vsel %vm819, %v903, %v879
        %v905 = vsel %vm818, %v422, %v902
        %v906 = vsel %vm818, 0, %v904
        %v907 = vcosq.f32.pop %v905
        %v908 = vsinq.f32.pop %v905
        %vm909 = vweird.f32 %v422
        %v910 = vadd.s32 %v906, 3
        %v911 = vand.u32 %v910, 3
        %vm912 = vcmp.lt.s32.totalorder %v911, 2
        %vm913 = vcmp.eq.s32.totalorder %v911, 0
        %v914 = vxor.u32 %v908, 2147483648
        %v915 = vsel %vm913, %v907, %v914
        %vm916 = vcmp.eq.s32.totalorder %v911, 2
        %v917 = vxor.u32 %v907, 2147483648
        %v918 = vsel %vm916, %v917, %v908
        %v919 = vsel %vm912, %v915, %v918
        %v920 = vsel %vm909, nan, %v919
        %v921 = vand.u32 2147483647, %v427
        %vm922 = vcmp.le.f32.partialorder %v921, 0.7853982
        %vm923 = vcmp.lt.s32.totalorder %v427, 0
        %v924 = vand.u32 %v427, 2139095040
        %v925 = vshrl.u32 %v924, 23
        %v926 = vsub.s32 %v925, 127
        %v927 = vand.u32 2147483647, %v427
        %v928 = vand.u32 %v927, 8388607
        %v929 = vor.u32 %v928, 8388608
        %v930 = vsub.s32 0, %v929
        %v931 = vadd.s32 %v926, 1
        %vm932 = vcmp.gt.s32.totalorder %v931, 0
        %v933 = vsel %vm932, %v931, 0
        %v934 = vshrl.u32 %v933, 5
        %v935 = vand.u32 %v933, 31
        %v936 = vsub.s32 32, %v935
        %v937 = vshrl.u32 683565275, %v936
        %v938 = vshll.u32 683565275, %v935
        %v939 = vshrl.u32 2475754826, %v936
        %v940 = vor.u32 %v938, %v939
        %v941 = vshll.u32 2475754826, %v935
        %v942 = vshrl.u32 2131351028, %v936
        %v943 = vor.u32 %v941, %v942
        %v944 = vshll.u32 2131351028, %v935
        %v945 = vshrl.u32 2102212464, %v936
        %v946 = vor.u32 %v944, %v945
        %v947 = vshll.u32 2102212464, %v935
        %v948 = vshrl.u32 920167782, %v936
        %v949 = vor.u32 %v947, %v948
        %v950 = vshll.u32 920167782, %v935
        %v951 = vshrl.u32 1326507024, %v936
        %v952 = vor.u32 %v950, %v951
        %vm953 = vcmp.lt.s32.totalorder %v934, 1
        %vm954 = vcmp.lt.s32.totalorder %v934, 2
        %vm955 = vcmp.lt.s32.totalorder %v934, 3
        %vm956 = vcmp.lt.s32.totalorder %v934, 4
        %v957 = vsel %vm953, %v937, %v940
        %v958 = vsel %vm956, %v946, 2102212464
        %v959 = vsel %vm955, %v943, %v958
        %v960 = vsel %vm954, %v957, %v959
        %v961 = vsel %vm953, %v940, %v943
        %v962 = vsel %vm956, %v949, 920167782
        %v963 = vsel %vm955, %v946, %v962
        %v964 = vsel %vm954, %v961, %v963
        %v965 = vsel %vm953, %v943, %v946
        %v966 = vsel %vm956, %v952, 1326507024
        %v967 = vsel %vm955, %v949, %v966
        %v968 = vsel %vm954, %v965, %v967
        %v969 = vshll.u32 %v929, 8
        %v970 = vmul.u32.u64.compose %v969, %v968
        %v971 = vextract.low.u32 %v970
        %v972 = vextract.high.u32 %v970
        %v973 = vmul.u32.u64.compose %v969, %v964
        %v974 = vextract.low.u32 %v973
        %v975 = vextract.high.u32 %v973
        %v976 = vmul.u32 %v969, %v960
        %v977 = vadd.s32 %v972, %v974
        %vm978 = vc.u32 %v972, %v974
        %v979 = vadd.s32 %v975, 1
        %v980 = vsel %vm978, %v979, %v975
        %v981 = vadd.s32 %v976, %v980
        %v982 = vadd.s32 %v981, 536870912
        %v983 = vshrl.u32 %v982, 30
        %v984 = vshll.u32 %v983, 30
        %v985 = vsub.s32 %v981, %v984
        %vm986 = vcmp.lt.s32.totalorder %v985, 0
        %v987 = vsub.s32 0, %v985
        %v988 = vsel %vm986, %v987, %v985
        %v989 = vclz %v988
        %v990 = vsub.s32 %v989, 2
        %vm991 = vcmp.gt.s32.totalorder 0, %v990
        %v992 = vsel %vm991, 0, %v990
        %v993 = vsub.s32 32, %v992
        %v994 = vshll.u32 %v985, %v992
        %v995 = vshrl.u32 %v977, %v993
        %v996 = vor.u32 %v994, %v995
        %v997 = vsub.s32 4294967266, %v992
        %v998 = vadd.s32 %v997, 127
        %v999 = vshll.u32 %v998, 23
        %v1000 = vor.u32 4788187, %v999
        %v1001 = vand.u32 2147483647, %v1000
        %v1003 = vcvt.s32.f32 %v996
        %v1004 = vmul.f32 %v1003, %v1001
        %v1005 = vxor.u32 %v1004, 2147483648
        %v1006 = vsel %vm923, %v1005, %v1004
        %v1007 = vsub.s32 4, %v983
        %v1008 = vsel %vm923, %v1007, %v983
        %v1009 = vsel %vm922, %v427, %v1006
        %v1010 = vsel %vm922, 0, %v1008
        %v1011 = vcosq.f32.pop %v1009
        %v1012 = vsinq.f32.pop %v1009
        %vm1013 = vweird.f32 %v427
        %v1014 = vadd.s32 %v1010, 3
        %v1015 = vand.u32 %v1014, 3
        %vm1016 = vcmp.lt.s32.totalorder %v1015, 2
        %vm1017 = vcmp.eq.s32.totalorder %v1015, 0
        %v1018 = vxor.u32 %v1012, 2147483648
        %v1019 = vsel %vm1017, %v1011, %v1018
        %vm1020 = vcmp.eq.s32.totalorder %v1015, 2
        %v1021 = vxor.u32 %v1011, 2147483648
        %v1022 = vsel %vm1020, %v1021, %v1012
        %v1023 = vsel %vm1016, %v1019, %v1022
        %v1024 = vsel %vm1013, nan, %v1023
        %v1025 = vand.u32 2147483647, %v432
        %vm1026 = vcmp.le.f32.partialorder %v1025, 0.7853982
        %vm1027 = vcmp.lt.s32.totalorder %v432, 0
        %v1028 = vand.u32 %v432, 2139095040
        %v1029 = vshrl.u32 %v1028, 23
        %v1030 = vsub.s32 %v1029, 127
        %v1031 = vand.u32 2147483647, %v432
        %v1032 = vand.u32 %v1031, 8388607
        %v1033 = vor.u32 %v1032, 8388608
        %v1034 = vsub.s32 0, %v1033
        %v1035 = vadd.s32 %v1030, 1
        %vm1036 = vcmp.gt.s32.totalorder %v1035, 0
        %v1037 = vsel %vm1036, %v1035, 0
        %v1038 = vshrl.u32 %v1037, 5
        %v1039 = vand.u32 %v1037, 31
        %v1040 = vsub.s32 32, %v1039
        %v1041 = vshrl.u32 683565275, %v1040
        %v1042 = vshll.u32 683565275, %v1039
        %v1043 = vshrl.u32 2475754826, %v1040
        %v1044 = vor.u32 %v1042, %v1043
        %v1045 = vshll.u32 2475754826, %v1039
        %v1046 = vshrl.u32 2131351028, %v1040
        %v1047 = vor.u32 %v1045, %v1046
        %v1048 = vshll.u32 2131351028, %v1039
        %v1049 = vshrl.u32 2102212464, %v1040
        %v1050 = vor.u32 %v1048, %v1049
        %v1051 = vshll.u32 2102212464, %v1039
        %v1052 = vshrl.u32 920167782, %v1040
        %v1053 = vor.u32 %v1051, %v1052
        %v1054 = vshll.u32 920167782, %v1039
        %v1055 = vshrl.u32 1326507024, %v1040
        %v1056 = vor.u32 %v1054, %v1055
        %vm1057 = vcmp.lt.s32.totalorder %v1038, 1
        %vm1058 = vcmp.lt.s32.totalorder %v1038, 2
        %vm1059 = vcmp.lt.s32.totalorder %v1038, 3
        %vm1060 = vcmp.lt.s32.totalorder %v1038, 4
        %v1061 = vsel %vm1057, %v1041, %v1044
        %v1062 = vsel %vm1060, %v1050, 2102212464
        %v1063 = vsel %vm1059, %v1047, %v1062
        %v1064 = vsel %vm1058, %v1061, %v1063
        %v1065 = vsel %vm1057, %v1044, %v1047
        %v1066 = vsel %vm1060, %v1053, 920167782
        %v1067 = vsel %vm1059, %v1050, %v1066
        %v1068 = vsel %vm1058, %v1065, %v1067
        %v1069 = vsel %vm1057, %v1047, %v1050
        %v1070 = vsel %vm1060, %v1056, 1326507024
        %v1071 = vsel %vm1059, %v1053, %v1070
        %v1072 = vsel %vm1058, %v1069, %v1071
        %v1073 = vshll.u32 %v1033, 8
        %v1074 = vmul.u32.u64.compose %v1073, %v1072
        %v1075 = vextract.low.u32 %v1074
        %v1076 = vextract.high.u32 %v1074
        %v1077 = vmul.u32.u64.compose %v1073, %v1068
        %v1078 = vextract.low.u32 %v1077
        %v1079 = vextract.high.u32 %v1077
        %v1080 = vmul.u32 %v1073, %v1064
        %v1081 = vadd.s32 %v1076, %v1078
        %vm1082 = vc.u32 %v1076, %v1078
        %v1083 = vadd.s32 %v1079, 1
        %v1084 = vsel %vm1082, %v1083, %v1079
        %v1085 = vadd.s32 %v1080, %v1084
        %v1086 = vadd.s32 %v1085, 536870912
        %v1087 = vshrl.u32 %v1086, 30
        %v1088 = vshll.u32 %v1087, 30
        %v1089 = vsub.s32 %v1085, %v1088
        %vm1090 = vcmp.lt.s32.totalorder %v1089, 0
        %v1091 = vsub.s32 0, %v1089
        %v1092 = vsel %vm1090, %v1091, %v1089
        %v1093 = vclz %v1092
        %v1094 = vsub.s32 %v1093, 2
        %vm1095 = vcmp.gt.s32.totalorder 0, %v1094
        %v1096 = vsel %vm1095, 0, %v1094
        %v1097 = vsub.s32 32, %v1096
        %v1098 = vshll.u32 %v1089, %v1096
        %v1099 = vshrl.u32 %v1081, %v1097
        %v1100 = vor.u32 %v1098, %v1099
        %v1101 = vsub.s32 4294967266, %v1096
        %v1102 = vadd.s32 %v1101, 127
        %v1103 = vshll.u32 %v1102, 23
        %v1104 = vor.u32 4788187, %v1103
        %v1105 = vand.u32 2147483647, %v1104
        %v1107 = vcvt.s32.f32 %v1100
        %v1108 = vmul.f32 %v1107, %v1105
        %v1109 = vxor.u32 %v1108, 2147483648
        %v1110 = vsel %vm1027, %v1109, %v1108
        %v1111 = vsub.s32 4, %v1087
        %v1112 = vsel %vm1027, %v1111, %v1087
        %v1113 = vsel %vm1026, %v432, %v1110
        %v1114 = vsel %vm1026, 0, %v1112
        %v1115 = vcosq.f32.pop %v1113
        %v1116 = vsinq.f32.pop %v1113
        %vm1117 = vweird.f32 %v432
        %v1118 = vadd.s32 %v1114, 3
        %v1119 = vand.u32 %v1118, 3
        %vm1120 = vcmp.lt.s32.totalorder %v1119, 2
        %vm1121 = vcmp.eq.s32.totalorder %v1119, 0
        %v1122 = vxor.u32 %v1116, 2147483648
        %v1123 = vsel %vm1121, %v1115, %v1122
        %vm1124 = vcmp.eq.s32.totalorder %v1119, 2
        %v1125 = vxor.u32 %v1115, 2147483648
        %v1126 = vsel %vm1124, %v1125, %v1116
        %v1127 = vsel %vm1120, %v1123, %v1126
        %v1128 = vsel %vm1117, nan, %v1127
        %v1129 = vand.u32 2147483647, %v437
        %vm1130 = vcmp.le.f32.partialorder %v1129, 0.7853982
        %vm1131 = vcmp.lt.s32.totalorder %v437, 0
        %v1132 = vand.u32 %v437, 2139095040
        %v1133 = vshrl.u32 %v1132, 23
        %v1134 = vsub.s32 %v1133, 127
        %v1135 = vand.u32 2147483647, %v437
        %v1136 = vand.u32 %v1135, 8388607
        %v1137 = vor.u32 %v1136, 8388608
        %v1138 = vsub.s32 0, %v1137
        %v1139 = vadd.s32 %v1134, 1
        %vm1140 = vcmp.gt.s32.totalorder %v1139, 0
        %v1141 = vsel %vm1140, %v1139, 0
        %v1142 = vshrl.u32 %v1141, 5
        %v1143 = vand.u32 %v1141, 31
        %v1144 = vsub.s32 32, %v1143
        %v1145 = vshrl.u32 683565275, %v1144
        %v1146 = vshll.u32 683565275, %v1143
        %v1147 = vshrl.u32 2475754826, %v1144
        %v1148 = vor.u32 %v1146, %v1147
        %v1149 = vshll.u32 2475754826, %v1143
        %v1150 = vshrl.u32 2131351028, %v1144
        %v1151 = vor.u32 %v1149, %v1150
        %v1152 = vshll.u32 2131351028, %v1143
        %v1153 = vshrl.u32 2102212464, %v1144
        %v1154 = vor.u32 %v1152, %v1153
        %v1155 = vshll.u32 2102212464, %v1143
        %v1156 = vshrl.u32 920167782, %v1144
        %v1157 = vor.u32 %v1155, %v1156
        %v1158 = vshll.u32 920167782, %v1143
        %v1159 = vshrl.u32 1326507024, %v1144
        %v1160 = vor.u32 %v1158, %v1159
        %vm1161 = vcmp.lt.s32.totalorder %v1142, 1
        %vm1162 = vcmp.lt.s32.totalorder %v1142, 2
        %vm1163 = vcmp.lt.s32.totalorder %v1142, 3
        %vm1164 = vcmp.lt.s32.totalorder %v1142, 4
        %v1165 = vsel %vm1161, %v1145, %v1148
        %v1166 = vsel %vm1164, %v1154, 2102212464
        %v1167 = vsel %vm1163, %v1151, %v1166
        %v1168 = vsel %vm1162, %v1165, %v1167
        %v1169 = vsel %vm1161, %v1148, %v1151
        %v1170 = vsel %vm1164, %v1157, 920167782
        %v1171 = vsel %vm1163, %v1154, %v1170
        %v1172 = vsel %vm1162, %v1169, %v1171
        %v1173 = vsel %vm1161, %v1151, %v1154
        %v1174 = vsel %vm1164, %v1160, 1326507024
        %v1175 = vsel %vm1163, %v1157, %v1174
        %v1176 = vsel %vm1162, %v1173, %v1175
        %v1177 = vshll.u32 %v1137, 8
        %v1178 = vmul.u32.u64.compose %v1177, %v1176
        %v1179 = vextract.low.u32 %v1178
        %v1180 = vextract.high.u32 %v1178
        %v1181 = vmul.u32.u64.compose %v1177, %v1172
        %v1182 = vextract.low.u32 %v1181
        %v1183 = vextract.high.u32 %v1181
        %v1184 = vmul.u32 %v1177, %v1168
        %v1185 = vadd.s32 %v1180, %v1182
        %vm1186 = vc.u32 %v1180, %v1182
        %v1187 = vadd.s32 %v1183, 1
        %v1188 = vsel %vm1186, %v1187, %v1183
        %v1189 = vadd.s32 %v1184, %v1188
        %v1190 = vadd.s32 %v1189, 536870912
        %v1191 = vshrl.u32 %v1190, 30
        %v1192 = vshll.u32 %v1191, 30
        %v1193 = vsub.s32 %v1189, %v1192
        %vm1194 = vcmp.lt.s32.totalorder %v1193, 0
        %v1195 = vsub.s32 0, %v1193
        %v1196 = vsel %vm1194, %v1195, %v1193
        %v1197 = vclz %v1196
        %v1198 = vsub.s32 %v1197, 2
        %vm1199 = vcmp.gt.s32.totalorder 0, %v1198
        %v1200 = vsel %vm1199, 0, %v1198
        %v1201 = vsub.s32 32, %v1200
        %v1202 = vshll.u32 %v1193, %v1200
        %v1203 = vshrl.u32 %v1185, %v1201
        %v1204 = vor.u32 %v1202, %v1203
        %v1205 = vsub.s32 4294967266, %v1200
        %v1206 = vadd.s32 %v1205, 127
        %v1207 = vshll.u32 %v1206, 23
        %v1208 = vor.u32 4788187, %v1207
        %v1209 = vand.u32 2147483647, %v1208
        %v1211 = vcvt.s32.f32 %v1204
        %v1212 = vmul.f32 %v1211, %v1209
        %v1213 = vxor.u32 %v1212, 2147483648
        %v1214 = vsel %vm1131, %v1213, %v1212
        %v1215 = vsub.s32 4, %v1191
        %v1216 = vsel %vm1131, %v1215, %v1191
        %v1217 = vsel %vm1130, %v437, %v1214
        %v1218 = vsel %vm1130, 0, %v1216
        %v1219 = vcosq.f32.pop %v1217
        %v1220 = vsinq.f32.pop %v1217
        %vm1221 = vweird.f32 %v437
        %v1222 = vadd.s32 %v1218, 3
        %v1223 = vand.u32 %v1222, 3
        %vm1224 = vcmp.lt.s32.totalorder %v1223, 2
        %vm1225 = vcmp.eq.s32.totalorder %v1223, 0
        %v1226 = vxor.u32 %v1220, 2147483648
        %v1227 = vsel %vm1225, %v1219, %v1226
        %vm1228 = vcmp.eq.s32.totalorder %v1223, 2
        %v1229 = vxor.u32 %v1219, 2147483648
        %v1230 = vsel %vm1228, %v1229, %v1220
        %v1231 = vsel %vm1224, %v1227, %v1230
        %v1232 = vsel %vm1221, nan, %v1231
        %v1233 = vand.u32 2147483647, %v442
        %vm1234 = vcmp.le.f32.partialorder %v1233, 0.7853982
        %vm1235 = vcmp.lt.s32.totalorder %v442, 0
        %v1236 = vand.u32 %v442, 2139095040
        %v1237 = vshrl.u32 %v1236, 23
        %v1238 = vsub.s32 %v1237, 127
        %v1239 = vand.u32 2147483647, %v442
        %v1240 = vand.u32 %v1239, 8388607
        %v1241 = vor.u32 %v1240, 8388608
        %v1242 = vsub.s32 0, %v1241
        %v1243 = vadd.s32 %v1238, 1
        %vm1244 = vcmp.gt.s32.totalorder %v1243, 0
        %v1245 = vsel %vm1244, %v1243, 0
        %v1246 = vshrl.u32 %v1245, 5
        %v1247 = vand.u32 %v1245, 31
        %v1248 = vsub.s32 32, %v1247
        %v1249 = vshrl.u32 683565275, %v1248
        %v1250 = vshll.u32 683565275, %v1247
        %v1251 = vshrl.u32 2475754826, %v1248
        %v1252 = vor.u32 %v1250, %v1251
        %v1253 = vshll.u32 2475754826, %v1247
        %v1254 = vshrl.u32 2131351028, %v1248
        %v1255 = vor.u32 %v1253, %v1254
        %v1256 = vshll.u32 2131351028, %v1247
        %v1257 = vshrl.u32 2102212464, %v1248
        %v1258 = vor.u32 %v1256, %v1257
        %v1259 = vshll.u32 2102212464, %v1247
        %v1260 = vshrl.u32 920167782, %v1248
        %v1261 = vor.u32 %v1259, %v1260
        %v1262 = vshll.u32 920167782, %v1247
        %v1263 = vshrl.u32 1326507024, %v1248
        %v1264 = vor.u32 %v1262, %v1263
        %vm1265 = vcmp.lt.s32.totalorder %v1246, 1
        %vm1266 = vcmp.lt.s32.totalorder %v1246, 2
        %vm1267 = vcmp.lt.s32.totalorder %v1246, 3
        %vm1268 = vcmp.lt.s32.totalorder %v1246, 4
        %v1269 = vsel %vm1265, %v1249, %v1252
        %v1270 = vsel %vm1268, %v1258, 2102212464
        %v1271 = vsel %vm1267, %v1255, %v1270
        %v1272 = vsel %vm1266, %v1269, %v1271
        %v1273 = vsel %vm1265, %v1252, %v1255
        %v1274 = vsel %vm1268, %v1261, 920167782
        %v1275 = vsel %vm1267, %v1258, %v1274
        %v1276 = vsel %vm1266, %v1273, %v1275
        %v1277 = vsel %vm1265, %v1255, %v1258
        %v1278 = vsel %vm1268, %v1264, 1326507024
        %v1279 = vsel %vm1267, %v1261, %v1278
        %v1280 = vsel %vm1266, %v1277, %v1279
        %v1281 = vshll.u32 %v1241, 8
        %v1282 = vmul.u32.u64.compose %v1281, %v1280
        %v1283 = vextract.low.u32 %v1282
        %v1284 = vextract.high.u32 %v1282
        %v1285 = vmul.u32.u64.compose %v1281, %v1276
        %v1286 = vextract.low.u32 %v1285
        %v1287 = vextract.high.u32 %v1285
        %v1288 = vmul.u32 %v1281, %v1272
        %v1289 = vadd.s32 %v1284, %v1286
        %vm1290 = vc.u32 %v1284, %v1286
        %v1291 = vadd.s32 %v1287, 1
        %v1292 = vsel %vm1290, %v1291, %v1287
        %v1293 = vadd.s32 %v1288, %v1292
        %v1294 = vadd.s32 %v1293, 536870912
        %v1295 = vshrl.u32 %v1294, 30
        %v1296 = vshll.u32 %v1295, 30
        %v1297 = vsub.s32 %v1293, %v1296
        %vm1298 = vcmp.lt.s32.totalorder %v1297, 0
        %v1299 = vsub.s32 0, %v1297
        %v1300 = vsel %vm1298, %v1299, %v1297
        %v1301 = vclz %v1300
        %v1302 = vsub.s32 %v1301, 2
        %vm1303 = vcmp.gt.s32.totalorder 0, %v1302
        %v1304 = vsel %vm1303, 0, %v1302
        %v1305 = vsub.s32 32, %v1304
        %v1306 = vshll.u32 %v1297, %v1304
        %v1307 = vshrl.u32 %v1289, %v1305
        %v1308 = vor.u32 %v1306, %v1307
        %v1309 = vsub.s32 4294967266, %v1304
        %v1310 = vadd.s32 %v1309, 127
        %v1311 = vshll.u32 %v1310, 23
        %v1312 = vor.u32 4788187, %v1311
        %v1313 = vand.u32 2147483647, %v1312
        %v1315 = vcvt.s32.f32 %v1308
        %v1316 = vmul.f32 %v1315, %v1313
        %v1317 = vxor.u32 %v1316, 2147483648
        %v1318 = vsel %vm1235, %v1317, %v1316
        %v1319 = vsub.s32 4, %v1295
        %v1320 = vsel %vm1235, %v1319, %v1295
        %v1321 = vsel %vm1234, %v442, %v1318
        %v1322 = vsel %vm1234, 0, %v1320
        %v1323 = vcosq.f32.pop %v1321
        %v1324 = vsinq.f32.pop %v1321
        %vm1325 = vweird.f32 %v442
        %v1326 = vadd.s32 %v1322, 3
        %v1327 = vand.u32 %v1326, 3
        %vm1328 = vcmp.lt.s32.totalorder %v1327, 2
        %vm1329 = vcmp.eq.s32.totalorder %v1327, 0
        %v1330 = vxor.u32 %v1324, 2147483648
        %v1331 = vsel %vm1329, %v1323, %v1330
        %vm1332 = vcmp.eq.s32.totalorder %v1327, 2
        %v1333 = vxor.u32 %v1323, 2147483648
        %v1334 = vsel %vm1332, %v1333, %v1324
        %v1335 = vsel %vm1328, %v1331, %v1334
        %v1336 = vsel %vm1325, nan, %v1335
        %v1337 = vand.u32 2147483647, %v447
        %vm1338 = vcmp.le.f32.partialorder %v1337, 0.7853982
        %vm1339 = vcmp.lt.s32.totalorder %v447, 0
        %v1340 = vand.u32 %v447, 2139095040
        %v1341 = vshrl.u32 %v1340, 23
        %v1342 = vsub.s32 %v1341, 127
        %v1343 = vand.u32 2147483647, %v447
        %v1344 = vand.u32 %v1343, 8388607
        %v1345 = vor.u32 %v1344, 8388608
        %v1346 = vsub.s32 0, %v1345
        %v1347 = vadd.s32 %v1342, 1
        %vm1348 = vcmp.gt.s32.totalorder %v1347, 0
        %v1349 = vsel %vm1348, %v1347, 0
        %v1350 = vshrl.u32 %v1349, 5
        %v1351 = vand.u32 %v1349, 31
        %v1352 = vsub.s32 32, %v1351
        %v1353 = vshrl.u32 683565275, %v1352
        %v1354 = vshll.u32 683565275, %v1351
        %v1355 = vshrl.u32 2475754826, %v1352
        %v1356 = vor.u32 %v1354, %v1355
        %v1357 = vshll.u32 2475754826, %v1351
        %v1358 = vshrl.u32 2131351028, %v1352
        %v1359 = vor.u32 %v1357, %v1358
        %v1360 = vshll.u32 2131351028, %v1351
        %v1361 = vshrl.u32 2102212464, %v1352
        %v1362 = vor.u32 %v1360, %v1361
        %v1363 = vshll.u32 2102212464, %v1351
        %v1364 = vshrl.u32 920167782, %v1352
        %v1365 = vor.u32 %v1363, %v1364
        %v1366 = vshll.u32 920167782, %v1351
        %v1367 = vshrl.u32 1326507024, %v1352
        %v1368 = vor.u32 %v1366, %v1367
        %vm1369 = vcmp.lt.s32.totalorder %v1350, 1
        %vm1370 = vcmp.lt.s32.totalorder %v1350, 2
        %vm1371 = vcmp.lt.s32.totalorder %v1350, 3
        %vm1372 = vcmp.lt.s32.totalorder %v1350, 4
        %v1373 = vsel %vm1369, %v1353, %v1356
        %v1374 = vsel %vm1372, %v1362, 2102212464
        %v1375 = vsel %vm1371, %v1359, %v1374
        %v1376 = vsel %vm1370, %v1373, %v1375
        %v1377 = vsel %vm1369, %v1356, %v1359
        %v1378 = vsel %vm1372, %v1365, 920167782
        %v1379 = vsel %vm1371, %v1362, %v1378
        %v1380 = vsel %vm1370, %v1377, %v1379
        %v1381 = vsel %vm1369, %v1359, %v1362
        %v1382 = vsel %vm1372, %v1368, 1326507024
        %v1383 = vsel %vm1371, %v1365, %v1382
        %v1384 = vsel %vm1370, %v1381, %v1383
        %v1385 = vshll.u32 %v1345, 8
        %v1386 = vmul.u32.u64.compose %v1385, %v1384
        %v1387 = vextract.low.u32 %v1386
        %v1388 = vextract.high.u32 %v1386
        %v1389 = vmul.u32.u64.compose %v1385, %v1380
        %v1390 = vextract.low.u32 %v1389
        %v1391 = vextract.high.u32 %v1389
        %v1392 = vmul.u32 %v1385, %v1376
        %v1393 = vadd.s32 %v1388, %v1390
        %vm1394 = vc.u32 %v1388, %v1390
        %v1395 = vadd.s32 %v1391, 1
        %v1396 = vsel %vm1394, %v1395, %v1391
        %v1397 = vadd.s32 %v1392, %v1396
        %v1398 = vadd.s32 %v1397, 536870912
        %v1399 = vshrl.u32 %v1398, 30
        %v1400 = vshll.u32 %v1399, 30
        %v1401 = vsub.s32 %v1397, %v1400
        %vm1402 = vcmp.lt.s32.totalorder %v1401, 0
        %v1403 = vsub.s32 0, %v1401
        %v1404 = vsel %vm1402, %v1403, %v1401
        %v1405 = vclz %v1404
        %v1406 = vsub.s32 %v1405, 2
        %vm1407 = vcmp.gt.s32.totalorder 0, %v1406
        %v1408 = vsel %vm1407, 0, %v1406
        %v1409 = vsub.s32 32, %v1408
        %v1410 = vshll.u32 %v1401, %v1408
        %v1411 = vshrl.u32 %v1393, %v1409
        %v1412 = vor.u32 %v1410, %v1411
        %v1413 = vsub.s32 4294967266, %v1408
        %v1414 = vadd.s32 %v1413, 127
        %v1415 = vshll.u32 %v1414, 23
        %v1416 = vor.u32 4788187, %v1415
        %v1417 = vand.u32 2147483647, %v1416
        %v1419 = vcvt.s32.f32 %v1412
        %v1420 = vmul.f32 %v1419, %v1417
        %v1421 = vxor.u32 %v1420, 2147483648
        %v1422 = vsel %vm1339, %v1421, %v1420
        %v1423 = vsub.s32 4, %v1399
        %v1424 = vsel %vm1339, %v1423, %v1399
        %v1425 = vsel %vm1338, %v447, %v1422
        %v1426 = vsel %vm1338, 0, %v1424
        %v1427 = vcosq.f32.pop %v1425
        %v1428 = vsinq.f32.pop %v1425
        %vm1429 = vweird.f32 %v447
        %v1430 = vadd.s32 %v1426, 3
        %v1431 = vand.u32 %v1430, 3
        %vm1432 = vcmp.lt.s32.totalorder %v1431, 2
        %vm1433 = vcmp.eq.s32.totalorder %v1431, 0
        %v1434 = vxor.u32 %v1428, 2147483648
        %v1435 = vsel %vm1433, %v1427, %v1434
        %vm1436 = vcmp.eq.s32.totalorder %v1431, 2
        %v1437 = vxor.u32 %v1427, 2147483648
        %v1438 = vsel %vm1436, %v1437, %v1428
        %v1439 = vsel %vm1432, %v1435, %v1438
        %v1440 = vsel %vm1429, nan, %v1439
        %v1441 = vand.u32 2147483647, %v452
        %vm1442 = vcmp.le.f32.partialorder %v1441, 0.7853982
        %vm1443 = vcmp.lt.s32.totalorder %v452, 0
        %v1444 = vand.u32 %v452, 2139095040
        %v1445 = vshrl.u32 %v1444, 23
        %v1446 = vsub.s32 %v1445, 127
        %v1447 = vand.u32 2147483647, %v452
        %v1448 = vand.u32 %v1447, 8388607
        %v1449 = vor.u32 %v1448, 8388608
        %v1450 = vsub.s32 0, %v1449
        %v1451 = vadd.s32 %v1446, 1
        %vm1452 = vcmp.gt.s32.totalorder %v1451, 0
        %v1453 = vsel %vm1452, %v1451, 0
        %v1454 = vshrl.u32 %v1453, 5
        %v1455 = vand.u32 %v1453, 31
        %v1456 = vsub.s32 32, %v1455
        %v1457 = vshrl.u32 683565275, %v1456
        %v1458 = vshll.u32 683565275, %v1455
        %v1459 = vshrl.u32 2475754826, %v1456
        %v1460 = vor.u32 %v1458, %v1459
        %v1461 = vshll.u32 2475754826, %v1455
        %v1462 = vshrl.u32 2131351028, %v1456
        %v1463 = vor.u32 %v1461, %v1462
        %v1464 = vshll.u32 2131351028, %v1455
        %v1465 = vshrl.u32 2102212464, %v1456
        %v1466 = vor.u32 %v1464, %v1465
        %v1467 = vshll.u32 2102212464, %v1455
        %v1468 = vshrl.u32 920167782, %v1456
        %v1469 = vor.u32 %v1467, %v1468
        %v1470 = vshll.u32 920167782, %v1455
        %v1471 = vshrl.u32 1326507024, %v1456
        %v1472 = vor.u32 %v1470, %v1471
        %vm1473 = vcmp.lt.s32.totalorder %v1454, 1
        %vm1474 = vcmp.lt.s32.totalorder %v1454, 2
        %vm1475 = vcmp.lt.s32.totalorder %v1454, 3
        %vm1476 = vcmp.lt.s32.totalorder %v1454, 4
        %v1477 = vsel %vm1473, %v1457, %v1460
        %v1478 = vsel %vm1476, %v1466, 2102212464
        %v1479 = vsel %vm1475, %v1463, %v1478
        %v1480 = vsel %vm1474, %v1477, %v1479
        %v1481 = vsel %vm1473, %v1460, %v1463
        %v1482 = vsel %vm1476, %v1469, 920167782
        %v1483 = vsel %vm1475, %v1466, %v1482
        %v1484 = vsel %vm1474, %v1481, %v1483
        %v1485 = vsel %vm1473, %v1463, %v1466
        %v1486 = vsel %vm1476, %v1472, 1326507024
        %v1487 = vsel %vm1475, %v1469, %v1486
        %v1488 = vsel %vm1474, %v1485, %v1487
        %v1489 = vshll.u32 %v1449, 8
        %v1490 = vmul.u32.u64.compose %v1489, %v1488
        %v1491 = vextract.low.u32 %v1490
        %v1492 = vextract.high.u32 %v1490
        %v1493 = vmul.u32.u64.compose %v1489, %v1484
        %v1494 = vextract.low.u32 %v1493
        %v1495 = vextract.high.u32 %v1493
        %v1496 = vmul.u32 %v1489, %v1480
        %v1497 = vadd.s32 %v1492, %v1494
        %vm1498 = vc.u32 %v1492, %v1494
        %v1499 = vadd.s32 %v1495, 1
        %v1500 = vsel %vm1498, %v1499, %v1495
        %v1501 = vadd.s32 %v1496, %v1500
        %v1502 = vadd.s32 %v1501, 536870912
        %v1503 = vshrl.u32 %v1502, 30
        %v1504 = vshll.u32 %v1503, 30
        %v1505 = vsub.s32 %v1501, %v1504
        %vm1506 = vcmp.lt.s32.totalorder %v1505, 0
        %v1507 = vsub.s32 0, %v1505
        %v1508 = vsel %vm1506, %v1507, %v1505
        %v1509 = vclz %v1508
        %v1510 = vsub.s32 %v1509, 2
        %vm1511 = vcmp.gt.s32.totalorder 0, %v1510
        %v1512 = vsel %vm1511, 0, %v1510
        %v1513 = vsub.s32 32, %v1512
        %v1514 = vshll.u32 %v1505, %v1512
        %v1515 = vshrl.u32 %v1497, %v1513
        %v1516 = vor.u32 %v1514, %v1515
        %v1517 = vsub.s32 4294967266, %v1512
        %v1518 = vadd.s32 %v1517, 127
        %v1519 = vshll.u32 %v1518, 23
        %v1520 = vor.u32 4788187, %v1519
        %v1521 = vand.u32 2147483647, %v1520
        %v1523 = vcvt.s32.f32 %v1516
        %v1524 = vmul.f32 %v1523, %v1521
        %v1525 = vxor.u32 %v1524, 2147483648
        %v1526 = vsel %vm1443, %v1525, %v1524
        %v1527 = vsub.s32 4, %v1503
        %v1528 = vsel %vm1443, %v1527, %v1503
        %v1529 = vsel %vm1442, %v452, %v1526
        %v1530 = vsel %vm1442, 0, %v1528
        %v1531 = vcosq.f32.pop %v1529
        %v1532 = vsinq.f32.pop %v1529
        %vm1533 = vweird.f32 %v452
        %v1534 = vadd.s32 %v1530, 3
        %v1535 = vand.u32 %v1534, 3
        %vm1536 = vcmp.lt.s32.totalorder %v1535, 2
        %vm1537 = vcmp.eq.s32.totalorder %v1535, 0
        %v1538 = vxor.u32 %v1532, 2147483648
        %v1539 = vsel %vm1537, %v1531, %v1538
        %vm1540 = vcmp.eq.s32.totalorder %v1535, 2
        %v1541 = vxor.u32 %v1531, 2147483648
        %v1542 = vsel %vm1540, %v1541, %v1532
        %v1543 = vsel %vm1536, %v1539, %v1542
        %v1544 = vsel %vm1533, nan, %v1543
        %v1545 = vand.u32 2147483647, %v457
        %vm1546 = vcmp.le.f32.partialorder %v1545, 0.7853982
        %vm1547 = vcmp.lt.s32.totalorder %v457, 0
        %v1548 = vand.u32 %v457, 2139095040
        %v1549 = vshrl.u32 %v1548, 23
        %v1550 = vsub.s32 %v1549, 127
        %v1551 = vand.u32 2147483647, %v457
        %v1552 = vand.u32 %v1551, 8388607
        %v1553 = vor.u32 %v1552, 8388608
        %v1554 = vsub.s32 0, %v1553
        %v1555 = vadd.s32 %v1550, 1
        %vm1556 = vcmp.gt.s32.totalorder %v1555, 0
        %v1557 = vsel %vm1556, %v1555, 0
        %v1558 = vshrl.u32 %v1557, 5
        %v1559 = vand.u32 %v1557, 31
        %v1560 = vsub.s32 32, %v1559
        %v1561 = vshrl.u32 683565275, %v1560
        %v1562 = vshll.u32 683565275, %v1559
        %v1563 = vshrl.u32 2475754826, %v1560
        %v1564 = vor.u32 %v1562, %v1563
        %v1565 = vshll.u32 2475754826, %v1559
        %v1566 = vshrl.u32 2131351028, %v1560
        %v1567 = vor.u32 %v1565, %v1566
        %v1568 = vshll.u32 2131351028, %v1559
        %v1569 = vshrl.u32 2102212464, %v1560
        %v1570 = vor.u32 %v1568, %v1569
        %v1571 = vshll.u32 2102212464, %v1559
        %v1572 = vshrl.u32 920167782, %v1560
        %v1573 = vor.u32 %v1571, %v1572
        %v1574 = vshll.u32 920167782, %v1559
        %v1575 = vshrl.u32 1326507024, %v1560
        %v1576 = vor.u32 %v1574, %v1575
        %vm1577 = vcmp.lt.s32.totalorder %v1558, 1
        %vm1578 = vcmp.lt.s32.totalorder %v1558, 2
        %vm1579 = vcmp.lt.s32.totalorder %v1558, 3
        %vm1580 = vcmp.lt.s32.totalorder %v1558, 4
        %v1581 = vsel %vm1577, %v1561, %v1564
        %v1582 = vsel %vm1580, %v1570, 2102212464
        %v1583 = vsel %vm1579, %v1567, %v1582
        %v1584 = vsel %vm1578, %v1581, %v1583
        %v1585 = vsel %vm1577, %v1564, %v1567
        %v1586 = vsel %vm1580, %v1573, 920167782
        %v1587 = vsel %vm1579, %v1570, %v1586
        %v1588 = vsel %vm1578, %v1585, %v1587
        %v1589 = vsel %vm1577, %v1567, %v1570
        %v1590 = vsel %vm1580, %v1576, 1326507024
        %v1591 = vsel %vm1579, %v1573, %v1590
        %v1592 = vsel %vm1578, %v1589, %v1591
        %v1593 = vshll.u32 %v1553, 8
        %v1594 = vmul.u32.u64.compose %v1593, %v1592
        %v1595 = vextract.low.u32 %v1594
        %v1596 = vextract.high.u32 %v1594
        %v1597 = vmul.u32.u64.compose %v1593, %v1588
        %v1598 = vextract.low.u32 %v1597
        %v1599 = vextract.high.u32 %v1597
        %v1600 = vmul.u32 %v1593, %v1584
        %v1601 = vadd.s32 %v1596, %v1598
        %vm1602 = vc.u32 %v1596, %v1598
        %v1603 = vadd.s32 %v1599, 1
        %v1604 = vsel %vm1602, %v1603, %v1599
        %v1605 = vadd.s32 %v1600, %v1604
        %v1606 = vadd.s32 %v1605, 536870912
        %v1607 = vshrl.u32 %v1606, 30
        %v1608 = vshll.u32 %v1607, 30
        %v1609 = vsub.s32 %v1605, %v1608
        %vm1610 = vcmp.lt.s32.totalorder %v1609, 0
        %v1611 = vsub.s32 0, %v1609
        %v1612 = vsel %vm1610, %v1611, %v1609
        %v1613 = vclz %v1612
        %v1614 = vsub.s32 %v1613, 2
        %vm1615 = vcmp.gt.s32.totalorder 0, %v1614
        %v1616 = vsel %vm1615, 0, %v1614
        %v1617 = vsub.s32 32, %v1616
        %v1618 = vshll.u32 %v1609, %v1616
        %v1619 = vshrl.u32 %v1601, %v1617
        %v1620 = vor.u32 %v1618, %v1619
        %v1621 = vsub.s32 4294967266, %v1616
        %v1622 = vadd.s32 %v1621, 127
        %v1623 = vshll.u32 %v1622, 23
        %v1624 = vor.u32 4788187, %v1623
        %v1625 = vand.u32 2147483647, %v1624
        %v1627 = vcvt.s32.f32 %v1620
        %v1628 = vmul.f32 %v1627, %v1625
        %v1629 = vxor.u32 %v1628, 2147483648
        %v1630 = vsel %vm1547, %v1629, %v1628
        %v1631 = vsub.s32 4, %v1607
        %v1632 = vsel %vm1547, %v1631, %v1607
        %v1633 = vsel %vm1546, %v457, %v1630
        %v1634 = vsel %vm1546, 0, %v1632
        %v1635 = vcosq.f32.pop %v1633
        %v1636 = vsinq.f32.pop %v1633
        %vm1637 = vweird.f32 %v457
        %v1638 = vadd.s32 %v1634, 3
        %v1639 = vand.u32 %v1638, 3
        %vm1640 = vcmp.lt.s32.totalorder %v1639, 2
        %vm1641 = vcmp.eq.s32.totalorder %v1639, 0
        %v1642 = vxor.u32 %v1636, 2147483648
        %v1643 = vsel %vm1641, %v1635, %v1642
        %vm1644 = vcmp.eq.s32.totalorder %v1639, 2
        %v1645 = vxor.u32 %v1635, 2147483648
        %v1646 = vsel %vm1644, %v1645, %v1636
        %v1647 = vsel %vm1640, %v1643, %v1646
        %v1648 = vsel %vm1637, nan, %v1647
        %v1649 = vand.u32 2147483647, %v462
        %vm1650 = vcmp.le.f32.partialorder %v1649, 0.7853982
        %vm1651 = vcmp.lt.s32.totalorder %v462, 0
        %v1652 = vand.u32 %v462, 2139095040
        %v1653 = vshrl.u32 %v1652, 23
        %v1654 = vsub.s32 %v1653, 127
        %v1655 = vand.u32 2147483647, %v462
        %v1656 = vand.u32 %v1655, 8388607
        %v1657 = vor.u32 %v1656, 8388608
        %v1658 = vsub.s32 0, %v1657
        %v1659 = vadd.s32 %v1654, 1
        %vm1660 = vcmp.gt.s32.totalorder %v1659, 0
        %v1661 = vsel %vm1660, %v1659, 0
        %v1662 = vshrl.u32 %v1661, 5
        %v1663 = vand.u32 %v1661, 31
        %v1664 = vsub.s32 32, %v1663
        %v1665 = vshrl.u32 683565275, %v1664
        %v1666 = vshll.u32 683565275, %v1663
        %v1667 = vshrl.u32 2475754826, %v1664
        %v1668 = vor.u32 %v1666, %v1667
        %v1669 = vshll.u32 2475754826, %v1663
        %v1670 = vshrl.u32 2131351028, %v1664
        %v1671 = vor.u32 %v1669, %v1670
        %v1672 = vshll.u32 2131351028, %v1663
        %v1673 = vshrl.u32 2102212464, %v1664
        %v1674 = vor.u32 %v1672, %v1673
        %v1675 = vshll.u32 2102212464, %v1663
        %v1676 = vshrl.u32 920167782, %v1664
        %v1677 = vor.u32 %v1675, %v1676
        %v1678 = vshll.u32 920167782, %v1663
        %v1679 = vshrl.u32 1326507024, %v1664
        %v1680 = vor.u32 %v1678, %v1679
        %vm1681 = vcmp.lt.s32.totalorder %v1662, 1
        %vm1682 = vcmp.lt.s32.totalorder %v1662, 2
        %vm1683 = vcmp.lt.s32.totalorder %v1662, 3
        %vm1684 = vcmp.lt.s32.totalorder %v1662, 4
        %v1685 = vsel %vm1681, %v1665, %v1668
        %v1686 = vsel %vm1684, %v1674, 2102212464
        %v1687 = vsel %vm1683, %v1671, %v1686
        %v1688 = vsel %vm1682, %v1685, %v1687
        %v1689 = vsel %vm1681, %v1668, %v1671
        %v1690 = vsel %vm1684, %v1677, 920167782
        %v1691 = vsel %vm1683, %v1674, %v1690
        %v1692 = vsel %vm1682, %v1689, %v1691
        %v1693 = vsel %vm1681, %v1671, %v1674
        %v1694 = vsel %vm1684, %v1680, 1326507024
        %v1695 = vsel %vm1683, %v1677, %v1694
        %v1696 = vsel %vm1682, %v1693, %v1695
        %v1697 = vshll.u32 %v1657, 8
        %v1698 = vmul.u32.u64.compose %v1697, %v1696
        %v1699 = vextract.low.u32 %v1698
        %v1700 = vextract.high.u32 %v1698
        %v1701 = vmul.u32.u64.compose %v1697, %v1692
        %v1702 = vextract.low.u32 %v1701
        %v1703 = vextract.high.u32 %v1701
        %v1704 = vmul.u32 %v1697, %v1688
        %v1705 = vadd.s32 %v1700, %v1702
        %vm1706 = vc.u32 %v1700, %v1702
        %v1707 = vadd.s32 %v1703, 1
        %v1708 = vsel %vm1706, %v1707, %v1703
        %v1709 = vadd.s32 %v1704, %v1708
        %v1710 = vadd.s32 %v1709, 536870912
        %v1711 = vshrl.u32 %v1710, 30
        %v1712 = vshll.u32 %v1711, 30
        %v1713 = vsub.s32 %v1709, %v1712
        %vm1714 = vcmp.lt.s32.totalorder %v1713, 0
        %v1715 = vsub.s32 0, %v1713
        %v1716 = vsel %vm1714, %v1715, %v1713
        %v1717 = vclz %v1716
        %v1718 = vsub.s32 %v1717, 2
        %vm1719 = vcmp.gt.s32.totalorder 0, %v1718
        %v1720 = vsel %vm1719, 0, %v1718
        %v1721 = vsub.s32 32, %v1720
        %v1722 = vshll.u32 %v1713, %v1720
        %v1723 = vshrl.u32 %v1705, %v1721
        %v1724 = vor.u32 %v1722, %v1723
        %v1725 = vsub.s32 4294967266, %v1720
        %v1726 = vadd.s32 %v1725, 127
        %v1727 = vshll.u32 %v1726, 23
        %v1728 = vor.u32 4788187, %v1727
        %v1729 = vand.u32 2147483647, %v1728
        %v1731 = vcvt.s32.f32 %v1724
        %v1732 = vmul.f32 %v1731, %v1729
        %v1733 = vxor.u32 %v1732, 2147483648
        %v1734 = vsel %vm1651, %v1733, %v1732
        %v1735 = vsub.s32 4, %v1711
        %v1736 = vsel %vm1651, %v1735, %v1711
        %v1737 = vsel %vm1650, %v462, %v1734
        %v1738 = vsel %vm1650, 0, %v1736
        %v1739 = vcosq.f32.pop %v1737
        %v1740 = vsinq.f32.pop %v1737
        %vm1741 = vweird.f32 %v462
        %v1742 = vadd.s32 %v1738, 3
        %v1743 = vand.u32 %v1742, 3
        %vm1744 = vcmp.lt.s32.totalorder %v1743, 2
        %vm1745 = vcmp.eq.s32.totalorder %v1743, 0
        %v1746 = vxor.u32 %v1740, 2147483648
        %v1747 = vsel %vm1745, %v1739, %v1746
        %vm1748 = vcmp.eq.s32.totalorder %v1743, 2
        %v1749 = vxor.u32 %v1739, 2147483648
        %v1750 = vsel %vm1748, %v1749, %v1740
        %v1751 = vsel %vm1744, %v1747, %v1750
        %v1752 = vsel %vm1741, nan, %v1751
        %v1753 = vand.u32 2147483647, %v467
        %vm1754 = vcmp.le.f32.partialorder %v1753, 0.7853982
        %vm1755 = vcmp.lt.s32.totalorder %v467, 0
        %v1756 = vand.u32 %v467, 2139095040
        %v1757 = vshrl.u32 %v1756, 23
        %v1758 = vsub.s32 %v1757, 127
        %v1759 = vand.u32 2147483647, %v467
        %v1760 = vand.u32 %v1759, 8388607
        %v1761 = vor.u32 %v1760, 8388608
        %v1762 = vsub.s32 0, %v1761
        %v1763 = vadd.s32 %v1758, 1
        %vm1764 = vcmp.gt.s32.totalorder %v1763, 0
        %v1765 = vsel %vm1764, %v1763, 0
        %v1766 = vshrl.u32 %v1765, 5
        %v1767 = vand.u32 %v1765, 31
        %v1768 = vsub.s32 32, %v1767
        %v1769 = vshrl.u32 683565275, %v1768
        %v1770 = vshll.u32 683565275, %v1767
        %v1771 = vshrl.u32 2475754826, %v1768
        %v1772 = vor.u32 %v1770, %v1771
        %v1773 = vshll.u32 2475754826, %v1767
        %v1774 = vshrl.u32 2131351028, %v1768
        %v1775 = vor.u32 %v1773, %v1774
        %v1776 = vshll.u32 2131351028, %v1767
        %v1777 = vshrl.u32 2102212464, %v1768
        %v1778 = vor.u32 %v1776, %v1777
        %v1779 = vshll.u32 2102212464, %v1767
        %v1780 = vshrl.u32 920167782, %v1768
        %v1781 = vor.u32 %v1779, %v1780
        %v1782 = vshll.u32 920167782, %v1767
        %v1783 = vshrl.u32 1326507024, %v1768
        %v1784 = vor.u32 %v1782, %v1783
        %vm1785 = vcmp.lt.s32.totalorder %v1766, 1
        %vm1786 = vcmp.lt.s32.totalorder %v1766, 2
        %vm1787 = vcmp.lt.s32.totalorder %v1766, 3
        %vm1788 = vcmp.lt.s32.totalorder %v1766, 4
        %v1789 = vsel %vm1785, %v1769, %v1772
        %v1790 = vsel %vm1788, %v1778, 2102212464
        %v1791 = vsel %vm1787, %v1775, %v1790
        %v1792 = vsel %vm1786, %v1789, %v1791
        %v1793 = vsel %vm1785, %v1772, %v1775
        %v1794 = vsel %vm1788, %v1781, 920167782
        %v1795 = vsel %vm1787, %v1778, %v1794
        %v1796 = vsel %vm1786, %v1793, %v1795
        %v1797 = vsel %vm1785, %v1775, %v1778
        %v1798 = vsel %vm1788, %v1784, 1326507024
        %v1799 = vsel %vm1787, %v1781, %v1798
        %v1800 = vsel %vm1786, %v1797, %v1799
        %v1801 = vshll.u32 %v1761, 8
        %v1802 = vmul.u32.u64.compose %v1801, %v1800
        %v1803 = vextract.low.u32 %v1802
        %v1804 = vextract.high.u32 %v1802
        %v1805 = vmul.u32.u64.compose %v1801, %v1796
        %v1806 = vextract.low.u32 %v1805
        %v1807 = vextract.high.u32 %v1805
        %v1808 = vmul.u32 %v1801, %v1792
        %v1809 = vadd.s32 %v1804, %v1806
        %vm1810 = vc.u32 %v1804, %v1806
        %v1811 = vadd.s32 %v1807, 1
        %v1812 = vsel %vm1810, %v1811, %v1807
        %v1813 = vadd.s32 %v1808, %v1812
        %v1814 = vadd.s32 %v1813, 536870912
        %v1815 = vshrl.u32 %v1814, 30
        %v1816 = vshll.u32 %v1815, 30
        %v1817 = vsub.s32 %v1813, %v1816
        %vm1818 = vcmp.lt.s32.totalorder %v1817, 0
        %v1819 = vsub.s32 0, %v1817
        %v1820 = vsel %vm1818, %v1819, %v1817
        %v1821 = vclz %v1820
        %v1822 = vsub.s32 %v1821, 2
        %vm1823 = vcmp.gt.s32.totalorder 0, %v1822
        %v1824 = vsel %vm1823, 0, %v1822
        %v1825 = vsub.s32 32, %v1824
        %v1826 = vshll.u32 %v1817, %v1824
        %v1827 = vshrl.u32 %v1809, %v1825
        %v1828 = vor.u32 %v1826, %v1827
        %v1829 = vsub.s32 4294967266, %v1824
        %v1830 = vadd.s32 %v1829, 127
        %v1831 = vshll.u32 %v1830, 23
        %v1832 = vor.u32 4788187, %v1831
        %v1833 = vand.u32 2147483647, %v1832
        %v1835 = vcvt.s32.f32 %v1828
        %v1836 = vmul.f32 %v1835, %v1833
        %v1837 = vxor.u32 %v1836, 2147483648
        %v1838 = vsel %vm1755, %v1837, %v1836
        %v1839 = vsub.s32 4, %v1815
        %v1840 = vsel %vm1755, %v1839, %v1815
        %v1841 = vsel %vm1754, %v467, %v1838
        %v1842 = vsel %vm1754, 0, %v1840
        %v1843 = vcosq.f32.pop %v1841
        %v1844 = vsinq.f32.pop %v1841
        %vm1845 = vweird.f32 %v467
        %v1846 = vadd.s32 %v1842, 3
        %v1847 = vand.u32 %v1846, 3
        %vm1848 = vcmp.lt.s32.totalorder %v1847, 2
        %vm1849 = vcmp.eq.s32.totalorder %v1847, 0
        %v1850 = vxor.u32 %v1844, 2147483648
        %v1851 = vsel %vm1849, %v1843, %v1850
        %vm1852 = vcmp.eq.s32.totalorder %v1847, 2
        %v1853 = vxor.u32 %v1843, 2147483648
        %v1854 = vsel %vm1852, %v1853, %v1844
        %v1855 = vsel %vm1848, %v1851, %v1854
        %v1856 = vsel %vm1845, nan, %v1855
        %v1857 = vand.u32 2147483647, %v472
        %vm1858 = vcmp.le.f32.partialorder %v1857, 0.7853982
        %vm1859 = vcmp.lt.s32.totalorder %v472, 0
        %v1860 = vand.u32 %v472, 2139095040
        %v1861 = vshrl.u32 %v1860, 23
        %v1862 = vsub.s32 %v1861, 127
        %v1863 = vand.u32 2147483647, %v472
        %v1864 = vand.u32 %v1863, 8388607
        %v1865 = vor.u32 %v1864, 8388608
        %v1866 = vsub.s32 0, %v1865
        %v1867 = vadd.s32 %v1862, 1
        %vm1868 = vcmp.gt.s32.totalorder %v1867, 0
        %v1869 = vsel %vm1868, %v1867, 0
        %v1870 = vshrl.u32 %v1869, 5
        %v1871 = vand.u32 %v1869, 31
        %v1872 = vsub.s32 32, %v1871
        %v1873 = vshrl.u32 683565275, %v1872
        %v1874 = vshll.u32 683565275, %v1871
        %v1875 = vshrl.u32 2475754826, %v1872
        %v1876 = vor.u32 %v1874, %v1875
        %v1877 = vshll.u32 2475754826, %v1871
        %v1878 = vshrl.u32 2131351028, %v1872
        %v1879 = vor.u32 %v1877, %v1878
        %v1880 = vshll.u32 2131351028, %v1871
        %v1881 = vshrl.u32 2102212464, %v1872
        %v1882 = vor.u32 %v1880, %v1881
        %v1883 = vshll.u32 2102212464, %v1871
        %v1884 = vshrl.u32 920167782, %v1872
        %v1885 = vor.u32 %v1883, %v1884
        %v1886 = vshll.u32 920167782, %v1871
        %v1887 = vshrl.u32 1326507024, %v1872
        %v1888 = vor.u32 %v1886, %v1887
        %vm1889 = vcmp.lt.s32.totalorder %v1870, 1
        %vm1890 = vcmp.lt.s32.totalorder %v1870, 2
        %vm1891 = vcmp.lt.s32.totalorder %v1870, 3
        %vm1892 = vcmp.lt.s32.totalorder %v1870, 4
        %v1893 = vsel %vm1889, %v1873, %v1876
        %v1894 = vsel %vm1892, %v1882, 2102212464
        %v1895 = vsel %vm1891, %v1879, %v1894
        %v1896 = vsel %vm1890, %v1893, %v1895
        %v1897 = vsel %vm1889, %v1876, %v1879
        %v1898 = vsel %vm1892, %v1885, 920167782
        %v1899 = vsel %vm1891, %v1882, %v1898
        %v1900 = vsel %vm1890, %v1897, %v1899
        %v1901 = vsel %vm1889, %v1879, %v1882
        %v1902 = vsel %vm1892, %v1888, 1326507024
        %v1903 = vsel %vm1891, %v1885, %v1902
        %v1904 = vsel %vm1890, %v1901, %v1903
        %v1905 = vshll.u32 %v1865, 8
        %v1906 = vmul.u32.u64.compose %v1905, %v1904
        %v1907 = vextract.low.u32 %v1906
        %v1908 = vextract.high.u32 %v1906
        %v1909 = vmul.u32.u64.compose %v1905, %v1900
        %v1910 = vextract.low.u32 %v1909
        %v1911 = vextract.high.u32 %v1909
        %v1912 = vmul.u32 %v1905, %v1896
        %v1913 = vadd.s32 %v1908, %v1910
        %vm1914 = vc.u32 %v1908, %v1910
        %v1915 = vadd.s32 %v1911, 1
        %v1916 = vsel %vm1914, %v1915, %v1911
        %v1917 = vadd.s32 %v1912, %v1916
        %v1918 = vadd.s32 %v1917, 536870912
        %v1919 = vshrl.u32 %v1918, 30
        %v1920 = vshll.u32 %v1919, 30
        %v1921 = vsub.s32 %v1917, %v1920
        %vm1922 = vcmp.lt.s32.totalorder %v1921, 0
        %v1923 = vsub.s32 0, %v1921
        %v1924 = vsel %vm1922, %v1923, %v1921
        %v1925 = vclz %v1924
        %v1926 = vsub.s32 %v1925, 2
        %vm1927 = vcmp.gt.s32.totalorder 0, %v1926
        %v1928 = vsel %vm1927, 0, %v1926
        %v1929 = vsub.s32 32, %v1928
        %v1930 = vshll.u32 %v1921, %v1928
        %v1931 = vshrl.u32 %v1913, %v1929
        %v1932 = vor.u32 %v1930, %v1931
        %v1933 = vsub.s32 4294967266, %v1928
        %v1934 = vadd.s32 %v1933, 127
        %v1935 = vshll.u32 %v1934, 23
        %v1936 = vor.u32 4788187, %v1935
        %v1937 = vand.u32 2147483647, %v1936
        %v1939 = vcvt.s32.f32 %v1932
        %v1940 = vmul.f32 %v1939, %v1937
        %v1941 = vxor.u32 %v1940, 2147483648
        %v1942 = vsel %vm1859, %v1941, %v1940
        %v1943 = vsub.s32 4, %v1919
        %v1944 = vsel %vm1859, %v1943, %v1919
        %v1945 = vsel %vm1858, %v472, %v1942
        %v1946 = vsel %vm1858, 0, %v1944
        %v1947 = vcosq.f32.pop %v1945
        %v1948 = vsinq.f32.pop %v1945
        %vm1949 = vweird.f32 %v472
        %v1950 = vadd.s32 %v1946, 3
        %v1951 = vand.u32 %v1950, 3
        %vm1952 = vcmp.lt.s32.totalorder %v1951, 2
        %vm1953 = vcmp.eq.s32.totalorder %v1951, 0
        %v1954 = vxor.u32 %v1948, 2147483648
        %v1955 = vsel %vm1953, %v1947, %v1954
        %vm1956 = vcmp.eq.s32.totalorder %v1951, 2
        %v1957 = vxor.u32 %v1947, 2147483648
        %v1958 = vsel %vm1956, %v1957, %v1948
        %v1959 = vsel %vm1952, %v1955, %v1958
        %v1960 = vsel %vm1949, nan, %v1959
        %v1961 = vand.u32 2147483647, %v477
        %vm1962 = vcmp.le.f32.partialorder %v1961, 0.7853982
        %vm1963 = vcmp.lt.s32.totalorder %v477, 0
        %v1964 = vand.u32 %v477, 2139095040
        %v1965 = vshrl.u32 %v1964, 23
        %v1966 = vsub.s32 %v1965, 127
        %v1967 = vand.u32 2147483647, %v477
        %v1968 = vand.u32 %v1967, 8388607
        %v1969 = vor.u32 %v1968, 8388608
        %v1970 = vsub.s32 0, %v1969
        %v1971 = vadd.s32 %v1966, 1
        %vm1972 = vcmp.gt.s32.totalorder %v1971, 0
        %v1973 = vsel %vm1972, %v1971, 0
        %v1974 = vshrl.u32 %v1973, 5
        %v1975 = vand.u32 %v1973, 31
        %v1976 = vsub.s32 32, %v1975
        %v1977 = vshrl.u32 683565275, %v1976
        %v1978 = vshll.u32 683565275, %v1975
        %v1979 = vshrl.u32 2475754826, %v1976
        %v1980 = vor.u32 %v1978, %v1979
        %v1981 = vshll.u32 2475754826, %v1975
        %v1982 = vshrl.u32 2131351028, %v1976
        %v1983 = vor.u32 %v1981, %v1982
        %v1984 = vshll.u32 2131351028, %v1975
        %v1985 = vshrl.u32 2102212464, %v1976
        %v1986 = vor.u32 %v1984, %v1985
        %v1987 = vshll.u32 2102212464, %v1975
        %v1988 = vshrl.u32 920167782, %v1976
        %v1989 = vor.u32 %v1987, %v1988
        %v1990 = vshll.u32 920167782, %v1975
        %v1991 = vshrl.u32 1326507024, %v1976
        %v1992 = vor.u32 %v1990, %v1991
        %vm1993 = vcmp.lt.s32.totalorder %v1974, 1
        %vm1994 = vcmp.lt.s32.totalorder %v1974, 2
        %vm1995 = vcmp.lt.s32.totalorder %v1974, 3
        %vm1996 = vcmp.lt.s32.totalorder %v1974, 4
        %v1997 = vsel %vm1993, %v1977, %v1980
        %v1998 = vsel %vm1996, %v1986, 2102212464
        %v1999 = vsel %vm1995, %v1983, %v1998
        %v2000 = vsel %vm1994, %v1997, %v1999
        %v2001 = vsel %vm1993, %v1980, %v1983
        %v2002 = vsel %vm1996, %v1989, 920167782
        %v2003 = vsel %vm1995, %v1986, %v2002
        %v2004 = vsel %vm1994, %v2001, %v2003
        %v2005 = vsel %vm1993, %v1983, %v1986
        %v2006 = vsel %vm1996, %v1992, 1326507024
        %v2007 = vsel %vm1995, %v1989, %v2006
        %v2008 = vsel %vm1994, %v2005, %v2007
        %v2009 = vshll.u32 %v1969, 8
        %v2010 = vmul.u32.u64.compose %v2009, %v2008
        %v2011 = vextract.low.u32 %v2010
        %v2012 = vextract.high.u32 %v2010
        %v2013 = vmul.u32.u64.compose %v2009, %v2004
        %v2014 = vextract.low.u32 %v2013
        %v2015 = vextract.high.u32 %v2013
        %v2016 = vmul.u32 %v2009, %v2000
        %v2017 = vadd.s32 %v2012, %v2014
        %vm2018 = vc.u32 %v2012, %v2014
        %v2019 = vadd.s32 %v2015, 1
        %v2020 = vsel %vm2018, %v2019, %v2015
        %v2021 = vadd.s32 %v2016, %v2020
        %v2022 = vadd.s32 %v2021, 536870912
        %v2023 = vshrl.u32 %v2022, 30
        %v2024 = vshll.u32 %v2023, 30
        %v2025 = vsub.s32 %v2021, %v2024
        %vm2026 = vcmp.lt.s32.totalorder %v2025, 0
        %v2027 = vsub.s32 0, %v2025
        %v2028 = vsel %vm2026, %v2027, %v2025
        %v2029 = vclz %v2028
        %v2030 = vsub.s32 %v2029, 2
        %vm2031 = vcmp.gt.s32.totalorder 0, %v2030
        %v2032 = vsel %vm2031, 0, %v2030
        %v2033 = vsub.s32 32, %v2032
        %v2034 = vshll.u32 %v2025, %v2032
        %v2035 = vshrl.u32 %v2017, %v2033
        %v2036 = vor.u32 %v2034, %v2035
        %v2037 = vsub.s32 4294967266, %v2032
        %v2038 = vadd.s32 %v2037, 127
        %v2039 = vshll.u32 %v2038, 23
        %v2040 = vor.u32 4788187, %v2039
        %v2041 = vand.u32 2147483647, %v2040
        %v2043 = vcvt.s32.f32 %v2036
        %v2044 = vmul.f32 %v2043, %v2041
        %v2045 = vxor.u32 %v2044, 2147483648
        %v2046 = vsel %vm1963, %v2045, %v2044
        %v2047 = vsub.s32 4, %v2023
        %v2048 = vsel %vm1963, %v2047, %v2023
        %v2049 = vsel %vm1962, %v477, %v2046
        %v2050 = vsel %vm1962, 0, %v2048
        %v2051 = vcosq.f32.pop %v2049
        %v2052 = vsinq.f32.pop %v2049
        %vm2053 = vweird.f32 %v477
        %v2054 = vadd.s32 %v2050, 3
        %v2055 = vand.u32 %v2054, 3
        %vm2056 = vcmp.lt.s32.totalorder %v2055, 2
        %vm2057 = vcmp.eq.s32.totalorder %v2055, 0
        %v2058 = vxor.u32 %v2052, 2147483648
        %v2059 = vsel %vm2057, %v2051, %v2058
        %vm2060 = vcmp.eq.s32.totalorder %v2055, 2
        %v2061 = vxor.u32 %v2051, 2147483648
        %v2062 = vsel %vm2060, %v2061, %v2052
        %v2063 = vsel %vm2056, %v2059, %v2062
        %v2064 = vsel %vm2053, nan, %v2063
        %v2065 = vand.u32 2147483647, %v482
        %vm2066 = vcmp.le.f32.partialorder %v2065, 0.7853982
        %vm2067 = vcmp.lt.s32.totalorder %v482, 0
        %v2068 = vand.u32 %v482, 2139095040
        %v2069 = vshrl.u32 %v2068, 23
        %v2070 = vsub.s32 %v2069, 127
        %v2071 = vand.u32 2147483647, %v482
        %v2072 = vand.u32 %v2071, 8388607
        %v2073 = vor.u32 %v2072, 8388608
        %v2074 = vsub.s32 0, %v2073
        %v2075 = vadd.s32 %v2070, 1
        %vm2076 = vcmp.gt.s32.totalorder %v2075, 0
        %v2077 = vsel %vm2076, %v2075, 0
        %v2078 = vshrl.u32 %v2077, 5
        %v2079 = vand.u32 %v2077, 31
        %v2080 = vsub.s32 32, %v2079
        %v2081 = vshrl.u32 683565275, %v2080
        %v2082 = vshll.u32 683565275, %v2079
        %v2083 = vshrl.u32 2475754826, %v2080
        %v2084 = vor.u32 %v2082, %v2083
        %v2085 = vshll.u32 2475754826, %v2079
        %v2086 = vshrl.u32 2131351028, %v2080
        %v2087 = vor.u32 %v2085, %v2086
        %v2088 = vshll.u32 2131351028, %v2079
        %v2089 = vshrl.u32 2102212464, %v2080
        %v2090 = vor.u32 %v2088, %v2089
        %v2091 = vshll.u32 2102212464, %v2079
        %v2092 = vshrl.u32 920167782, %v2080
        %v2093 = vor.u32 %v2091, %v2092
        %v2094 = vshll.u32 920167782, %v2079
        %v2095 = vshrl.u32 1326507024, %v2080
        %v2096 = vor.u32 %v2094, %v2095
        %vm2097 = vcmp.lt.s32.totalorder %v2078, 1
        %vm2098 = vcmp.lt.s32.totalorder %v2078, 2
        %vm2099 = vcmp.lt.s32.totalorder %v2078, 3
        %vm2100 = vcmp.lt.s32.totalorder %v2078, 4
        %v2101 = vsel %vm2097, %v2081, %v2084
        %v2102 = vsel %vm2100, %v2090, 2102212464
        %v2103 = vsel %vm2099, %v2087, %v2102
        %v2104 = vsel %vm2098, %v2101, %v2103
        %v2105 = vsel %vm2097, %v2084, %v2087
        %v2106 = vsel %vm2100, %v2093, 920167782
        %v2107 = vsel %vm2099, %v2090, %v2106
        %v2108 = vsel %vm2098, %v2105, %v2107
        %v2109 = vsel %vm2097, %v2087, %v2090
        %v2110 = vsel %vm2100, %v2096, 1326507024
        %v2111 = vsel %vm2099, %v2093, %v2110
        %v2112 = vsel %vm2098, %v2109, %v2111
        %v2113 = vshll.u32 %v2073, 8
        %v2114 = vmul.u32.u64.compose %v2113, %v2112
        %v2115 = vextract.low.u32 %v2114
        %v2116 = vextract.high.u32 %v2114
        %v2117 = vmul.u32.u64.compose %v2113, %v2108
        %v2118 = vextract.low.u32 %v2117
        %v2119 = vextract.high.u32 %v2117
        %v2120 = vmul.u32 %v2113, %v2104
        %v2121 = vadd.s32 %v2116, %v2118
        %vm2122 = vc.u32 %v2116, %v2118
        %v2123 = vadd.s32 %v2119, 1
        %v2124 = vsel %vm2122, %v2123, %v2119
        %v2125 = vadd.s32 %v2120, %v2124
        %v2126 = vadd.s32 %v2125, 536870912
        %v2127 = vshrl.u32 %v2126, 30
        %v2128 = vshll.u32 %v2127, 30
        %v2129 = vsub.s32 %v2125, %v2128
        %vm2130 = vcmp.lt.s32.totalorder %v2129, 0
        %v2131 = vsub.s32 0, %v2129
        %v2132 = vsel %vm2130, %v2131, %v2129
        %v2133 = vclz %v2132
        %v2134 = vsub.s32 %v2133, 2
        %vm2135 = vcmp.gt.s32.totalorder 0, %v2134
        %v2136 = vsel %vm2135, 0, %v2134
        %v2137 = vsub.s32 32, %v2136
        %v2138 = vshll.u32 %v2129, %v2136
        %v2139 = vshrl.u32 %v2121, %v2137
        %v2140 = vor.u32 %v2138, %v2139
        %v2141 = vsub.s32 4294967266, %v2136
        %v2142 = vadd.s32 %v2141, 127
        %v2143 = vshll.u32 %v2142, 23
        %v2144 = vor.u32 4788187, %v2143
        %v2145 = vand.u32 2147483647, %v2144
        %v2147 = vcvt.s32.f32 %v2140
        %v2148 = vmul.f32 %v2147, %v2145
        %v2149 = vxor.u32 %v2148, 2147483648
        %v2150 = vsel %vm2067, %v2149, %v2148
        %v2151 = vsub.s32 4, %v2127
        %v2152 = vsel %vm2067, %v2151, %v2127
        %v2153 = vsel %vm2066, %v482, %v2150
        %v2154 = vsel %vm2066, 0, %v2152
        %v2155 = vcosq.f32.pop %v2153
        %v2156 = vsinq.f32.pop %v2153
        %vm2157 = vweird.f32 %v482
        %v2158 = vadd.s32 %v2154, 3
        %v2159 = vand.u32 %v2158, 3
        %vm2160 = vcmp.lt.s32.totalorder %v2159, 2
        %vm2161 = vcmp.eq.s32.totalorder %v2159, 0
        %v2162 = vxor.u32 %v2156, 2147483648
        %v2163 = vsel %vm2161, %v2155, %v2162
        %vm2164 = vcmp.eq.s32.totalorder %v2159, 2
        %v2165 = vxor.u32 %v2155, 2147483648
        %v2166 = vsel %vm2164, %v2165, %v2156
        %v2167 = vsel %vm2160, %v2163, %v2166
        %v2168 = vsel %vm2157, nan, %v2167
        %v2169 = vand.u32 2147483647, %v487
        %vm2170 = vcmp.le.f32.partialorder %v2169, 0.7853982
        %vm2171 = vcmp.lt.s32.totalorder %v487, 0
        %v2172 = vand.u32 %v487, 2139095040
        %v2173 = vshrl.u32 %v2172, 23
        %v2174 = vsub.s32 %v2173, 127
        %v2175 = vand.u32 2147483647, %v487
        %v2176 = vand.u32 %v2175, 8388607
        %v2177 = vor.u32 %v2176, 8388608
        %v2178 = vsub.s32 0, %v2177
        %v2179 = vadd.s32 %v2174, 1
        %vm2180 = vcmp.gt.s32.totalorder %v2179, 0
        %v2181 = vsel %vm2180, %v2179, 0
        %v2182 = vshrl.u32 %v2181, 5
        %v2183 = vand.u32 %v2181, 31
        %v2184 = vsub.s32 32, %v2183
        %v2185 = vshrl.u32 683565275, %v2184
        %v2186 = vshll.u32 683565275, %v2183
        %v2187 = vshrl.u32 2475754826, %v2184
        %v2188 = vor.u32 %v2186, %v2187
        %v2189 = vshll.u32 2475754826, %v2183
        %v2190 = vshrl.u32 2131351028, %v2184
        %v2191 = vor.u32 %v2189, %v2190
        %v2192 = vshll.u32 2131351028, %v2183
        %v2193 = vshrl.u32 2102212464, %v2184
        %v2194 = vor.u32 %v2192, %v2193
        %v2195 = vshll.u32 2102212464, %v2183
        %v2196 = vshrl.u32 920167782, %v2184
        %v2197 = vor.u32 %v2195, %v2196
        %v2198 = vshll.u32 920167782, %v2183
        %v2199 = vshrl.u32 1326507024, %v2184
        %v2200 = vor.u32 %v2198, %v2199
        %vm2201 = vcmp.lt.s32.totalorder %v2182, 1
        %vm2202 = vcmp.lt.s32.totalorder %v2182, 2
        %vm2203 = vcmp.lt.s32.totalorder %v2182, 3
        %vm2204 = vcmp.lt.s32.totalorder %v2182, 4
        %v2205 = vsel %vm2201, %v2185, %v2188
        %v2206 = vsel %vm2204, %v2194, 2102212464
        %v2207 = vsel %vm2203, %v2191, %v2206
        %v2208 = vsel %vm2202, %v2205, %v2207
        %v2209 = vsel %vm2201, %v2188, %v2191
        %v2210 = vsel %vm2204, %v2197, 920167782
        %v2211 = vsel %vm2203, %v2194, %v2210
        %v2212 = vsel %vm2202, %v2209, %v2211
        %v2213 = vsel %vm2201, %v2191, %v2194
        %v2214 = vsel %vm2204, %v2200, 1326507024
        %v2215 = vsel %vm2203, %v2197, %v2214
        %v2216 = vsel %vm2202, %v2213, %v2215
        %v2217 = vshll.u32 %v2177, 8
        %v2218 = vmul.u32.u64.compose %v2217, %v2216
        %v2219 = vextract.low.u32 %v2218
        %v2220 = vextract.high.u32 %v2218
        %v2221 = vmul.u32.u64.compose %v2217, %v2212
        %v2222 = vextract.low.u32 %v2221
        %v2223 = vextract.high.u32 %v2221
        %v2224 = vmul.u32 %v2217, %v2208
        %v2225 = vadd.s32 %v2220, %v2222
        %vm2226 = vc.u32 %v2220, %v2222
        %v2227 = vadd.s32 %v2223, 1
        %v2228 = vsel %vm2226, %v2227, %v2223
        %v2229 = vadd.s32 %v2224, %v2228
        %v2230 = vadd.s32 %v2229, 536870912
        %v2231 = vshrl.u32 %v2230, 30
        %v2232 = vshll.u32 %v2231, 30
        %v2233 = vsub.s32 %v2229, %v2232
        %vm2234 = vcmp.lt.s32.totalorder %v2233, 0
        %v2235 = vsub.s32 0, %v2233
        %v2236 = vsel %vm2234, %v2235, %v2233
        %v2237 = vclz %v2236
        %v2238 = vsub.s32 %v2237, 2
        %vm2239 = vcmp.gt.s32.totalorder 0, %v2238
        %v2240 = vsel %vm2239, 0, %v2238
        %v2241 = vsub.s32 32, %v2240
        %v2242 = vshll.u32 %v2233, %v2240
        %v2243 = vshrl.u32 %v2225, %v2241
        %v2244 = vor.u32 %v2242, %v2243
        %v2245 = vsub.s32 4294967266, %v2240
        %v2246 = vadd.s32 %v2245, 127
        %v2247 = vshll.u32 %v2246, 23
        %v2248 = vor.u32 4788187, %v2247
        %v2249 = vand.u32 2147483647, %v2248
        %v2251 = vcvt.s32.f32 %v2244
        %v2252 = vmul.f32 %v2251, %v2249
        %v2253 = vxor.u32 %v2252, 2147483648
        %v2254 = vsel %vm2171, %v2253, %v2252
        %v2255 = vsub.s32 4, %v2231
        %v2256 = vsel %vm2171, %v2255, %v2231
        %v2257 = vsel %vm2170, %v487, %v2254
        %v2258 = vsel %vm2170, 0, %v2256
        %v2259 = vcosq.f32.pop %v2257
        %v2260 = vsinq.f32.pop %v2257
        %vm2261 = vweird.f32 %v487
        %v2262 = vadd.s32 %v2258, 3
        %v2263 = vand.u32 %v2262, 3
        %vm2264 = vcmp.lt.s32.totalorder %v2263, 2
        %vm2265 = vcmp.eq.s32.totalorder %v2263, 0
        %v2266 = vxor.u32 %v2260, 2147483648
        %v2267 = vsel %vm2265, %v2259, %v2266
        %vm2268 = vcmp.eq.s32.totalorder %v2263, 2
        %v2269 = vxor.u32 %v2259, 2147483648
        %v2270 = vsel %vm2268, %v2269, %v2260
        %v2271 = vsel %vm2264, %v2267, %v2270
        %v2272 = vsel %vm2261, nan, %v2271
        %v2273 = vand.u32 2147483647, %v492
        %vm2274 = vcmp.le.f32.partialorder %v2273, 0.7853982
        %vm2275 = vcmp.lt.s32.totalorder %v492, 0
        %v2276 = vand.u32 %v492, 2139095040
        %v2277 = vshrl.u32 %v2276, 23
        %v2278 = vsub.s32 %v2277, 127
        %v2279 = vand.u32 2147483647, %v492
        %v2280 = vand.u32 %v2279, 8388607
        %v2281 = vor.u32 %v2280, 8388608
        %v2282 = vsub.s32 0, %v2281
        %v2283 = vadd.s32 %v2278, 1
        %vm2284 = vcmp.gt.s32.totalorder %v2283, 0
        %v2285 = vsel %vm2284, %v2283, 0
        %v2286 = vshrl.u32 %v2285, 5
        %v2287 = vand.u32 %v2285, 31
        %v2288 = vsub.s32 32, %v2287
        %v2289 = vshrl.u32 683565275, %v2288
        %v2290 = vshll.u32 683565275, %v2287
        %v2291 = vshrl.u32 2475754826, %v2288
        %v2292 = vor.u32 %v2290, %v2291
        %v2293 = vshll.u32 2475754826, %v2287
        %v2294 = vshrl.u32 2131351028, %v2288
        %v2295 = vor.u32 %v2293, %v2294
        %v2296 = vshll.u32 2131351028, %v2287
        %v2297 = vshrl.u32 2102212464, %v2288
        %v2298 = vor.u32 %v2296, %v2297
        %v2299 = vshll.u32 2102212464, %v2287
        %v2300 = vshrl.u32 920167782, %v2288
        %v2301 = vor.u32 %v2299, %v2300
        %v2302 = vshll.u32 920167782, %v2287
        %v2303 = vshrl.u32 1326507024, %v2288
        %v2304 = vor.u32 %v2302, %v2303
        %vm2305 = vcmp.lt.s32.totalorder %v2286, 1
        %vm2306 = vcmp.lt.s32.totalorder %v2286, 2
        %vm2307 = vcmp.lt.s32.totalorder %v2286, 3
        %vm2308 = vcmp.lt.s32.totalorder %v2286, 4
        %v2309 = vsel %vm2305, %v2289, %v2292
        %v2310 = vsel %vm2308, %v2298, 2102212464
        %v2311 = vsel %vm2307, %v2295, %v2310
        %v2312 = vsel %vm2306, %v2309, %v2311
        %v2313 = vsel %vm2305, %v2292, %v2295
        %v2314 = vsel %vm2308, %v2301, 920167782
        %v2315 = vsel %vm2307, %v2298, %v2314
        %v2316 = vsel %vm2306, %v2313, %v2315
        %v2317 = vsel %vm2305, %v2295, %v2298
        %v2318 = vsel %vm2308, %v2304, 1326507024
        %v2319 = vsel %vm2307, %v2301, %v2318
        %v2320 = vsel %vm2306, %v2317, %v2319
        %v2321 = vshll.u32 %v2281, 8
        %v2322 = vmul.u32.u64.compose %v2321, %v2320
        %v2323 = vextract.low.u32 %v2322
        %v2324 = vextract.high.u32 %v2322
        %v2325 = vmul.u32.u64.compose %v2321, %v2316
        %v2326 = vextract.low.u32 %v2325
        %v2327 = vextract.high.u32 %v2325
        %v2328 = vmul.u32 %v2321, %v2312
        %v2329 = vadd.s32 %v2324, %v2326
        %vm2330 = vc.u32 %v2324, %v2326
        %v2331 = vadd.s32 %v2327, 1
        %v2332 = vsel %vm2330, %v2331, %v2327
        %v2333 = vadd.s32 %v2328, %v2332
        %v2334 = vadd.s32 %v2333, 536870912
        %v2335 = vshrl.u32 %v2334, 30
        %v2336 = vshll.u32 %v2335, 30
        %v2337 = vsub.s32 %v2333, %v2336
        %vm2338 = vcmp.lt.s32.totalorder %v2337, 0
        %v2339 = vsub.s32 0, %v2337
        %v2340 = vsel %vm2338, %v2339, %v2337
        %v2341 = vclz %v2340
        %v2342 = vsub.s32 %v2341, 2
        %vm2343 = vcmp.gt.s32.totalorder 0, %v2342
        %v2344 = vsel %vm2343, 0, %v2342
        %v2345 = vsub.s32 32, %v2344
        %v2346 = vshll.u32 %v2337, %v2344
        %v2347 = vshrl.u32 %v2329, %v2345
        %v2348 = vor.u32 %v2346, %v2347
        %v2349 = vsub.s32 4294967266, %v2344
        %v2350 = vadd.s32 %v2349, 127
        %v2351 = vshll.u32 %v2350, 23
        %v2352 = vor.u32 4788187, %v2351
        %v2353 = vand.u32 2147483647, %v2352
        %v2355 = vcvt.s32.f32 %v2348
        %v2356 = vmul.f32 %v2355, %v2353
        %v2357 = vxor.u32 %v2356, 2147483648
        %v2358 = vsel %vm2275, %v2357, %v2356
        %v2359 = vsub.s32 4, %v2335
        %v2360 = vsel %vm2275, %v2359, %v2335
        %v2361 = vsel %vm2274, %v492, %v2358
        %v2362 = vsel %vm2274, 0, %v2360
        %v2363 = vcosq.f32.pop %v2361
        %v2364 = vsinq.f32.pop %v2361
        %vm2365 = vweird.f32 %v492
        %v2366 = vadd.s32 %v2362, 3
        %v2367 = vand.u32 %v2366, 3
        %vm2368 = vcmp.lt.s32.totalorder %v2367, 2
        %vm2369 = vcmp.eq.s32.totalorder %v2367, 0
        %v2370 = vxor.u32 %v2364, 2147483648
        %v2371 = vsel %vm2369, %v2363, %v2370
        %vm2372 = vcmp.eq.s32.totalorder %v2367, 2
        %v2373 = vxor.u32 %v2363, 2147483648
        %v2374 = vsel %vm2372, %v2373, %v2364
        %v2375 = vsel %vm2368, %v2371, %v2374
        %v2376 = vsel %vm2365, nan, %v2375
        %v2377 = vand.u32 2147483647, %v497
        %vm2378 = vcmp.le.f32.partialorder %v2377, 0.7853982
        %vm2379 = vcmp.lt.s32.totalorder %v497, 0
        %v2380 = vand.u32 %v497, 2139095040
        %v2381 = vshrl.u32 %v2380, 23
        %v2382 = vsub.s32 %v2381, 127
        %v2383 = vand.u32 2147483647, %v497
        %v2384 = vand.u32 %v2383, 8388607
        %v2385 = vor.u32 %v2384, 8388608
        %v2386 = vsub.s32 0, %v2385
        %v2387 = vadd.s32 %v2382, 1
        %vm2388 = vcmp.gt.s32.totalorder %v2387, 0
        %v2389 = vsel %vm2388, %v2387, 0
        %v2390 = vshrl.u32 %v2389, 5
        %v2391 = vand.u32 %v2389, 31
        %v2392 = vsub.s32 32, %v2391
        %v2393 = vshrl.u32 683565275, %v2392
        %v2394 = vshll.u32 683565275, %v2391
        %v2395 = vshrl.u32 2475754826, %v2392
        %v2396 = vor.u32 %v2394, %v2395
        %v2397 = vshll.u32 2475754826, %v2391
        %v2398 = vshrl.u32 2131351028, %v2392
        %v2399 = vor.u32 %v2397, %v2398
        %v2400 = vshll.u32 2131351028, %v2391
        %v2401 = vshrl.u32 2102212464, %v2392
        %v2402 = vor.u32 %v2400, %v2401
        %v2403 = vshll.u32 2102212464, %v2391
        %v2404 = vshrl.u32 920167782, %v2392
        %v2405 = vor.u32 %v2403, %v2404
        %v2406 = vshll.u32 920167782, %v2391
        %v2407 = vshrl.u32 1326507024, %v2392
        %v2408 = vor.u32 %v2406, %v2407
        %vm2409 = vcmp.lt.s32.totalorder %v2390, 1
        %vm2410 = vcmp.lt.s32.totalorder %v2390, 2
        %vm2411 = vcmp.lt.s32.totalorder %v2390, 3
        %vm2412 = vcmp.lt.s32.totalorder %v2390, 4
        %v2413 = vsel %vm2409, %v2393, %v2396
        %v2414 = vsel %vm2412, %v2402, 2102212464
        %v2415 = vsel %vm2411, %v2399, %v2414
        %v2416 = vsel %vm2410, %v2413, %v2415
        %v2417 = vsel %vm2409, %v2396, %v2399
        %v2418 = vsel %vm2412, %v2405, 920167782
        %v2419 = vsel %vm2411, %v2402, %v2418
        %v2420 = vsel %vm2410, %v2417, %v2419
        %v2421 = vsel %vm2409, %v2399, %v2402
        %v2422 = vsel %vm2412, %v2408, 1326507024
        %v2423 = vsel %vm2411, %v2405, %v2422
        %v2424 = vsel %vm2410, %v2421, %v2423
        %v2425 = vshll.u32 %v2385, 8
        %v2426 = vmul.u32.u64.compose %v2425, %v2424
        %v2427 = vextract.low.u32 %v2426
        %v2428 = vextract.high.u32 %v2426
        %v2429 = vmul.u32.u64.compose %v2425, %v2420
        %v2430 = vextract.low.u32 %v2429
        %v2431 = vextract.high.u32 %v2429
        %v2432 = vmul.u32 %v2425, %v2416
        %v2433 = vadd.s32 %v2428, %v2430
        %vm2434 = vc.u32 %v2428, %v2430
        %v2435 = vadd.s32 %v2431, 1
        %v2436 = vsel %vm2434, %v2435, %v2431
        %v2437 = vadd.s32 %v2432, %v2436
        %v2438 = vadd.s32 %v2437, 536870912
        %v2439 = vshrl.u32 %v2438, 30
        %v2440 = vshll.u32 %v2439, 30
        %v2441 = vsub.s32 %v2437, %v2440
        %vm2442 = vcmp.lt.s32.totalorder %v2441, 0
        %v2443 = vsub.s32 0, %v2441
        %v2444 = vsel %vm2442, %v2443, %v2441
        %v2445 = vclz %v2444
        %v2446 = vsub.s32 %v2445, 2
        %vm2447 = vcmp.gt.s32.totalorder 0, %v2446
        %v2448 = vsel %vm2447, 0, %v2446
        %v2449 = vsub.s32 32, %v2448
        %v2450 = vshll.u32 %v2441, %v2448
        %v2451 = vshrl.u32 %v2433, %v2449
        %v2452 = vor.u32 %v2450, %v2451
        %v2453 = vsub.s32 4294967266, %v2448
        %v2454 = vadd.s32 %v2453, 127
        %v2455 = vshll.u32 %v2454, 23
        %v2456 = vor.u32 4788187, %v2455
        %v2457 = vand.u32 2147483647, %v2456
        %v2459 = vcvt.s32.f32 %v2452
        %v2460 = vmul.f32 %v2459, %v2457
        %v2461 = vxor.u32 %v2460, 2147483648
        %v2462 = vsel %vm2379, %v2461, %v2460
        %v2463 = vsub.s32 4, %v2439
        %v2464 = vsel %vm2379, %v2463, %v2439
        %v2465 = vsel %vm2378, %v497, %v2462
        %v2466 = vsel %vm2378, 0, %v2464
        %v2467 = vcosq.f32.pop %v2465
        %v2468 = vsinq.f32.pop %v2465
        %vm2469 = vweird.f32 %v497
        %v2470 = vadd.s32 %v2466, 3
        %v2471 = vand.u32 %v2470, 3
        %vm2472 = vcmp.lt.s32.totalorder %v2471, 2
        %vm2473 = vcmp.eq.s32.totalorder %v2471, 0
        %v2474 = vxor.u32 %v2468, 2147483648
        %v2475 = vsel %vm2473, %v2467, %v2474
        %vm2476 = vcmp.eq.s32.totalorder %v2471, 2
        %v2477 = vxor.u32 %v2467, 2147483648
        %v2478 = vsel %vm2476, %v2477, %v2468
        %v2479 = vsel %vm2472, %v2475, %v2478
        %v2480 = vsel %vm2469, nan, %v2479
        %v2481 = vand.u32 2147483647, %v502
        %vm2482 = vcmp.le.f32.partialorder %v2481, 0.7853982
        %vm2483 = vcmp.lt.s32.totalorder %v502, 0
        %v2484 = vand.u32 %v502, 2139095040
        %v2485 = vshrl.u32 %v2484, 23
        %v2486 = vsub.s32 %v2485, 127
        %v2487 = vand.u32 2147483647, %v502
        %v2488 = vand.u32 %v2487, 8388607
        %v2489 = vor.u32 %v2488, 8388608
        %v2490 = vsub.s32 0, %v2489
        %v2491 = vadd.s32 %v2486, 1
        %vm2492 = vcmp.gt.s32.totalorder %v2491, 0
        %v2493 = vsel %vm2492, %v2491, 0
        %v2494 = vshrl.u32 %v2493, 5
        %v2495 = vand.u32 %v2493, 31
        %v2496 = vsub.s32 32, %v2495
        %v2497 = vshrl.u32 683565275, %v2496
        %v2498 = vshll.u32 683565275, %v2495
        %v2499 = vshrl.u32 2475754826, %v2496
        %v2500 = vor.u32 %v2498, %v2499
        %v2501 = vshll.u32 2475754826, %v2495
        %v2502 = vshrl.u32 2131351028, %v2496
        %v2503 = vor.u32 %v2501, %v2502
        %v2504 = vshll.u32 2131351028, %v2495
        %v2505 = vshrl.u32 2102212464, %v2496
        %v2506 = vor.u32 %v2504, %v2505
        %v2507 = vshll.u32 2102212464, %v2495
        %v2508 = vshrl.u32 920167782, %v2496
        %v2509 = vor.u32 %v2507, %v2508
        %v2510 = vshll.u32 920167782, %v2495
        %v2511 = vshrl.u32 1326507024, %v2496
        %v2512 = vor.u32 %v2510, %v2511
        %vm2513 = vcmp.lt.s32.totalorder %v2494, 1
        %vm2514 = vcmp.lt.s32.totalorder %v2494, 2
        %vm2515 = vcmp.lt.s32.totalorder %v2494, 3
        %vm2516 = vcmp.lt.s32.totalorder %v2494, 4
        %v2517 = vsel %vm2513, %v2497, %v2500
        %v2518 = vsel %vm2516, %v2506, 2102212464
        %v2519 = vsel %vm2515, %v2503, %v2518
        %v2520 = vsel %vm2514, %v2517, %v2519
        %v2521 = vsel %vm2513, %v2500, %v2503
        %v2522 = vsel %vm2516, %v2509, 920167782
        %v2523 = vsel %vm2515, %v2506, %v2522
        %v2524 = vsel %vm2514, %v2521, %v2523
        %v2525 = vsel %vm2513, %v2503, %v2506
        %v2526 = vsel %vm2516, %v2512, 1326507024
        %v2527 = vsel %vm2515, %v2509, %v2526
        %v2528 = vsel %vm2514, %v2525, %v2527
        %v2529 = vshll.u32 %v2489, 8
        %v2530 = vmul.u32.u64.compose %v2529, %v2528
        %v2531 = vextract.low.u32 %v2530
        %v2532 = vextract.high.u32 %v2530
        %v2533 = vmul.u32.u64.compose %v2529, %v2524
        %v2534 = vextract.low.u32 %v2533
        %v2535 = vextract.high.u32 %v2533
        %v2536 = vmul.u32 %v2529, %v2520
        %v2537 = vadd.s32 %v2532, %v2534
        %vm2538 = vc.u32 %v2532, %v2534
        %v2539 = vadd.s32 %v2535, 1
        %v2540 = vsel %vm2538, %v2539, %v2535
        %v2541 = vadd.s32 %v2536, %v2540
        %v2542 = vadd.s32 %v2541, 536870912
        %v2543 = vshrl.u32 %v2542, 30
        %v2544 = vshll.u32 %v2543, 30
        %v2545 = vsub.s32 %v2541, %v2544
        %vm2546 = vcmp.lt.s32.totalorder %v2545, 0
        %v2547 = vsub.s32 0, %v2545
        %v2548 = vsel %vm2546, %v2547, %v2545
        %v2549 = vclz %v2548
        %v2550 = vsub.s32 %v2549, 2
        %vm2551 = vcmp.gt.s32.totalorder 0, %v2550
        %v2552 = vsel %vm2551, 0, %v2550
        %v2553 = vsub.s32 32, %v2552
        %v2554 = vshll.u32 %v2545, %v2552
        %v2555 = vshrl.u32 %v2537, %v2553
        %v2556 = vor.u32 %v2554, %v2555
        %v2557 = vsub.s32 4294967266, %v2552
        %v2558 = vadd.s32 %v2557, 127
        %v2559 = vshll.u32 %v2558, 23
        %v2560 = vor.u32 4788187, %v2559
        %v2561 = vand.u32 2147483647, %v2560
        %v2563 = vcvt.s32.f32 %v2556
        %v2564 = vmul.f32 %v2563, %v2561
        %v2565 = vxor.u32 %v2564, 2147483648
        %v2566 = vsel %vm2483, %v2565, %v2564
        %v2567 = vsub.s32 4, %v2543
        %v2568 = vsel %vm2483, %v2567, %v2543
        %v2569 = vsel %vm2482, %v502, %v2566
        %v2570 = vsel %vm2482, 0, %v2568
        %v2571 = vcosq.f32.pop %v2569
        %v2572 = vsinq.f32.pop %v2569
        %vm2573 = vweird.f32 %v502
        %v2574 = vadd.s32 %v2570, 3
        %v2575 = vand.u32 %v2574, 3
        %vm2576 = vcmp.lt.s32.totalorder %v2575, 2
        %vm2577 = vcmp.eq.s32.totalorder %v2575, 0
        %v2578 = vxor.u32 %v2572, 2147483648
        %v2579 = vsel %vm2577, %v2571, %v2578
        %vm2580 = vcmp.eq.s32.totalorder %v2575, 2
        %v2581 = vxor.u32 %v2571, 2147483648
        %v2582 = vsel %vm2580, %v2581, %v2572
        %v2583 = vsel %vm2576, %v2579, %v2582
        %v2584 = vsel %vm2573, nan, %v2583
        %v2585 = vld [vmem:[%s3] sm:$0xff]
        %v2586 = vld [vmem:[%s3 + $0x8] sm:$0xff]
        %v2587 = vld [vmem:[%s3 + $0x10] sm:$0xff]
        %v2588 = vld [vmem:[%s3 + $0x18] sm:$0xff]
        %v2589 = vld [vmem:[%s3 + $0x20] sm:$0xff]
        %v2590 = vld [vmem:[%s3 + $0x28] sm:$0xff]
        %v2591 = vld [vmem:[%s3 + $0x30] sm:$0xff]
        %v2592 = vld [vmem:[%s3 + $0x38] sm:$0xff]
        %v2593 = vld [vmem:[%s3 + $0x40] sm:$0xff]
        %v2594 = vld [vmem:[%s3 + $0x48] sm:$0xff]
        %v2595 = vld [vmem:[%s3 + $0x50] sm:$0xff]
        %v2596 = vld [vmem:[%s3 + $0x58] sm:$0xff]
        %v2597 = vld [vmem:[%s4] sm:$0x1]
        %v2599 = vlaneseq
        %v2600 = vshrl.u32 %v2599, 7
        %v2601 = vsub.s32 0, %v2600
        %v2602 = vrot.slane %v2597, %v2601
        %vm2604 = vcmask 785408
        %v2606 = vsel %vm2604, %v608, 0
        %v2609 = vsel %vm2604, %v712, 0
        %v2612 = vsel %vm2604, %v816, 0
        %v2615 = vsel %vm2604, %v920, 0
        %v2618 = vsel %vm2604, %v1024, 0
        %v2621 = vsel %vm2604, %v1128, 0
        %v2624 = vsel %vm2604, %v1232, 0
        %v2627 = vsel %vm2604, %v1336, 0
        %v2630 = vsel %vm2604, %v1440, 0
        %v2633 = vsel %vm2604, %v1544, 0
        %v2636 = vsel %vm2604, %v1648, 0
        %v2639 = vsel %vm2604, %v1752, 0
        %v2642 = vsel %vm2604, %v1856, 0
        %v2645 = vsel %vm2604, %v1960, 0
        %v2648 = vsel %vm2604, %v2064, 0
        %v2651 = vsel %vm2604, %v2168, 0
        %v2654 = vsel %vm2604, %v2272, 0
        %v2657 = vsel %vm2604, %v2376, 0
        %v2660 = vsel %vm2604, %v2480, 0
        %v2663 = vsel %vm2604, %v2584, 0
        %2665 = vmatprep.subr.mxu0 0.0
        %2666 = vmatpush1.msra.mxu0 %v2585
        %2667 = vmatprep.subr.mxu0 0.0
        %2668 = vmatpush1.msra.mxu0 %v2586
        %2669 = vmatprep.subr.mxu0 0.0
        %2670 = vmatpush1.msra.mxu0 %v2587
        %2671 = vmatprep.subr.mxu0 0.0
        %2672 = vmatpush1.msra.mxu0 %v2588
        %2673 = vmatprep.subr.mxu0 0.0
        %2674 = vmatpush1.msra.mxu0 %v2589
        %2675 = vmatprep.subr.mxu0 0.0
        %2676 = vmatpush1.msra.mxu0 %v2590
        %2677 = vmatprep.subr.mxu0 0.0
        %2678 = vmatpush1.msra.mxu0 %v2591
        %2679 = vmatprep.subr.mxu0 0.0
        %2680 = vmatpush1.msra.mxu0 %v2592
        %2681 = vmatprep.subr.mxu0 0.0
        %2682 = vmatpush1.msra.mxu0 %v2593
        %2683 = vmatprep.subr.mxu0 0.0
        %2684 = vmatpush1.msra.mxu0 %v2594
        %2685 = vmatprep.subr.mxu0 0.0
        %2686 = vmatpush1.msra.mxu0 %v2595
        %2687 = vmatprep.subr.mxu0 0.0
        %2688 = vmatpush1.msra.mxu0 %v2596
        %2689 = vmatprep.subr.mxu0 0.0
        %2690 = vmatpush1.msra.mxu0 0.0
        %2691 = vmatprep.subr.mxu0 0.0
        %2692 = vmatpush1.msra.mxu0 0.0
        %2693 = vmatprep.subr.mxu0 0.0
        %2694 = vmatpush1.msra.mxu0 0.0
        %2695 = vmatprep.subr.mxu0 0.0
        %2696 = vmatpush1.msra.mxu0 0.0
        %2697 = vmatprep.subr.mxu0 0.0
        %2698 = vmatpush1.msra.mxu0 0.0
        %2699 = vmatprep.subr.mxu0 0.0
        %2700 = vmatpush1.msra.mxu0 0.0
        %2701 = vmatprep.subr.mxu0 0.0
        %2702 = vmatpush1.msra.mxu0 0.0
        %2703 = vmatprep.subr.mxu0 0.0
        %2704 = vmatpush1.msra.mxu0 0.0
        %2705 = vmatprep.subr.mxu0 0.0
        %2706 = vmatpush1.msra.mxu0 0.0
        %2707 = vmatprep.subr.mxu0 0.0
        %2708 = vmatpush1.msra.mxu0 0.0
        %2709 = vmatprep.subr.mxu0 0.0
        %2710 = vmatpush1.msra.mxu0 0.0
        %2711 = vmatprep.subr.mxu0 0.0
        %2712 = vmatpush1.msra.mxu0 0.0
        %2713 = vmatprep.subr.mxu0 0.0
        %2714 = vmatpush1.msra.mxu0 0.0
        %2715 = vmatprep.subr.mxu0 0.0
        %2716 = vmatpush1.msra.mxu0 0.0
        %2717 = vmatprep.subr.mxu0 0.0
        %2718 = vmatpush1.msra.mxu0 0.0
        %2719 = vmatprep.subr.mxu0 0.0
        %2720 = vmatpush1.msra.mxu0 0.0
        %2721 = vmatprep.subr.mxu0 0.0
        %2722 = vmatpush1.msra.mxu0 0.0
        %2723 = vmatprep.subr.mxu0 0.0
        %2724 = vmatpush1.msra.mxu0 0.0
        %2725 = vmatprep.subr.mxu0 0.0
        %2726 = vmatpush1.msra.mxu0 0.0
        %2727 = vmatprep.subr.mxu0 0.0
        %2728 = vmatpush1.msra.mxu0 0.0
        %2729 = vmatprep.mubr.f32.mxu0 0.0
        %2730 = vmatmul.mubr.f32.gmra.mrb[0].mxu0 %v2606
        %v2731 = vpop.f32.mrb[0].mxu0
        %v2732 = vadd.f32 %v2602, %v2731
        %v2733 = vpop.f32.mrb[0].mxu0
        %2734 = vmatprep.mubr.f32.mxu0 0.0
        %2735 = vmatmul.mubr.f32.gmra.mrb[0].mxu0 %v2609
        %v2736 = vpop.f32.mrb[0].mxu0
        %v2737 = vadd.f32 %v2602, %v2736
        %v2738 = vpop.f32.mrb[0].mxu0
        %2739 = vmatprep.mubr.f32.mxu0 0.0
        %2740 = vmatmul.mubr.f32.gmra.mrb[0].mxu0 %v2612
        %v2741 = vpop.f32.mrb[0].mxu0
        %v2742 = vadd.f32 %v2602, %v2741
        %v2743 = vpop.f32.mrb[0].mxu0
        %2744 = vmatprep.mubr.f32.mxu0 0.0
        %2745 = vmatmul.mubr.f32.gmra.mrb[0].mxu0 %v2615
        %v2746 = vpop.f32.mrb[0].mxu0
        %v2747 = vadd.f32 %v2602, %v2746
        %v2748 = vpop.f32.mrb[0].mxu0
        %2749 = vmatprep.mubr.f32.mxu0 0.0
        %2750 = vmatmul.mubr.f32.gmra.mrb[0].mxu0 %v2618
        %v2751 = vpop.f32.mrb[0].mxu0
        %v2752 = vadd.f32 %v2602, %v2751
        %v2753 = vpop.f32.mrb[0].mxu0
        %2754 = vmatprep.mubr.f32.mxu0 0.0
        %2755 = vmatmul.mubr.f32.gmra.mrb[0].mxu0 %v2621
        %v2756 = vpop.f32.mrb[0].mxu0
        %v2757 = vadd.f32 %v2602, %v2756
        %v2758 = vpop.f32.mrb[0].mxu0
        %2759 = vmatprep.mubr.f32.mxu0 0.0
        %2760 = vmatmul.mubr.f32.gmra.mrb[0].mxu0 %v2624
        %v2761 = vpop.f32.mrb[0].mxu0
        %v2762 = vadd.f32 %v2602, %v2761
        %v2763 = vpop.f32.mrb[0].mxu0
        %2764 = vmatprep.mubr.f32.mxu0 0.0
        %2765 = vmatmul.mubr.f32.gmra.mrb[0].mxu0 %v2627
        %v2766 = vpop.f32.mrb[0].mxu0
        %v2767 = vadd.f32 %v2602, %v2766
        %v2768 = vpop.f32.mrb[0].mxu0
        %2769 = vmatprep.mubr.f32.mxu0 0.0
        %2770 = vmatmul.mubr.f32.gmra.mrb[0].mxu0 %v2630
        %v2771 = vpop.f32.mrb[0].mxu0
        %v2772 = vadd.f32 %v2602, %v2771
        %v2773 = vpop.f32.mrb[0].mxu0
        %2774 = vmatprep.mubr.f32.mxu0 0.0
        %2775 = vmatmul.mubr.f32.gmra.mrb[0].mxu0 %v2633
        %v2776 = vpop.f32.mrb[0].mxu0
        %v2777 = vadd.f32 %v2602, %v2776
        %v2778 = vpop.f32.mrb[0].mxu0
        %2779 = vmatprep.mubr.f32.mxu0 0.0
        %2780 = vmatmul.mubr.f32.gmra.mrb[0].mxu0 %v2636
        %v2781 = vpop.f32.mrb[0].mxu0
        %v2782 = vadd.f32 %v2602, %v2781
        %v2783 = vpop.f32.mrb[0].mxu0
        %2784 = vmatprep.mubr.f32.mxu0 0.0
        %2785 = vmatmul.mubr.f32.gmra.mrb[0].mxu0 %v2639
        %v2786 = vpop.f32.mrb[0].mxu0
        %v2787 = vadd.f32 %v2602, %v2786
        %v2788 = vpop.f32.mrb[0].mxu0
        %2789 = vmatprep.mubr.f32.mxu0 0.0
        %2790 = vmatmul.mubr.f32.gmra.mrb[0].mxu0 %v2642
        %v2791 = vpop.f32.mrb[0].mxu0
        %v2792 = vadd.f32 %v2602, %v2791
        %v2793 = vpop.f32.mrb[0].mxu0
        %2794 = vmatprep.mubr.f32.mxu0 0.0
        %2795 = vmatmul.mubr.f32.gmra.mrb[0].mxu0 %v2645
        %v2796 = vpop.f32.mrb[0].mxu0
        %v2797 = vadd.f32 %v2602, %v2796
        %v2798 = vpop.f32.mrb[0].mxu0
        %2799 = vmatprep.mubr.f32.mxu0 0.0
        %2800 = vmatmul.mubr.f32.gmra.mrb[0].mxu0 %v2648
        %v2801 = vpop.f32.mrb[0].mxu0
        %v2802 = vadd.f32 %v2602, %v2801
        %v2803 = vpop.f32.mrb[0].mxu0
        %2804 = vmatprep.mubr.f32.mxu0 0.0
        %2805 = vmatmul.mubr.f32.gmra.mrb[0].mxu0 %v2651
        %v2806 = vpop.f32.mrb[0].mxu0
        %v2807 = vadd.f32 %v2602, %v2806
        %v2808 = vpop.f32.mrb[0].mxu0
        %2809 = vmatprep.mubr.f32.mxu0 0.0
        %2810 = vmatmul.mubr.f32.gmra.mrb[0].mxu0 %v2654
        %v2811 = vpop.f32.mrb[0].mxu0
        %v2812 = vadd.f32 %v2602, %v2811
        %v2813 = vpop.f32.mrb[0].mxu0
        %2814 = vmatprep.mubr.f32.mxu0 0.0
        %2815 = vmatmul.mubr.f32.gmra.mrb[0].mxu0 %v2657
        %v2816 = vpop.f32.mrb[0].mxu0
        %v2817 = vadd.f32 %v2602, %v2816
        %v2818 = vpop.f32.mrb[0].mxu0
        %2819 = vmatprep.mubr.f32.mxu0 0.0
        %2820 = vmatmul.mubr.f32.gmra.mrb[0].mxu0 %v2660
        %v2821 = vpop.f32.mrb[0].mxu0
        %v2822 = vadd.f32 %v2602, %v2821
        %v2823 = vpop.f32.mrb[0].mxu0
        %2824 = vmatprep.mubr.f32.mxu0 0.0
        %2825 = vmatmul.mubr.f32.gmra.mrb[0].mxu0 %v2663
        %v2826 = vpop.f32.mrb[0].mxu0
        %v2827 = vadd.f32 %v2602, %v2826
        %v2828 = vpop.f32.mrb[0].mxu0
        %2829 = vdwg.mxu0
        %v2830 = vand.u32 2147483647, %v2732
        %vm2831 = vcmp.le.f32.partialorder %v2830, 0.7853982
        %vm2832 = vcmp.lt.s32.totalorder %v2732, 0
        %v2833 = vand.u32 %v2732, 2139095040
        %v2834 = vshrl.u32 %v2833, 23
        %v2835 = vsub.s32 %v2834, 127
        %v2836 = vand.u32 2147483647, %v2732
        %v2837 = vand.u32 %v2836, 8388607
        %v2838 = vor.u32 %v2837, 8388608
        %v2839 = vsub.s32 0, %v2838
        %v2840 = vadd.s32 %v2835, 1
        %vm2841 = vcmp.gt.s32.totalorder %v2840, 0
        %v2842 = vsel %vm2841, %v2840, 0
        %v2843 = vshrl.u32 %v2842, 5
        %v2844 = vand.u32 %v2842, 31
        %v2845 = vsub.s32 32, %v2844
        %v2846 = vshrl.u32 683565275, %v2845
        %v2847 = vshll.u32 683565275, %v2844
        %v2848 = vshrl.u32 2475754826, %v2845
        %v2849 = vor.u32 %v2847, %v2848
        %v2850 = vshll.u32 2475754826, %v2844
        %v2851 = vshrl.u32 2131351028, %v2845
        %v2852 = vor.u32 %v2850, %v2851
        %v2853 = vshll.u32 2131351028, %v2844
        %v2854 = vshrl.u32 2102212464, %v2845
        %v2855 = vor.u32 %v2853, %v2854
        %v2856 = vshll.u32 2102212464, %v2844
        %v2857 = vshrl.u32 920167782, %v2845
        %v2858 = vor.u32 %v2856, %v2857
        %v2859 = vshll.u32 920167782, %v2844
        %v2860 = vshrl.u32 1326507024, %v2845
        %v2861 = vor.u32 %v2859, %v2860
        %vm2862 = vcmp.lt.s32.totalorder %v2843, 1
        %vm2863 = vcmp.lt.s32.totalorder %v2843, 2
        %vm2864 = vcmp.lt.s32.totalorder %v2843, 3
        %vm2865 = vcmp.lt.s32.totalorder %v2843, 4
        %v2866 = vsel %vm2862, %v2846, %v2849
        %v2867 = vsel %vm2865, %v2855, 2102212464
        %v2868 = vsel %vm2864, %v2852, %v2867
        %v2869 = vsel %vm2863, %v2866, %v2868
        %v2870 = vsel %vm2862, %v2849, %v2852
        %v2871 = vsel %vm2865, %v2858, 920167782
        %v2872 = vsel %vm2864, %v2855, %v2871
        %v2873 = vsel %vm2863, %v2870, %v2872
        %v2874 = vsel %vm2862, %v2852, %v2855
        %v2875 = vsel %vm2865, %v2861, 1326507024
        %v2876 = vsel %vm2864, %v2858, %v2875
        %v2877 = vsel %vm2863, %v2874, %v2876
        %v2878 = vshll.u32 %v2838, 8
        %v2879 = vmul.u32.u64.compose %v2878, %v2877
        %v2880 = vextract.low.u32 %v2879
        %v2881 = vextract.high.u32 %v2879
        %v2882 = vmul.u32.u64.compose %v2878, %v2873
        %v2883 = vextract.low.u32 %v2882
        %v2884 = vextract.high.u32 %v2882
        %v2885 = vmul.u32 %v2878, %v2869
        %v2886 = vadd.s32 %v2881, %v2883
        %vm2887 = vc.u32 %v2881, %v2883
        %v2888 = vadd.s32 %v2884, 1
        %v2889 = vsel %vm2887, %v2888, %v2884
        %v2890 = vadd.s32 %v2885, %v2889
        %v2891 = vadd.s32 %v2890, 536870912
        %v2892 = vshrl.u32 %v2891, 30
        %v2893 = vshll.u32 %v2892, 30
        %v2894 = vsub.s32 %v2890, %v2893
        %vm2895 = vcmp.lt.s32.totalorder %v2894, 0
        %v2896 = vsub.s32 0, %v2894
        %v2897 = vsel %vm2895, %v2896, %v2894
        %v2898 = vclz %v2897
        %v2899 = vsub.s32 %v2898, 2
        %vm2900 = vcmp.gt.s32.totalorder 0, %v2899
        %v2901 = vsel %vm2900, 0, %v2899
        %v2902 = vsub.s32 32, %v2901
        %v2903 = vshll.u32 %v2894, %v2901
        %v2904 = vshrl.u32 %v2886, %v2902
        %v2905 = vor.u32 %v2903, %v2904
        %v2906 = vsub.s32 4294967266, %v2901
        %v2907 = vadd.s32 %v2906, 127
        %v2908 = vshll.u32 %v2907, 23
        %v2909 = vor.u32 4788187, %v2908
        %v2910 = vand.u32 2147483647, %v2909
        %v2912 = vcvt.s32.f32 %v2905
        %v2913 = vmul.f32 %v2912, %v2910
        %v2914 = vxor.u32 %v2913, 2147483648
        %v2915 = vsel %vm2832, %v2914, %v2913
        %v2916 = vsub.s32 4, %v2892
        %v2917 = vsel %vm2832, %v2916, %v2892
        %v2918 = vsel %vm2831, %v2732, %v2915
        %v2919 = vsel %vm2831, 0, %v2917
        %v2920 = vcosq.f32.pop %v2918
        %v2921 = vsinq.f32.pop %v2918
        %vm2922 = vweird.f32 %v2732
        %v2923 = vadd.s32 %v2919, 3
        %v2924 = vand.u32 %v2923, 3
        %vm2925 = vcmp.lt.s32.totalorder %v2924, 2
        %vm2926 = vcmp.eq.s32.totalorder %v2924, 0
        %v2927 = vxor.u32 %v2921, 2147483648
        %v2928 = vsel %vm2926, %v2920, %v2927
        %vm2929 = vcmp.eq.s32.totalorder %v2924, 2
        %v2930 = vxor.u32 %v2920, 2147483648
        %v2931 = vsel %vm2929, %v2930, %v2921
        %v2932 = vsel %vm2925, %v2928, %v2931
        %v2933 = vsel %vm2922, nan, %v2932
        %v2934 = vand.u32 2147483647, %v2737
        %vm2935 = vcmp.le.f32.partialorder %v2934, 0.7853982
        %vm2936 = vcmp.lt.s32.totalorder %v2737, 0
        %v2937 = vand.u32 %v2737, 2139095040
        %v2938 = vshrl.u32 %v2937, 23
        %v2939 = vsub.s32 %v2938, 127
        %v2940 = vand.u32 2147483647, %v2737
        %v2941 = vand.u32 %v2940, 8388607
        %v2942 = vor.u32 %v2941, 8388608
        %v2943 = vsub.s32 0, %v2942
        %v2944 = vadd.s32 %v2939, 1
        %vm2945 = vcmp.gt.s32.totalorder %v2944, 0
        %v2946 = vsel %vm2945, %v2944, 0
        %v2947 = vshrl.u32 %v2946, 5
        %v2948 = vand.u32 %v2946, 31
        %v2949 = vsub.s32 32, %v2948
        %v2950 = vshrl.u32 683565275, %v2949
        %v2951 = vshll.u32 683565275, %v2948
        %v2952 = vshrl.u32 2475754826, %v2949
        %v2953 = vor.u32 %v2951, %v2952
        %v2954 = vshll.u32 2475754826, %v2948
        %v2955 = vshrl.u32 2131351028, %v2949
        %v2956 = vor.u32 %v2954, %v2955
        %v2957 = vshll.u32 2131351028, %v2948
        %v2958 = vshrl.u32 2102212464, %v2949
        %v2959 = vor.u32 %v2957, %v2958
        %v2960 = vshll.u32 2102212464, %v2948
        %v2961 = vshrl.u32 920167782, %v2949
        %v2962 = vor.u32 %v2960, %v2961
        %v2963 = vshll.u32 920167782, %v2948
        %v2964 = vshrl.u32 1326507024, %v2949
        %v2965 = vor.u32 %v2963, %v2964
        %vm2966 = vcmp.lt.s32.totalorder %v2947, 1
        %vm2967 = vcmp.lt.s32.totalorder %v2947, 2
        %vm2968 = vcmp.lt.s32.totalorder %v2947, 3
        %vm2969 = vcmp.lt.s32.totalorder %v2947, 4
        %v2970 = vsel %vm2966, %v2950, %v2953
        %v2971 = vsel %vm2969, %v2959, 2102212464
        %v2972 = vsel %vm2968, %v2956, %v2971
        %v2973 = vsel %vm2967, %v2970, %v2972
        %v2974 = vsel %vm2966, %v2953, %v2956
        %v2975 = vsel %vm2969, %v2962, 920167782
        %v2976 = vsel %vm2968, %v2959, %v2975
        %v2977 = vsel %vm2967, %v2974, %v2976
        %v2978 = vsel %vm2966, %v2956, %v2959
        %v2979 = vsel %vm2969, %v2965, 1326507024
        %v2980 = vsel %vm2968, %v2962, %v2979
        %v2981 = vsel %vm2967, %v2978, %v2980
        %v2982 = vshll.u32 %v2942, 8
        %v2983 = vmul.u32.u64.compose %v2982, %v2981
        %v2984 = vextract.low.u32 %v2983
        %v2985 = vextract.high.u32 %v2983
        %v2986 = vmul.u32.u64.compose %v2982, %v2977
        %v2987 = vextract.low.u32 %v2986
        %v2988 = vextract.high.u32 %v2986
        %v2989 = vmul.u32 %v2982, %v2973
        %v2990 = vadd.s32 %v2985, %v2987
        %vm2991 = vc.u32 %v2985, %v2987
        %v2992 = vadd.s32 %v2988, 1
        %v2993 = vsel %vm2991, %v2992, %v2988
        %v2994 = vadd.s32 %v2989, %v2993
        %v2995 = vadd.s32 %v2994, 536870912
        %v2996 = vshrl.u32 %v2995, 30
        %v2997 = vshll.u32 %v2996, 30
        %v2998 = vsub.s32 %v2994, %v2997
        %vm2999 = vcmp.lt.s32.totalorder %v2998, 0
        %v3000 = vsub.s32 0, %v2998
        %v3001 = vsel %vm2999, %v3000, %v2998
        %v3002 = vclz %v3001
        %v3003 = vsub.s32 %v3002, 2
        %vm3004 = vcmp.gt.s32.totalorder 0, %v3003
        %v3005 = vsel %vm3004, 0, %v3003
        %v3006 = vsub.s32 32, %v3005
        %v3007 = vshll.u32 %v2998, %v3005
        %v3008 = vshrl.u32 %v2990, %v3006
        %v3009 = vor.u32 %v3007, %v3008
        %v3010 = vsub.s32 4294967266, %v3005
        %v3011 = vadd.s32 %v3010, 127
        %v3012 = vshll.u32 %v3011, 23
        %v3013 = vor.u32 4788187, %v3012
        %v3014 = vand.u32 2147483647, %v3013
        %v3016 = vcvt.s32.f32 %v3009
        %v3017 = vmul.f32 %v3016, %v3014
        %v3018 = vxor.u32 %v3017, 2147483648
        %v3019 = vsel %vm2936, %v3018, %v3017
        %v3020 = vsub.s32 4, %v2996
        %v3021 = vsel %vm2936, %v3020, %v2996
        %v3022 = vsel %vm2935, %v2737, %v3019
        %v3023 = vsel %vm2935, 0, %v3021
        %v3024 = vcosq.f32.pop %v3022
        %v3025 = vsinq.f32.pop %v3022
        %vm3026 = vweird.f32 %v2737
        %v3027 = vadd.s32 %v3023, 3
        %v3028 = vand.u32 %v3027, 3
        %vm3029 = vcmp.lt.s32.totalorder %v3028, 2
        %vm3030 = vcmp.eq.s32.totalorder %v3028, 0
        %v3031 = vxor.u32 %v3025, 2147483648
        %v3032 = vsel %vm3030, %v3024, %v3031
        %vm3033 = vcmp.eq.s32.totalorder %v3028, 2
        %v3034 = vxor.u32 %v3024, 2147483648
        %v3035 = vsel %vm3033, %v3034, %v3025
        %v3036 = vsel %vm3029, %v3032, %v3035
        %v3037 = vsel %vm3026, nan, %v3036
        %v3038 = vand.u32 2147483647, %v2742
        %vm3039 = vcmp.le.f32.partialorder %v3038, 0.7853982
        %vm3040 = vcmp.lt.s32.totalorder %v2742, 0
        %v3041 = vand.u32 %v2742, 2139095040
        %v3042 = vshrl.u32 %v3041, 23
        %v3043 = vsub.s32 %v3042, 127
        %v3044 = vand.u32 2147483647, %v2742
        %v3045 = vand.u32 %v3044, 8388607
        %v3046 = vor.u32 %v3045, 8388608
        %v3047 = vsub.s32 0, %v3046
        %v3048 = vadd.s32 %v3043, 1
        %vm3049 = vcmp.gt.s32.totalorder %v3048, 0
        %v3050 = vsel %vm3049, %v3048, 0
        %v3051 = vshrl.u32 %v3050, 5
        %v3052 = vand.u32 %v3050, 31
        %v3053 = vsub.s32 32, %v3052
        %v3054 = vshrl.u32 683565275, %v3053
        %v3055 = vshll.u32 683565275, %v3052
        %v3056 = vshrl.u32 2475754826, %v3053
        %v3057 = vor.u32 %v3055, %v3056
        %v3058 = vshll.u32 2475754826, %v3052
        %v3059 = vshrl.u32 2131351028, %v3053
        %v3060 = vor.u32 %v3058, %v3059
        %v3061 = vshll.u32 2131351028, %v3052
        %v3062 = vshrl.u32 2102212464, %v3053
        %v3063 = vor.u32 %v3061, %v3062
        %v3064 = vshll.u32 2102212464, %v3052
        %v3065 = vshrl.u32 920167782, %v3053
        %v3066 = vor.u32 %v3064, %v3065
        %v3067 = vshll.u32 920167782, %v3052
        %v3068 = vshrl.u32 1326507024, %v3053
        %v3069 = vor.u32 %v3067, %v3068
        %vm3070 = vcmp.lt.s32.totalorder %v3051, 1
        %vm3071 = vcmp.lt.s32.totalorder %v3051, 2
        %vm3072 = vcmp.lt.s32.totalorder %v3051, 3
        %vm3073 = vcmp.lt.s32.totalorder %v3051, 4
        %v3074 = vsel %vm3070, %v3054, %v3057
        %v3075 = vsel %vm3073, %v3063, 2102212464
        %v3076 = vsel %vm3072, %v3060, %v3075
        %v3077 = vsel %vm3071, %v3074, %v3076
        %v3078 = vsel %vm3070, %v3057, %v3060
        %v3079 = vsel %vm3073, %v3066, 920167782
        %v3080 = vsel %vm3072, %v3063, %v3079
        %v3081 = vsel %vm3071, %v3078, %v3080
        %v3082 = vsel %vm3070, %v3060, %v3063
        %v3083 = vsel %vm3073, %v3069, 1326507024
        %v3084 = vsel %vm3072, %v3066, %v3083
        %v3085 = vsel %vm3071, %v3082, %v3084
        %v3086 = vshll.u32 %v3046, 8
        %v3087 = vmul.u32.u64.compose %v3086, %v3085
        %v3088 = vextract.low.u32 %v3087
        %v3089 = vextract.high.u32 %v3087
        %v3090 = vmul.u32.u64.compose %v3086, %v3081
        %v3091 = vextract.low.u32 %v3090
        %v3092 = vextract.high.u32 %v3090
        %v3093 = vmul.u32 %v3086, %v3077
        %v3094 = vadd.s32 %v3089, %v3091
        %vm3095 = vc.u32 %v3089, %v3091
        %v3096 = vadd.s32 %v3092, 1
        %v3097 = vsel %vm3095, %v3096, %v3092
        %v3098 = vadd.s32 %v3093, %v3097
        %v3099 = vadd.s32 %v3098, 536870912
        %v3100 = vshrl.u32 %v3099, 30
        %v3101 = vshll.u32 %v3100, 30
        %v3102 = vsub.s32 %v3098, %v3101
        %vm3103 = vcmp.lt.s32.totalorder %v3102, 0
        %v3104 = vsub.s32 0, %v3102
        %v3105 = vsel %vm3103, %v3104, %v3102
        %v3106 = vclz %v3105
        %v3107 = vsub.s32 %v3106, 2
        %vm3108 = vcmp.gt.s32.totalorder 0, %v3107
        %v3109 = vsel %vm3108, 0, %v3107
        %v3110 = vsub.s32 32, %v3109
        %v3111 = vshll.u32 %v3102, %v3109
        %v3112 = vshrl.u32 %v3094, %v3110
        %v3113 = vor.u32 %v3111, %v3112
        %v3114 = vsub.s32 4294967266, %v3109
        %v3115 = vadd.s32 %v3114, 127
        %v3116 = vshll.u32 %v3115, 23
        %v3117 = vor.u32 4788187, %v3116
        %v3118 = vand.u32 2147483647, %v3117
        %v3120 = vcvt.s32.f32 %v3113
        %v3121 = vmul.f32 %v3120, %v3118
        %v3122 = vxor.u32 %v3121, 2147483648
        %v3123 = vsel %vm3040, %v3122, %v3121
        %v3124 = vsub.s32 4, %v3100
        %v3125 = vsel %vm3040, %v3124, %v3100
        %v3126 = vsel %vm3039, %v2742, %v3123
        %v3127 = vsel %vm3039, 0, %v3125
        %v3128 = vcosq.f32.pop %v3126
        %v3129 = vsinq.f32.pop %v3126
        %vm3130 = vweird.f32 %v2742
        %v3131 = vadd.s32 %v3127, 3
        %v3132 = vand.u32 %v3131, 3
        %vm3133 = vcmp.lt.s32.totalorder %v3132, 2
        %vm3134 = vcmp.eq.s32.totalorder %v3132, 0
        %v3135 = vxor.u32 %v3129, 2147483648
        %v3136 = vsel %vm3134, %v3128, %v3135
        %vm3137 = vcmp.eq.s32.totalorder %v3132, 2
        %v3138 = vxor.u32 %v3128, 2147483648
        %v3139 = vsel %vm3137, %v3138, %v3129
        %v3140 = vsel %vm3133, %v3136, %v3139
        %v3141 = vsel %vm3130, nan, %v3140
        %v3142 = vand.u32 2147483647, %v2747
        %vm3143 = vcmp.le.f32.partialorder %v3142, 0.7853982
        %vm3144 = vcmp.lt.s32.totalorder %v2747, 0
        %v3145 = vand.u32 %v2747, 2139095040
        %v3146 = vshrl.u32 %v3145, 23
        %v3147 = vsub.s32 %v3146, 127
        %v3148 = vand.u32 2147483647, %v2747
        %v3149 = vand.u32 %v3148, 8388607
        %v3150 = vor.u32 %v3149, 8388608
        %v3151 = vsub.s32 0, %v3150
        %v3152 = vadd.s32 %v3147, 1
        %vm3153 = vcmp.gt.s32.totalorder %v3152, 0
        %v3154 = vsel %vm3153, %v3152, 0
        %v3155 = vshrl.u32 %v3154, 5
        %v3156 = vand.u32 %v3154, 31
        %v3157 = vsub.s32 32, %v3156
        %v3158 = vshrl.u32 683565275, %v3157
        %v3159 = vshll.u32 683565275, %v3156
        %v3160 = vshrl.u32 2475754826, %v3157
        %v3161 = vor.u32 %v3159, %v3160
        %v3162 = vshll.u32 2475754826, %v3156
        %v3163 = vshrl.u32 2131351028, %v3157
        %v3164 = vor.u32 %v3162, %v3163
        %v3165 = vshll.u32 2131351028, %v3156
        %v3166 = vshrl.u32 2102212464, %v3157
        %v3167 = vor.u32 %v3165, %v3166
        %v3168 = vshll.u32 2102212464, %v3156
        %v3169 = vshrl.u32 920167782, %v3157
        %v3170 = vor.u32 %v3168, %v3169
        %v3171 = vshll.u32 920167782, %v3156
        %v3172 = vshrl.u32 1326507024, %v3157
        %v3173 = vor.u32 %v3171, %v3172
        %vm3174 = vcmp.lt.s32.totalorder %v3155, 1
        %vm3175 = vcmp.lt.s32.totalorder %v3155, 2
        %vm3176 = vcmp.lt.s32.totalorder %v3155, 3
        %vm3177 = vcmp.lt.s32.totalorder %v3155, 4
        %v3178 = vsel %vm3174, %v3158, %v3161
        %v3179 = vsel %vm3177, %v3167, 2102212464
        %v3180 = vsel %vm3176, %v3164, %v3179
        %v3181 = vsel %vm3175, %v3178, %v3180
        %v3182 = vsel %vm3174, %v3161, %v3164
        %v3183 = vsel %vm3177, %v3170, 920167782
        %v3184 = vsel %vm3176, %v3167, %v3183
        %v3185 = vsel %vm3175, %v3182, %v3184
        %v3186 = vsel %vm3174, %v3164, %v3167
        %v3187 = vsel %vm3177, %v3173, 1326507024
        %v3188 = vsel %vm3176, %v3170, %v3187
        %v3189 = vsel %vm3175, %v3186, %v3188
        %v3190 = vshll.u32 %v3150, 8
        %v3191 = vmul.u32.u64.compose %v3190, %v3189
        %v3192 = vextract.low.u32 %v3191
        %v3193 = vextract.high.u32 %v3191
        %v3194 = vmul.u32.u64.compose %v3190, %v3185
        %v3195 = vextract.low.u32 %v3194
        %v3196 = vextract.high.u32 %v3194
        %v3197 = vmul.u32 %v3190, %v3181
        %v3198 = vadd.s32 %v3193, %v3195
        %vm3199 = vc.u32 %v3193, %v3195
        %v3200 = vadd.s32 %v3196, 1
        %v3201 = vsel %vm3199, %v3200, %v3196
        %v3202 = vadd.s32 %v3197, %v3201
        %v3203 = vadd.s32 %v3202, 536870912
        %v3204 = vshrl.u32 %v3203, 30
        %v3205 = vshll.u32 %v3204, 30
        %v3206 = vsub.s32 %v3202, %v3205
        %vm3207 = vcmp.lt.s32.totalorder %v3206, 0
        %v3208 = vsub.s32 0, %v3206
        %v3209 = vsel %vm3207, %v3208, %v3206
        %v3210 = vclz %v3209
        %v3211 = vsub.s32 %v3210, 2
        %vm3212 = vcmp.gt.s32.totalorder 0, %v3211
        %v3213 = vsel %vm3212, 0, %v3211
        %v3214 = vsub.s32 32, %v3213
        %v3215 = vshll.u32 %v3206, %v3213
        %v3216 = vshrl.u32 %v3198, %v3214
        %v3217 = vor.u32 %v3215, %v3216
        %v3218 = vsub.s32 4294967266, %v3213
        %v3219 = vadd.s32 %v3218, 127
        %v3220 = vshll.u32 %v3219, 23
        %v3221 = vor.u32 4788187, %v3220
        %v3222 = vand.u32 2147483647, %v3221
        %v3224 = vcvt.s32.f32 %v3217
        %v3225 = vmul.f32 %v3224, %v3222
        %v3226 = vxor.u32 %v3225, 2147483648
        %v3227 = vsel %vm3144, %v3226, %v3225
        %v3228 = vsub.s32 4, %v3204
        %v3229 = vsel %vm3144, %v3228, %v3204
        %v3230 = vsel %vm3143, %v2747, %v3227
        %v3231 = vsel %vm3143, 0, %v3229
        %v3232 = vcosq.f32.pop %v3230
        %v3233 = vsinq.f32.pop %v3230
        %vm3234 = vweird.f32 %v2747
        %v3235 = vadd.s32 %v3231, 3
        %v3236 = vand.u32 %v3235, 3
        %vm3237 = vcmp.lt.s32.totalorder %v3236, 2
        %vm3238 = vcmp.eq.s32.totalorder %v3236, 0
        %v3239 = vxor.u32 %v3233, 2147483648
        %v3240 = vsel %vm3238, %v3232, %v3239
        %vm3241 = vcmp.eq.s32.totalorder %v3236, 2
        %v3242 = vxor.u32 %v3232, 2147483648
        %v3243 = vsel %vm3241, %v3242, %v3233
        %v3244 = vsel %vm3237, %v3240, %v3243
        %v3245 = vsel %vm3234, nan, %v3244
        %v3246 = vand.u32 2147483647, %v2752
        %vm3247 = vcmp.le.f32.partialorder %v3246, 0.7853982
        %vm3248 = vcmp.lt.s32.totalorder %v2752, 0
        %v3249 = vand.u32 %v2752, 2139095040
        %v3250 = vshrl.u32 %v3249, 23
        %v3251 = vsub.s32 %v3250, 127
        %v3252 = vand.u32 2147483647, %v2752
        %v3253 = vand.u32 %v3252, 8388607
        %v3254 = vor.u32 %v3253, 8388608
        %v3255 = vsub.s32 0, %v3254
        %v3256 = vadd.s32 %v3251, 1
        %vm3257 = vcmp.gt.s32.totalorder %v3256, 0
        %v3258 = vsel %vm3257, %v3256, 0
        %v3259 = vshrl.u32 %v3258, 5
        %v3260 = vand.u32 %v3258, 31
        %v3261 = vsub.s32 32, %v3260
        %v3262 = vshrl.u32 683565275, %v3261
        %v3263 = vshll.u32 683565275, %v3260
        %v3264 = vshrl.u32 2475754826, %v3261
        %v3265 = vor.u32 %v3263, %v3264
        %v3266 = vshll.u32 2475754826, %v3260
        %v3267 = vshrl.u32 2131351028, %v3261
        %v3268 = vor.u32 %v3266, %v3267
        %v3269 = vshll.u32 2131351028, %v3260
        %v3270 = vshrl.u32 2102212464, %v3261
        %v3271 = vor.u32 %v3269, %v3270
        %v3272 = vshll.u32 2102212464, %v3260
        %v3273 = vshrl.u32 920167782, %v3261
        %v3274 = vor.u32 %v3272, %v3273
        %v3275 = vshll.u32 920167782, %v3260
        %v3276 = vshrl.u32 1326507024, %v3261
        %v3277 = vor.u32 %v3275, %v3276
        %vm3278 = vcmp.lt.s32.totalorder %v3259, 1
        %vm3279 = vcmp.lt.s32.totalorder %v3259, 2
        %vm3280 = vcmp.lt.s32.totalorder %v3259, 3
        %vm3281 = vcmp.lt.s32.totalorder %v3259, 4
        %v3282 = vsel %vm3278, %v3262, %v3265
        %v3283 = vsel %vm3281, %v3271, 2102212464
        %v3284 = vsel %vm3280, %v3268, %v3283
        %v3285 = vsel %vm3279, %v3282, %v3284
        %v3286 = vsel %vm3278, %v3265, %v3268
        %v3287 = vsel %vm3281, %v3274, 920167782
        %v3288 = vsel %vm3280, %v3271, %v3287
        %v3289 = vsel %vm3279, %v3286, %v3288
        %v3290 = vsel %vm3278, %v3268, %v3271
        %v3291 = vsel %vm3281, %v3277, 1326507024
        %v3292 = vsel %vm3280, %v3274, %v3291
        %v3293 = vsel %vm3279, %v3290, %v3292
        %v3294 = vshll.u32 %v3254, 8
        %v3295 = vmul.u32.u64.compose %v3294, %v3293
        %v3296 = vextract.low.u32 %v3295
        %v3297 = vextract.high.u32 %v3295
        %v3298 = vmul.u32.u64.compose %v3294, %v3289
        %v3299 = vextract.low.u32 %v3298
        %v3300 = vextract.high.u32 %v3298
        %v3301 = vmul.u32 %v3294, %v3285
        %v3302 = vadd.s32 %v3297, %v3299
        %vm3303 = vc.u32 %v3297, %v3299
        %v3304 = vadd.s32 %v3300, 1
        %v3305 = vsel %vm3303, %v3304, %v3300
        %v3306 = vadd.s32 %v3301, %v3305
        %v3307 = vadd.s32 %v3306, 536870912
        %v3308 = vshrl.u32 %v3307, 30
        %v3309 = vshll.u32 %v3308, 30
        %v3310 = vsub.s32 %v3306, %v3309
        %vm3311 = vcmp.lt.s32.totalorder %v3310, 0
        %v3312 = vsub.s32 0, %v3310
        %v3313 = vsel %vm3311, %v3312, %v3310
        %v3314 = vclz %v3313
        %v3315 = vsub.s32 %v3314, 2
        %vm3316 = vcmp.gt.s32.totalorder 0, %v3315
        %v3317 = vsel %vm3316, 0, %v3315
        %v3318 = vsub.s32 32, %v3317
        %v3319 = vshll.u32 %v3310, %v3317
        %v3320 = vshrl.u32 %v3302, %v3318
        %v3321 = vor.u32 %v3319, %v3320
        %v3322 = vsub.s32 4294967266, %v3317
        %v3323 = vadd.s32 %v3322, 127
        %v3324 = vshll.u32 %v3323, 23
        %v3325 = vor.u32 4788187, %v3324
        %v3326 = vand.u32 2147483647, %v3325
        %v3328 = vcvt.s32.f32 %v3321
        %v3329 = vmul.f32 %v3328, %v3326
        %v3330 = vxor.u32 %v3329, 2147483648
        %v3331 = vsel %vm3248, %v3330, %v3329
        %v3332 = vsub.s32 4, %v3308
        %v3333 = vsel %vm3248, %v3332, %v3308
        %v3334 = vsel %vm3247, %v2752, %v3331
        %v3335 = vsel %vm3247, 0, %v3333
        %v3336 = vcosq.f32.pop %v3334
        %v3337 = vsinq.f32.pop %v3334
        %vm3338 = vweird.f32 %v2752
        %v3339 = vadd.s32 %v3335, 3
        %v3340 = vand.u32 %v3339, 3
        %vm3341 = vcmp.lt.s32.totalorder %v3340, 2
        %vm3342 = vcmp.eq.s32.totalorder %v3340, 0
        %v3343 = vxor.u32 %v3337, 2147483648
        %v3344 = vsel %vm3342, %v3336, %v3343
        %vm3345 = vcmp.eq.s32.totalorder %v3340, 2
        %v3346 = vxor.u32 %v3336, 2147483648
        %v3347 = vsel %vm3345, %v3346, %v3337
        %v3348 = vsel %vm3341, %v3344, %v3347
        %v3349 = vsel %vm3338, nan, %v3348
        %v3350 = vand.u32 2147483647, %v2757
        %vm3351 = vcmp.le.f32.partialorder %v3350, 0.7853982
        %vm3352 = vcmp.lt.s32.totalorder %v2757, 0
        %v3353 = vand.u32 %v2757, 2139095040
        %v3354 = vshrl.u32 %v3353, 23
        %v3355 = vsub.s32 %v3354, 127
        %v3356 = vand.u32 2147483647, %v2757
        %v3357 = vand.u32 %v3356, 8388607
        %v3358 = vor.u32 %v3357, 8388608
        %v3359 = vsub.s32 0, %v3358
        %v3360 = vadd.s32 %v3355, 1
        %vm3361 = vcmp.gt.s32.totalorder %v3360, 0
        %v3362 = vsel %vm3361, %v3360, 0
        %v3363 = vshrl.u32 %v3362, 5
        %v3364 = vand.u32 %v3362, 31
        %v3365 = vsub.s32 32, %v3364
        %v3366 = vshrl.u32 683565275, %v3365
        %v3367 = vshll.u32 683565275, %v3364
        %v3368 = vshrl.u32 2475754826, %v3365
        %v3369 = vor.u32 %v3367, %v3368
        %v3370 = vshll.u32 2475754826, %v3364
        %v3371 = vshrl.u32 2131351028, %v3365
        %v3372 = vor.u32 %v3370, %v3371
        %v3373 = vshll.u32 2131351028, %v3364
        %v3374 = vshrl.u32 2102212464, %v3365
        %v3375 = vor.u32 %v3373, %v3374
        %v3376 = vshll.u32 2102212464, %v3364
        %v3377 = vshrl.u32 920167782, %v3365
        %v3378 = vor.u32 %v3376, %v3377
        %v3379 = vshll.u32 920167782, %v3364
        %v3380 = vshrl.u32 1326507024, %v3365
        %v3381 = vor.u32 %v3379, %v3380
        %vm3382 = vcmp.lt.s32.totalorder %v3363, 1
        %vm3383 = vcmp.lt.s32.totalorder %v3363, 2
        %vm3384 = vcmp.lt.s32.totalorder %v3363, 3
        %vm3385 = vcmp.lt.s32.totalorder %v3363, 4
        %v3386 = vsel %vm3382, %v3366, %v3369
        %v3387 = vsel %vm3385, %v3375, 2102212464
        %v3388 = vsel %vm3384, %v3372, %v3387
        %v3389 = vsel %vm3383, %v3386, %v3388
        %v3390 = vsel %vm3382, %v3369, %v3372
        %v3391 = vsel %vm3385, %v3378, 920167782
        %v3392 = vsel %vm3384, %v3375, %v3391
        %v3393 = vsel %vm3383, %v3390, %v3392
        %v3394 = vsel %vm3382, %v3372, %v3375
        %v3395 = vsel %vm3385, %v3381, 1326507024
        %v3396 = vsel %vm3384, %v3378, %v3395
        %v3397 = vsel %vm3383, %v3394, %v3396
        %v3398 = vshll.u32 %v3358, 8
        %v3399 = vmul.u32.u64.compose %v3398, %v3397
        %v3400 = vextract.low.u32 %v3399
        %v3401 = vextract.high.u32 %v3399
        %v3402 = vmul.u32.u64.compose %v3398, %v3393
        %v3403 = vextract.low.u32 %v3402
        %v3404 = vextract.high.u32 %v3402
        %v3405 = vmul.u32 %v3398, %v3389
        %v3406 = vadd.s32 %v3401, %v3403
        %vm3407 = vc.u32 %v3401, %v3403
        %v3408 = vadd.s32 %v3404, 1
        %v3409 = vsel %vm3407, %v3408, %v3404
        %v3410 = vadd.s32 %v3405, %v3409
        %v3411 = vadd.s32 %v3410, 536870912
        %v3412 = vshrl.u32 %v3411, 30
        %v3413 = vshll.u32 %v3412, 30
        %v3414 = vsub.s32 %v3410, %v3413
        %vm3415 = vcmp.lt.s32.totalorder %v3414, 0
        %v3416 = vsub.s32 0, %v3414
        %v3417 = vsel %vm3415, %v3416, %v3414
        %v3418 = vclz %v3417
        %v3419 = vsub.s32 %v3418, 2
        %vm3420 = vcmp.gt.s32.totalorder 0, %v3419
        %v3421 = vsel %vm3420, 0, %v3419
        %v3422 = vsub.s32 32, %v3421
        %v3423 = vshll.u32 %v3414, %v3421
        %v3424 = vshrl.u32 %v3406, %v3422
        %v3425 = vor.u32 %v3423, %v3424
        %v3426 = vsub.s32 4294967266, %v3421
        %v3427 = vadd.s32 %v3426, 127
        %v3428 = vshll.u32 %v3427, 23
        %v3429 = vor.u32 4788187, %v3428
        %v3430 = vand.u32 2147483647, %v3429
        %v3432 = vcvt.s32.f32 %v3425
        %v3433 = vmul.f32 %v3432, %v3430
        %v3434 = vxor.u32 %v3433, 2147483648
        %v3435 = vsel %vm3352, %v3434, %v3433
        %v3436 = vsub.s32 4, %v3412
        %v3437 = vsel %vm3352, %v3436, %v3412
        %v3438 = vsel %vm3351, %v2757, %v3435
        %v3439 = vsel %vm3351, 0, %v3437
        %v3440 = vcosq.f32.pop %v3438
        %v3441 = vsinq.f32.pop %v3438
        %vm3442 = vweird.f32 %v2757
        %v3443 = vadd.s32 %v3439, 3
        %v3444 = vand.u32 %v3443, 3
        %vm3445 = vcmp.lt.s32.totalorder %v3444, 2
        %vm3446 = vcmp.eq.s32.totalorder %v3444, 0
        %v3447 = vxor.u32 %v3441, 2147483648
        %v3448 = vsel %vm3446, %v3440, %v3447
        %vm3449 = vcmp.eq.s32.totalorder %v3444, 2
        %v3450 = vxor.u32 %v3440, 2147483648
        %v3451 = vsel %vm3449, %v3450, %v3441
        %v3452 = vsel %vm3445, %v3448, %v3451
        %v3453 = vsel %vm3442, nan, %v3452
        %v3454 = vand.u32 2147483647, %v2762
        %vm3455 = vcmp.le.f32.partialorder %v3454, 0.7853982
        %vm3456 = vcmp.lt.s32.totalorder %v2762, 0
        %v3457 = vand.u32 %v2762, 2139095040
        %v3458 = vshrl.u32 %v3457, 23
        %v3459 = vsub.s32 %v3458, 127
        %v3460 = vand.u32 2147483647, %v2762
        %v3461 = vand.u32 %v3460, 8388607
        %v3462 = vor.u32 %v3461, 8388608
        %v3463 = vsub.s32 0, %v3462
        %v3464 = vadd.s32 %v3459, 1
        %vm3465 = vcmp.gt.s32.totalorder %v3464, 0
        %v3466 = vsel %vm3465, %v3464, 0
        %v3467 = vshrl.u32 %v3466, 5
        %v3468 = vand.u32 %v3466, 31
        %v3469 = vsub.s32 32, %v3468
        %v3470 = vshrl.u32 683565275, %v3469
        %v3471 = vshll.u32 683565275, %v3468
        %v3472 = vshrl.u32 2475754826, %v3469
        %v3473 = vor.u32 %v3471, %v3472
        %v3474 = vshll.u32 2475754826, %v3468
        %v3475 = vshrl.u32 2131351028, %v3469
        %v3476 = vor.u32 %v3474, %v3475
        %v3477 = vshll.u32 2131351028, %v3468
        %v3478 = vshrl.u32 2102212464, %v3469
        %v3479 = vor.u32 %v3477, %v3478
        %v3480 = vshll.u32 2102212464, %v3468
        %v3481 = vshrl.u32 920167782, %v3469
        %v3482 = vor.u32 %v3480, %v3481
        %v3483 = vshll.u32 920167782, %v3468
        %v3484 = vshrl.u32 1326507024, %v3469
        %v3485 = vor.u32 %v3483, %v3484
        %vm3486 = vcmp.lt.s32.totalorder %v3467, 1
        %vm3487 = vcmp.lt.s32.totalorder %v3467, 2
        %vm3488 = vcmp.lt.s32.totalorder %v3467, 3
        %vm3489 = vcmp.lt.s32.totalorder %v3467, 4
        %v3490 = vsel %vm3486, %v3470, %v3473
        %v3491 = vsel %vm3489, %v3479, 2102212464
        %v3492 = vsel %vm3488, %v3476, %v3491
        %v3493 = vsel %vm3487, %v3490, %v3492
        %v3494 = vsel %vm3486, %v3473, %v3476
        %v3495 = vsel %vm3489, %v3482, 920167782
        %v3496 = vsel %vm3488, %v3479, %v3495
        %v3497 = vsel %vm3487, %v3494, %v3496
        %v3498 = vsel %vm3486, %v3476, %v3479
        %v3499 = vsel %vm3489, %v3485, 1326507024
        %v3500 = vsel %vm3488, %v3482, %v3499
        %v3501 = vsel %vm3487, %v3498, %v3500
        %v3502 = vshll.u32 %v3462, 8
        %v3503 = vmul.u32.u64.compose %v3502, %v3501
        %v3504 = vextract.low.u32 %v3503
        %v3505 = vextract.high.u32 %v3503
        %v3506 = vmul.u32.u64.compose %v3502, %v3497
        %v3507 = vextract.low.u32 %v3506
        %v3508 = vextract.high.u32 %v3506
        %v3509 = vmul.u32 %v3502, %v3493
        %v3510 = vadd.s32 %v3505, %v3507
        %vm3511 = vc.u32 %v3505, %v3507
        %v3512 = vadd.s32 %v3508, 1
        %v3513 = vsel %vm3511, %v3512, %v3508
        %v3514 = vadd.s32 %v3509, %v3513
        %v3515 = vadd.s32 %v3514, 536870912
        %v3516 = vshrl.u32 %v3515, 30
        %v3517 = vshll.u32 %v3516, 30
        %v3518 = vsub.s32 %v3514, %v3517
        %vm3519 = vcmp.lt.s32.totalorder %v3518, 0
        %v3520 = vsub.s32 0, %v3518
        %v3521 = vsel %vm3519, %v3520, %v3518
        %v3522 = vclz %v3521
        %v3523 = vsub.s32 %v3522, 2
        %vm3524 = vcmp.gt.s32.totalorder 0, %v3523
        %v3525 = vsel %vm3524, 0, %v3523
        %v3526 = vsub.s32 32, %v3525
        %v3527 = vshll.u32 %v3518, %v3525
        %v3528 = vshrl.u32 %v3510, %v3526
        %v3529 = vor.u32 %v3527, %v3528
        %v3530 = vsub.s32 4294967266, %v3525
        %v3531 = vadd.s32 %v3530, 127
        %v3532 = vshll.u32 %v3531, 23
        %v3533 = vor.u32 4788187, %v3532
        %v3534 = vand.u32 2147483647, %v3533
        %v3536 = vcvt.s32.f32 %v3529
        %v3537 = vmul.f32 %v3536, %v3534
        %v3538 = vxor.u32 %v3537, 2147483648
        %v3539 = vsel %vm3456, %v3538, %v3537
        %v3540 = vsub.s32 4, %v3516
        %v3541 = vsel %vm3456, %v3540, %v3516
        %v3542 = vsel %vm3455, %v2762, %v3539
        %v3543 = vsel %vm3455, 0, %v3541
        %v3544 = vcosq.f32.pop %v3542
        %v3545 = vsinq.f32.pop %v3542
        %vm3546 = vweird.f32 %v2762
        %v3547 = vadd.s32 %v3543, 3
        %v3548 = vand.u32 %v3547, 3
        %vm3549 = vcmp.lt.s32.totalorder %v3548, 2
        %vm3550 = vcmp.eq.s32.totalorder %v3548, 0
        %v3551 = vxor.u32 %v3545, 2147483648
        %v3552 = vsel %vm3550, %v3544, %v3551
        %vm3553 = vcmp.eq.s32.totalorder %v3548, 2
        %v3554 = vxor.u32 %v3544, 2147483648
        %v3555 = vsel %vm3553, %v3554, %v3545
        %v3556 = vsel %vm3549, %v3552, %v3555
        %v3557 = vsel %vm3546, nan, %v3556
        %v3558 = vand.u32 2147483647, %v2767
        %vm3559 = vcmp.le.f32.partialorder %v3558, 0.7853982
        %vm3560 = vcmp.lt.s32.totalorder %v2767, 0
        %v3561 = vand.u32 %v2767, 2139095040
        %v3562 = vshrl.u32 %v3561, 23
        %v3563 = vsub.s32 %v3562, 127
        %v3564 = vand.u32 2147483647, %v2767
        %v3565 = vand.u32 %v3564, 8388607
        %v3566 = vor.u32 %v3565, 8388608
        %v3567 = vsub.s32 0, %v3566
        %v3568 = vadd.s32 %v3563, 1
        %vm3569 = vcmp.gt.s32.totalorder %v3568, 0
        %v3570 = vsel %vm3569, %v3568, 0
        %v3571 = vshrl.u32 %v3570, 5
        %v3572 = vand.u32 %v3570, 31
        %v3573 = vsub.s32 32, %v3572
        %v3574 = vshrl.u32 683565275, %v3573
        %v3575 = vshll.u32 683565275, %v3572
        %v3576 = vshrl.u32 2475754826, %v3573
        %v3577 = vor.u32 %v3575, %v3576
        %v3578 = vshll.u32 2475754826, %v3572
        %v3579 = vshrl.u32 2131351028, %v3573
        %v3580 = vor.u32 %v3578, %v3579
        %v3581 = vshll.u32 2131351028, %v3572
        %v3582 = vshrl.u32 2102212464, %v3573
        %v3583 = vor.u32 %v3581, %v3582
        %v3584 = vshll.u32 2102212464, %v3572
        %v3585 = vshrl.u32 920167782, %v3573
        %v3586 = vor.u32 %v3584, %v3585
        %v3587 = vshll.u32 920167782, %v3572
        %v3588 = vshrl.u32 1326507024, %v3573
        %v3589 = vor.u32 %v3587, %v3588
        %vm3590 = vcmp.lt.s32.totalorder %v3571, 1
        %vm3591 = vcmp.lt.s32.totalorder %v3571, 2
        %vm3592 = vcmp.lt.s32.totalorder %v3571, 3
        %vm3593 = vcmp.lt.s32.totalorder %v3571, 4
        %v3594 = vsel %vm3590, %v3574, %v3577
        %v3595 = vsel %vm3593, %v3583, 2102212464
        %v3596 = vsel %vm3592, %v3580, %v3595
        %v3597 = vsel %vm3591, %v3594, %v3596
        %v3598 = vsel %vm3590, %v3577, %v3580
        %v3599 = vsel %vm3593, %v3586, 920167782
        %v3600 = vsel %vm3592, %v3583, %v3599
        %v3601 = vsel %vm3591, %v3598, %v3600
        %v3602 = vsel %vm3590, %v3580, %v3583
        %v3603 = vsel %vm3593, %v3589, 1326507024
        %v3604 = vsel %vm3592, %v3586, %v3603
        %v3605 = vsel %vm3591, %v3602, %v3604
        %v3606 = vshll.u32 %v3566, 8
        %v3607 = vmul.u32.u64.compose %v3606, %v3605
        %v3608 = vextract.low.u32 %v3607
        %v3609 = vextract.high.u32 %v3607
        %v3610 = vmul.u32.u64.compose %v3606, %v3601
        %v3611 = vextract.low.u32 %v3610
        %v3612 = vextract.high.u32 %v3610
        %v3613 = vmul.u32 %v3606, %v3597
        %v3614 = vadd.s32 %v3609, %v3611
        %vm3615 = vc.u32 %v3609, %v3611
        %v3616 = vadd.s32 %v3612, 1
        %v3617 = vsel %vm3615, %v3616, %v3612
        %v3618 = vadd.s32 %v3613, %v3617
        %v3619 = vadd.s32 %v3618, 536870912
        %v3620 = vshrl.u32 %v3619, 30
        %v3621 = vshll.u32 %v3620, 30
        %v3622 = vsub.s32 %v3618, %v3621
        %vm3623 = vcmp.lt.s32.totalorder %v3622, 0
        %v3624 = vsub.s32 0, %v3622
        %v3625 = vsel %vm3623, %v3624, %v3622
        %v3626 = vclz %v3625
        %v3627 = vsub.s32 %v3626, 2
        %vm3628 = vcmp.gt.s32.totalorder 0, %v3627
        %v3629 = vsel %vm3628, 0, %v3627
        %v3630 = vsub.s32 32, %v3629
        %v3631 = vshll.u32 %v3622, %v3629
        %v3632 = vshrl.u32 %v3614, %v3630
        %v3633 = vor.u32 %v3631, %v3632
        %v3634 = vsub.s32 4294967266, %v3629
        %v3635 = vadd.s32 %v3634, 127
        %v3636 = vshll.u32 %v3635, 23
        %v3637 = vor.u32 4788187, %v3636
        %v3638 = vand.u32 2147483647, %v3637
        %v3640 = vcvt.s32.f32 %v3633
        %v3641 = vmul.f32 %v3640, %v3638
        %v3642 = vxor.u32 %v3641, 2147483648
        %v3643 = vsel %vm3560, %v3642, %v3641
        %v3644 = vsub.s32 4, %v3620
        %v3645 = vsel %vm3560, %v3644, %v3620
        %v3646 = vsel %vm3559, %v2767, %v3643
        %v3647 = vsel %vm3559, 0, %v3645
        %v3648 = vcosq.f32.pop %v3646
        %v3649 = vsinq.f32.pop %v3646
        %vm3650 = vweird.f32 %v2767
        %v3651 = vadd.s32 %v3647, 3
        %v3652 = vand.u32 %v3651, 3
        %vm3653 = vcmp.lt.s32.totalorder %v3652, 2
        %vm3654 = vcmp.eq.s32.totalorder %v3652, 0
        %v3655 = vxor.u32 %v3649, 2147483648
        %v3656 = vsel %vm3654, %v3648, %v3655
        %vm3657 = vcmp.eq.s32.totalorder %v3652, 2
        %v3658 = vxor.u32 %v3648, 2147483648
        %v3659 = vsel %vm3657, %v3658, %v3649
        %v3660 = vsel %vm3653, %v3656, %v3659
        %v3661 = vsel %vm3650, nan, %v3660
        %v3662 = vand.u32 2147483647, %v2772
        %vm3663 = vcmp.le.f32.partialorder %v3662, 0.7853982
        %vm3664 = vcmp.lt.s32.totalorder %v2772, 0
        %v3665 = vand.u32 %v2772, 2139095040
        %v3666 = vshrl.u32 %v3665, 23
        %v3667 = vsub.s32 %v3666, 127
        %v3668 = vand.u32 2147483647, %v2772
        %v3669 = vand.u32 %v3668, 8388607
        %v3670 = vor.u32 %v3669, 8388608
        %v3671 = vsub.s32 0, %v3670
        %v3672 = vadd.s32 %v3667, 1
        %vm3673 = vcmp.gt.s32.totalorder %v3672, 0
        %v3674 = vsel %vm3673, %v3672, 0
        %v3675 = vshrl.u32 %v3674, 5
        %v3676 = vand.u32 %v3674, 31
        %v3677 = vsub.s32 32, %v3676
        %v3678 = vshrl.u32 683565275, %v3677
        %v3679 = vshll.u32 683565275, %v3676
        %v3680 = vshrl.u32 2475754826, %v3677
        %v3681 = vor.u32 %v3679, %v3680
        %v3682 = vshll.u32 2475754826, %v3676
        %v3683 = vshrl.u32 2131351028, %v3677
        %v3684 = vor.u32 %v3682, %v3683
        %v3685 = vshll.u32 2131351028, %v3676
        %v3686 = vshrl.u32 2102212464, %v3677
        %v3687 = vor.u32 %v3685, %v3686
        %v3688 = vshll.u32 2102212464, %v3676
        %v3689 = vshrl.u32 920167782, %v3677
        %v3690 = vor.u32 %v3688, %v3689
        %v3691 = vshll.u32 920167782, %v3676
        %v3692 = vshrl.u32 1326507024, %v3677
        %v3693 = vor.u32 %v3691, %v3692
        %vm3694 = vcmp.lt.s32.totalorder %v3675, 1
        %vm3695 = vcmp.lt.s32.totalorder %v3675, 2
        %vm3696 = vcmp.lt.s32.totalorder %v3675, 3
        %vm3697 = vcmp.lt.s32.totalorder %v3675, 4
        %v3698 = vsel %vm3694, %v3678, %v3681
        %v3699 = vsel %vm3697, %v3687, 2102212464
        %v3700 = vsel %vm3696, %v3684, %v3699
        %v3701 = vsel %vm3695, %v3698, %v3700
        %v3702 = vsel %vm3694, %v3681, %v3684
        %v3703 = vsel %vm3697, %v3690, 920167782
        %v3704 = vsel %vm3696, %v3687, %v3703
        %v3705 = vsel %vm3695, %v3702, %v3704
        %v3706 = vsel %vm3694, %v3684, %v3687
        %v3707 = vsel %vm3697, %v3693, 1326507024
        %v3708 = vsel %vm3696, %v3690, %v3707
        %v3709 = vsel %vm3695, %v3706, %v3708
        %v3710 = vshll.u32 %v3670, 8
        %v3711 = vmul.u32.u64.compose %v3710, %v3709
        %v3712 = vextract.low.u32 %v3711
        %v3713 = vextract.high.u32 %v3711
        %v3714 = vmul.u32.u64.compose %v3710, %v3705
        %v3715 = vextract.low.u32 %v3714
        %v3716 = vextract.high.u32 %v3714
        %v3717 = vmul.u32 %v3710, %v3701
        %v3718 = vadd.s32 %v3713, %v3715
        %vm3719 = vc.u32 %v3713, %v3715
        %v3720 = vadd.s32 %v3716, 1
        %v3721 = vsel %vm3719, %v3720, %v3716
        %v3722 = vadd.s32 %v3717, %v3721
        %v3723 = vadd.s32 %v3722, 536870912
        %v3724 = vshrl.u32 %v3723, 30
        %v3725 = vshll.u32 %v3724, 30
        %v3726 = vsub.s32 %v3722, %v3725
        %vm3727 = vcmp.lt.s32.totalorder %v3726, 0
        %v3728 = vsub.s32 0, %v3726
        %v3729 = vsel %vm3727, %v3728, %v3726
        %v3730 = vclz %v3729
        %v3731 = vsub.s32 %v3730, 2
        %vm3732 = vcmp.gt.s32.totalorder 0, %v3731
        %v3733 = vsel %vm3732, 0, %v3731
        %v3734 = vsub.s32 32, %v3733
        %v3735 = vshll.u32 %v3726, %v3733
        %v3736 = vshrl.u32 %v3718, %v3734
        %v3737 = vor.u32 %v3735, %v3736
        %v3738 = vsub.s32 4294967266, %v3733
        %v3739 = vadd.s32 %v3738, 127
        %v3740 = vshll.u32 %v3739, 23
        %v3741 = vor.u32 4788187, %v3740
        %v3742 = vand.u32 2147483647, %v3741
        %v3744 = vcvt.s32.f32 %v3737
        %v3745 = vmul.f32 %v3744, %v3742
        %v3746 = vxor.u32 %v3745, 2147483648
        %v3747 = vsel %vm3664, %v3746, %v3745
        %v3748 = vsub.s32 4, %v3724
        %v3749 = vsel %vm3664, %v3748, %v3724
        %v3750 = vsel %vm3663, %v2772, %v3747
        %v3751 = vsel %vm3663, 0, %v3749
        %v3752 = vcosq.f32.pop %v3750
        %v3753 = vsinq.f32.pop %v3750
        %vm3754 = vweird.f32 %v2772
        %v3755 = vadd.s32 %v3751, 3
        %v3756 = vand.u32 %v3755, 3
        %vm3757 = vcmp.lt.s32.totalorder %v3756, 2
        %vm3758 = vcmp.eq.s32.totalorder %v3756, 0
        %v3759 = vxor.u32 %v3753, 2147483648
        %v3760 = vsel %vm3758, %v3752, %v3759
        %vm3761 = vcmp.eq.s32.totalorder %v3756, 2
        %v3762 = vxor.u32 %v3752, 2147483648
        %v3763 = vsel %vm3761, %v3762, %v3753
        %v3764 = vsel %vm3757, %v3760, %v3763
        %v3765 = vsel %vm3754, nan, %v3764
        %v3766 = vand.u32 2147483647, %v2777
        %vm3767 = vcmp.le.f32.partialorder %v3766, 0.7853982
        %vm3768 = vcmp.lt.s32.totalorder %v2777, 0
        %v3769 = vand.u32 %v2777, 2139095040
        %v3770 = vshrl.u32 %v3769, 23
        %v3771 = vsub.s32 %v3770, 127
        %v3772 = vand.u32 2147483647, %v2777
        %v3773 = vand.u32 %v3772, 8388607
        %v3774 = vor.u32 %v3773, 8388608
        %v3775 = vsub.s32 0, %v3774
        %v3776 = vadd.s32 %v3771, 1
        %vm3777 = vcmp.gt.s32.totalorder %v3776, 0
        %v3778 = vsel %vm3777, %v3776, 0
        %v3779 = vshrl.u32 %v3778, 5
        %v3780 = vand.u32 %v3778, 31
        %v3781 = vsub.s32 32, %v3780
        %v3782 = vshrl.u32 683565275, %v3781
        %v3783 = vshll.u32 683565275, %v3780
        %v3784 = vshrl.u32 2475754826, %v3781
        %v3785 = vor.u32 %v3783, %v3784
        %v3786 = vshll.u32 2475754826, %v3780
        %v3787 = vshrl.u32 2131351028, %v3781
        %v3788 = vor.u32 %v3786, %v3787
        %v3789 = vshll.u32 2131351028, %v3780
        %v3790 = vshrl.u32 2102212464, %v3781
        %v3791 = vor.u32 %v3789, %v3790
        %v3792 = vshll.u32 2102212464, %v3780
        %v3793 = vshrl.u32 920167782, %v3781
        %v3794 = vor.u32 %v3792, %v3793
        %v3795 = vshll.u32 920167782, %v3780
        %v3796 = vshrl.u32 1326507024, %v3781
        %v3797 = vor.u32 %v3795, %v3796
        %vm3798 = vcmp.lt.s32.totalorder %v3779, 1
        %vm3799 = vcmp.lt.s32.totalorder %v3779, 2
        %vm3800 = vcmp.lt.s32.totalorder %v3779, 3
        %vm3801 = vcmp.lt.s32.totalorder %v3779, 4
        %v3802 = vsel %vm3798, %v3782, %v3785
        %v3803 = vsel %vm3801, %v3791, 2102212464
        %v3804 = vsel %vm3800, %v3788, %v3803
        %v3805 = vsel %vm3799, %v3802, %v3804
        %v3806 = vsel %vm3798, %v3785, %v3788
        %v3807 = vsel %vm3801, %v3794, 920167782
        %v3808 = vsel %vm3800, %v3791, %v3807
        %v3809 = vsel %vm3799, %v3806, %v3808
        %v3810 = vsel %vm3798, %v3788, %v3791
        %v3811 = vsel %vm3801, %v3797, 1326507024
        %v3812 = vsel %vm3800, %v3794, %v3811
        %v3813 = vsel %vm3799, %v3810, %v3812
        %v3814 = vshll.u32 %v3774, 8
        %v3815 = vmul.u32.u64.compose %v3814, %v3813
        %v3816 = vextract.low.u32 %v3815
        %v3817 = vextract.high.u32 %v3815
        %v3818 = vmul.u32.u64.compose %v3814, %v3809
        %v3819 = vextract.low.u32 %v3818
        %v3820 = vextract.high.u32 %v3818
        %v3821 = vmul.u32 %v3814, %v3805
        %v3822 = vadd.s32 %v3817, %v3819
        %vm3823 = vc.u32 %v3817, %v3819
        %v3824 = vadd.s32 %v3820, 1
        %v3825 = vsel %vm3823, %v3824, %v3820
        %v3826 = vadd.s32 %v3821, %v3825
        %v3827 = vadd.s32 %v3826, 536870912
        %v3828 = vshrl.u32 %v3827, 30
        %v3829 = vshll.u32 %v3828, 30
        %v3830 = vsub.s32 %v3826, %v3829
        %vm3831 = vcmp.lt.s32.totalorder %v3830, 0
        %v3832 = vsub.s32 0, %v3830
        %v3833 = vsel %vm3831, %v3832, %v3830
        %v3834 = vclz %v3833
        %v3835 = vsub.s32 %v3834, 2
        %vm3836 = vcmp.gt.s32.totalorder 0, %v3835
        %v3837 = vsel %vm3836, 0, %v3835
        %v3838 = vsub.s32 32, %v3837
        %v3839 = vshll.u32 %v3830, %v3837
        %v3840 = vshrl.u32 %v3822, %v3838
        %v3841 = vor.u32 %v3839, %v3840
        %v3842 = vsub.s32 4294967266, %v3837
        %v3843 = vadd.s32 %v3842, 127
        %v3844 = vshll.u32 %v3843, 23
        %v3845 = vor.u32 4788187, %v3844
        %v3846 = vand.u32 2147483647, %v3845
        %v3848 = vcvt.s32.f32 %v3841
        %v3849 = vmul.f32 %v3848, %v3846
        %v3850 = vxor.u32 %v3849, 2147483648
        %v3851 = vsel %vm3768, %v3850, %v3849
        %v3852 = vsub.s32 4, %v3828
        %v3853 = vsel %vm3768, %v3852, %v3828
        %v3854 = vsel %vm3767, %v2777, %v3851
        %v3855 = vsel %vm3767, 0, %v3853
        %v3856 = vcosq.f32.pop %v3854
        %v3857 = vsinq.f32.pop %v3854
        %vm3858 = vweird.f32 %v2777
        %v3859 = vadd.s32 %v3855, 3
        %v3860 = vand.u32 %v3859, 3
        %vm3861 = vcmp.lt.s32.totalorder %v3860, 2
        %vm3862 = vcmp.eq.s32.totalorder %v3860, 0
        %v3863 = vxor.u32 %v3857, 2147483648
        %v3864 = vsel %vm3862, %v3856, %v3863
        %vm3865 = vcmp.eq.s32.totalorder %v3860, 2
        %v3866 = vxor.u32 %v3856, 2147483648
        %v3867 = vsel %vm3865, %v3866, %v3857
        %v3868 = vsel %vm3861, %v3864, %v3867
        %v3869 = vsel %vm3858, nan, %v3868
        %v3870 = vand.u32 2147483647, %v2782
        %vm3871 = vcmp.le.f32.partialorder %v3870, 0.7853982
        %vm3872 = vcmp.lt.s32.totalorder %v2782, 0
        %v3873 = vand.u32 %v2782, 2139095040
        %v3874 = vshrl.u32 %v3873, 23
        %v3875 = vsub.s32 %v3874, 127
        %v3876 = vand.u32 2147483647, %v2782
        %v3877 = vand.u32 %v3876, 8388607
        %v3878 = vor.u32 %v3877, 8388608
        %v3879 = vsub.s32 0, %v3878
        %v3880 = vadd.s32 %v3875, 1
        %vm3881 = vcmp.gt.s32.totalorder %v3880, 0
        %v3882 = vsel %vm3881, %v3880, 0
        %v3883 = vshrl.u32 %v3882, 5
        %v3884 = vand.u32 %v3882, 31
        %v3885 = vsub.s32 32, %v3884
        %v3886 = vshrl.u32 683565275, %v3885
        %v3887 = vshll.u32 683565275, %v3884
        %v3888 = vshrl.u32 2475754826, %v3885
        %v3889 = vor.u32 %v3887, %v3888
        %v3890 = vshll.u32 2475754826, %v3884
        %v3891 = vshrl.u32 2131351028, %v3885
        %v3892 = vor.u32 %v3890, %v3891
        %v3893 = vshll.u32 2131351028, %v3884
        %v3894 = vshrl.u32 2102212464, %v3885
        %v3895 = vor.u32 %v3893, %v3894
        %v3896 = vshll.u32 2102212464, %v3884
        %v3897 = vshrl.u32 920167782, %v3885
        %v3898 = vor.u32 %v3896, %v3897
        %v3899 = vshll.u32 920167782, %v3884
        %v3900 = vshrl.u32 1326507024, %v3885
        %v3901 = vor.u32 %v3899, %v3900
        %vm3902 = vcmp.lt.s32.totalorder %v3883, 1
        %vm3903 = vcmp.lt.s32.totalorder %v3883, 2
        %vm3904 = vcmp.lt.s32.totalorder %v3883, 3
        %vm3905 = vcmp.lt.s32.totalorder %v3883, 4
        %v3906 = vsel %vm3902, %v3886, %v3889
        %v3907 = vsel %vm3905, %v3895, 2102212464
        %v3908 = vsel %vm3904, %v3892, %v3907
        %v3909 = vsel %vm3903, %v3906, %v3908
        %v3910 = vsel %vm3902, %v3889, %v3892
        %v3911 = vsel %vm3905, %v3898, 920167782
        %v3912 = vsel %vm3904, %v3895, %v3911
        %v3913 = vsel %vm3903, %v3910, %v3912
        %v3914 = vsel %vm3902, %v3892, %v3895
        %v3915 = vsel %vm3905, %v3901, 1326507024
        %v3916 = vsel %vm3904, %v3898, %v3915
        %v3917 = vsel %vm3903, %v3914, %v3916
        %v3918 = vshll.u32 %v3878, 8
        %v3919 = vmul.u32.u64.compose %v3918, %v3917
        %v3920 = vextract.low.u32 %v3919
        %v3921 = vextract.high.u32 %v3919
        %v3922 = vmul.u32.u64.compose %v3918, %v3913
        %v3923 = vextract.low.u32 %v3922
        %v3924 = vextract.high.u32 %v3922
        %v3925 = vmul.u32 %v3918, %v3909
        %v3926 = vadd.s32 %v3921, %v3923
        %vm3927 = vc.u32 %v3921, %v3923
        %v3928 = vadd.s32 %v3924, 1
        %v3929 = vsel %vm3927, %v3928, %v3924
        %v3930 = vadd.s32 %v3925, %v3929
        %v3931 = vadd.s32 %v3930, 536870912
        %v3932 = vshrl.u32 %v3931, 30
        %v3933 = vshll.u32 %v3932, 30
        %v3934 = vsub.s32 %v3930, %v3933
        %vm3935 = vcmp.lt.s32.totalorder %v3934, 0
        %v3936 = vsub.s32 0, %v3934
        %v3937 = vsel %vm3935, %v3936, %v3934
        %v3938 = vclz %v3937
        %v3939 = vsub.s32 %v3938, 2
        %vm3940 = vcmp.gt.s32.totalorder 0, %v3939
        %v3941 = vsel %vm3940, 0, %v3939
        %v3942 = vsub.s32 32, %v3941
        %v3943 = vshll.u32 %v3934, %v3941
        %v3944 = vshrl.u32 %v3926, %v3942
        %v3945 = vor.u32 %v3943, %v3944
        %v3946 = vsub.s32 4294967266, %v3941
        %v3947 = vadd.s32 %v3946, 127
        %v3948 = vshll.u32 %v3947, 23
        %v3949 = vor.u32 4788187, %v3948
        %v3950 = vand.u32 2147483647, %v3949
        %v3952 = vcvt.s32.f32 %v3945
        %v3953 = vmul.f32 %v3952, %v3950
        %v3954 = vxor.u32 %v3953, 2147483648
        %v3955 = vsel %vm3872, %v3954, %v3953
        %v3956 = vsub.s32 4, %v3932
        %v3957 = vsel %vm3872, %v3956, %v3932
        %v3958 = vsel %vm3871, %v2782, %v3955
        %v3959 = vsel %vm3871, 0, %v3957
        %v3960 = vcosq.f32.pop %v3958
        %v3961 = vsinq.f32.pop %v3958
        %vm3962 = vweird.f32 %v2782
        %v3963 = vadd.s32 %v3959, 3
        %v3964 = vand.u32 %v3963, 3
        %vm3965 = vcmp.lt.s32.totalorder %v3964, 2
        %vm3966 = vcmp.eq.s32.totalorder %v3964, 0
        %v3967 = vxor.u32 %v3961, 2147483648
        %v3968 = vsel %vm3966, %v3960, %v3967
        %vm3969 = vcmp.eq.s32.totalorder %v3964, 2
        %v3970 = vxor.u32 %v3960, 2147483648
        %v3971 = vsel %vm3969, %v3970, %v3961
        %v3972 = vsel %vm3965, %v3968, %v3971
        %v3973 = vsel %vm3962, nan, %v3972
        %v3974 = vand.u32 2147483647, %v2787
        %vm3975 = vcmp.le.f32.partialorder %v3974, 0.7853982
        %vm3976 = vcmp.lt.s32.totalorder %v2787, 0
        %v3977 = vand.u32 %v2787, 2139095040
        %v3978 = vshrl.u32 %v3977, 23
        %v3979 = vsub.s32 %v3978, 127
        %v3980 = vand.u32 2147483647, %v2787
        %v3981 = vand.u32 %v3980, 8388607
        %v3982 = vor.u32 %v3981, 8388608
        %v3983 = vsub.s32 0, %v3982
        %v3984 = vadd.s32 %v3979, 1
        %vm3985 = vcmp.gt.s32.totalorder %v3984, 0
        %v3986 = vsel %vm3985, %v3984, 0
        %v3987 = vshrl.u32 %v3986, 5
        %v3988 = vand.u32 %v3986, 31
        %v3989 = vsub.s32 32, %v3988
        %v3990 = vshrl.u32 683565275, %v3989
        %v3991 = vshll.u32 683565275, %v3988
        %v3992 = vshrl.u32 2475754826, %v3989
        %v3993 = vor.u32 %v3991, %v3992
        %v3994 = vshll.u32 2475754826, %v3988
        %v3995 = vshrl.u32 2131351028, %v3989
        %v3996 = vor.u32 %v3994, %v3995
        %v3997 = vshll.u32 2131351028, %v3988
        %v3998 = vshrl.u32 2102212464, %v3989
        %v3999 = vor.u32 %v3997, %v3998
        %v4000 = vshll.u32 2102212464, %v3988
        %v4001 = vshrl.u32 920167782, %v3989
        %v4002 = vor.u32 %v4000, %v4001
        %v4003 = vshll.u32 920167782, %v3988
        %v4004 = vshrl.u32 1326507024, %v3989
        %v4005 = vor.u32 %v4003, %v4004
        %vm4006 = vcmp.lt.s32.totalorder %v3987, 1
        %vm4007 = vcmp.lt.s32.totalorder %v3987, 2
        %vm4008 = vcmp.lt.s32.totalorder %v3987, 3
        %vm4009 = vcmp.lt.s32.totalorder %v3987, 4
        %v4010 = vsel %vm4006, %v3990, %v3993
        %v4011 = vsel %vm4009, %v3999, 2102212464
        %v4012 = vsel %vm4008, %v3996, %v4011
        %v4013 = vsel %vm4007, %v4010, %v4012
        %v4014 = vsel %vm4006, %v3993, %v3996
        %v4015 = vsel %vm4009, %v4002, 920167782
        %v4016 = vsel %vm4008, %v3999, %v4015
        %v4017 = vsel %vm4007, %v4014, %v4016
        %v4018 = vsel %vm4006, %v3996, %v3999
        %v4019 = vsel %vm4009, %v4005, 1326507024
        %v4020 = vsel %vm4008, %v4002, %v4019
        %v4021 = vsel %vm4007, %v4018, %v4020
        %v4022 = vshll.u32 %v3982, 8
        %v4023 = vmul.u32.u64.compose %v4022, %v4021
        %v4024 = vextract.low.u32 %v4023
        %v4025 = vextract.high.u32 %v4023
        %v4026 = vmul.u32.u64.compose %v4022, %v4017
        %v4027 = vextract.low.u32 %v4026
        %v4028 = vextract.high.u32 %v4026
        %v4029 = vmul.u32 %v4022, %v4013
        %v4030 = vadd.s32 %v4025, %v4027
        %vm4031 = vc.u32 %v4025, %v4027
        %v4032 = vadd.s32 %v4028, 1
        %v4033 = vsel %vm4031, %v4032, %v4028
        %v4034 = vadd.s32 %v4029, %v4033
        %v4035 = vadd.s32 %v4034, 536870912
        %v4036 = vshrl.u32 %v4035, 30
        %v4037 = vshll.u32 %v4036, 30
        %v4038 = vsub.s32 %v4034, %v4037
        %vm4039 = vcmp.lt.s32.totalorder %v4038, 0
        %v4040 = vsub.s32 0, %v4038
        %v4041 = vsel %vm4039, %v4040, %v4038
        %v4042 = vclz %v4041
        %v4043 = vsub.s32 %v4042, 2
        %vm4044 = vcmp.gt.s32.totalorder 0, %v4043
        %v4045 = vsel %vm4044, 0, %v4043
        %v4046 = vsub.s32 32, %v4045
        %v4047 = vshll.u32 %v4038, %v4045
        %v4048 = vshrl.u32 %v4030, %v4046
        %v4049 = vor.u32 %v4047, %v4048
        %v4050 = vsub.s32 4294967266, %v4045
        %v4051 = vadd.s32 %v4050, 127
        %v4052 = vshll.u32 %v4051, 23
        %v4053 = vor.u32 4788187, %v4052
        %v4054 = vand.u32 2147483647, %v4053
        %v4056 = vcvt.s32.f32 %v4049
        %v4057 = vmul.f32 %v4056, %v4054
        %v4058 = vxor.u32 %v4057, 2147483648
        %v4059 = vsel %vm3976, %v4058, %v4057
        %v4060 = vsub.s32 4, %v4036
        %v4061 = vsel %vm3976, %v4060, %v4036
        %v4062 = vsel %vm3975, %v2787, %v4059
        %v4063 = vsel %vm3975, 0, %v4061
        %v4064 = vcosq.f32.pop %v4062
        %v4065 = vsinq.f32.pop %v4062
        %vm4066 = vweird.f32 %v2787
        %v4067 = vadd.s32 %v4063, 3
        %v4068 = vand.u32 %v4067, 3
        %vm4069 = vcmp.lt.s32.totalorder %v4068, 2
        %vm4070 = vcmp.eq.s32.totalorder %v4068, 0
        %v4071 = vxor.u32 %v4065, 2147483648
        %v4072 = vsel %vm4070, %v4064, %v4071
        %vm4073 = vcmp.eq.s32.totalorder %v4068, 2
        %v4074 = vxor.u32 %v4064, 2147483648
        %v4075 = vsel %vm4073, %v4074, %v4065
        %v4076 = vsel %vm4069, %v4072, %v4075
        %v4077 = vsel %vm4066, nan, %v4076
        %v4078 = vand.u32 2147483647, %v2792
        %vm4079 = vcmp.le.f32.partialorder %v4078, 0.7853982
        %vm4080 = vcmp.lt.s32.totalorder %v2792, 0
        %v4081 = vand.u32 %v2792, 2139095040
        %v4082 = vshrl.u32 %v4081, 23
        %v4083 = vsub.s32 %v4082, 127
        %v4084 = vand.u32 2147483647, %v2792
        %v4085 = vand.u32 %v4084, 8388607
        %v4086 = vor.u32 %v4085, 8388608
        %v4087 = vsub.s32 0, %v4086
        %v4088 = vadd.s32 %v4083, 1
        %vm4089 = vcmp.gt.s32.totalorder %v4088, 0
        %v4090 = vsel %vm4089, %v4088, 0
        %v4091 = vshrl.u32 %v4090, 5
        %v4092 = vand.u32 %v4090, 31
        %v4093 = vsub.s32 32, %v4092
        %v4094 = vshrl.u32 683565275, %v4093
        %v4095 = vshll.u32 683565275, %v4092
        %v4096 = vshrl.u32 2475754826, %v4093
        %v4097 = vor.u32 %v4095, %v4096
        %v4098 = vshll.u32 2475754826, %v4092
        %v4099 = vshrl.u32 2131351028, %v4093
        %v4100 = vor.u32 %v4098, %v4099
        %v4101 = vshll.u32 2131351028, %v4092
        %v4102 = vshrl.u32 2102212464, %v4093
        %v4103 = vor.u32 %v4101, %v4102
        %v4104 = vshll.u32 2102212464, %v4092
        %v4105 = vshrl.u32 920167782, %v4093
        %v4106 = vor.u32 %v4104, %v4105
        %v4107 = vshll.u32 920167782, %v4092
        %v4108 = vshrl.u32 1326507024, %v4093
        %v4109 = vor.u32 %v4107, %v4108
        %vm4110 = vcmp.lt.s32.totalorder %v4091, 1
        %vm4111 = vcmp.lt.s32.totalorder %v4091, 2
        %vm4112 = vcmp.lt.s32.totalorder %v4091, 3
        %vm4113 = vcmp.lt.s32.totalorder %v4091, 4
        %v4114 = vsel %vm4110, %v4094, %v4097
        %v4115 = vsel %vm4113, %v4103, 2102212464
        %v4116 = vsel %vm4112, %v4100, %v4115
        %v4117 = vsel %vm4111, %v4114, %v4116
        %v4118 = vsel %vm4110, %v4097, %v4100
        %v4119 = vsel %vm4113, %v4106, 920167782
        %v4120 = vsel %vm4112, %v4103, %v4119
        %v4121 = vsel %vm4111, %v4118, %v4120
        %v4122 = vsel %vm4110, %v4100, %v4103
        %v4123 = vsel %vm4113, %v4109, 1326507024
        %v4124 = vsel %vm4112, %v4106, %v4123
        %v4125 = vsel %vm4111, %v4122, %v4124
        %v4126 = vshll.u32 %v4086, 8
        %v4127 = vmul.u32.u64.compose %v4126, %v4125
        %v4128 = vextract.low.u32 %v4127
        %v4129 = vextract.high.u32 %v4127
        %v4130 = vmul.u32.u64.compose %v4126, %v4121
        %v4131 = vextract.low.u32 %v4130
        %v4132 = vextract.high.u32 %v4130
        %v4133 = vmul.u32 %v4126, %v4117
        %v4134 = vadd.s32 %v4129, %v4131
        %vm4135 = vc.u32 %v4129, %v4131
        %v4136 = vadd.s32 %v4132, 1
        %v4137 = vsel %vm4135, %v4136, %v4132
        %v4138 = vadd.s32 %v4133, %v4137
        %v4139 = vadd.s32 %v4138, 536870912
        %v4140 = vshrl.u32 %v4139, 30
        %v4141 = vshll.u32 %v4140, 30
        %v4142 = vsub.s32 %v4138, %v4141
        %vm4143 = vcmp.lt.s32.totalorder %v4142, 0
        %v4144 = vsub.s32 0, %v4142
        %v4145 = vsel %vm4143, %v4144, %v4142
        %v4146 = vclz %v4145
        %v4147 = vsub.s32 %v4146, 2
        %vm4148 = vcmp.gt.s32.totalorder 0, %v4147
        %v4149 = vsel %vm4148, 0, %v4147
        %v4150 = vsub.s32 32, %v4149
        %v4151 = vshll.u32 %v4142, %v4149
        %v4152 = vshrl.u32 %v4134, %v4150
        %v4153 = vor.u32 %v4151, %v4152
        %v4154 = vsub.s32 4294967266, %v4149
        %v4155 = vadd.s32 %v4154, 127
        %v4156 = vshll.u32 %v4155, 23
        %v4157 = vor.u32 4788187, %v4156
        %v4158 = vand.u32 2147483647, %v4157
        %v4160 = vcvt.s32.f32 %v4153
        %v4161 = vmul.f32 %v4160, %v4158
        %v4162 = vxor.u32 %v4161, 2147483648
        %v4163 = vsel %vm4080, %v4162, %v4161
        %v4164 = vsub.s32 4, %v4140
        %v4165 = vsel %vm4080, %v4164, %v4140
        %v4166 = vsel %vm4079, %v2792, %v4163
        %v4167 = vsel %vm4079, 0, %v4165
        %v4168 = vcosq.f32.pop %v4166
        %v4169 = vsinq.f32.pop %v4166
        %vm4170 = vweird.f32 %v2792
        %v4171 = vadd.s32 %v4167, 3
        %v4172 = vand.u32 %v4171, 3
        %vm4173 = vcmp.lt.s32.totalorder %v4172, 2
        %vm4174 = vcmp.eq.s32.totalorder %v4172, 0
        %v4175 = vxor.u32 %v4169, 2147483648
        %v4176 = vsel %vm4174, %v4168, %v4175
        %vm4177 = vcmp.eq.s32.totalorder %v4172, 2
        %v4178 = vxor.u32 %v4168, 2147483648
        %v4179 = vsel %vm4177, %v4178, %v4169
        %v4180 = vsel %vm4173, %v4176, %v4179
        %v4181 = vsel %vm4170, nan, %v4180
        %v4182 = vand.u32 2147483647, %v2797
        %vm4183 = vcmp.le.f32.partialorder %v4182, 0.7853982
        %vm4184 = vcmp.lt.s32.totalorder %v2797, 0
        %v4185 = vand.u32 %v2797, 2139095040
        %v4186 = vshrl.u32 %v4185, 23
        %v4187 = vsub.s32 %v4186, 127
        %v4188 = vand.u32 2147483647, %v2797
        %v4189 = vand.u32 %v4188, 8388607
        %v4190 = vor.u32 %v4189, 8388608
        %v4191 = vsub.s32 0, %v4190
        %v4192 = vadd.s32 %v4187, 1
        %vm4193 = vcmp.gt.s32.totalorder %v4192, 0
        %v4194 = vsel %vm4193, %v4192, 0
        %v4195 = vshrl.u32 %v4194, 5
        %v4196 = vand.u32 %v4194, 31
        %v4197 = vsub.s32 32, %v4196
        %v4198 = vshrl.u32 683565275, %v4197
        %v4199 = vshll.u32 683565275, %v4196
        %v4200 = vshrl.u32 2475754826, %v4197
        %v4201 = vor.u32 %v4199, %v4200
        %v4202 = vshll.u32 2475754826, %v4196
        %v4203 = vshrl.u32 2131351028, %v4197
        %v4204 = vor.u32 %v4202, %v4203
        %v4205 = vshll.u32 2131351028, %v4196
        %v4206 = vshrl.u32 2102212464, %v4197
        %v4207 = vor.u32 %v4205, %v4206
        %v4208 = vshll.u32 2102212464, %v4196
        %v4209 = vshrl.u32 920167782, %v4197
        %v4210 = vor.u32 %v4208, %v4209
        %v4211 = vshll.u32 920167782, %v4196
        %v4212 = vshrl.u32 1326507024, %v4197
        %v4213 = vor.u32 %v4211, %v4212
        %vm4214 = vcmp.lt.s32.totalorder %v4195, 1
        %vm4215 = vcmp.lt.s32.totalorder %v4195, 2
        %vm4216 = vcmp.lt.s32.totalorder %v4195, 3
        %vm4217 = vcmp.lt.s32.totalorder %v4195, 4
        %v4218 = vsel %vm4214, %v4198, %v4201
        %v4219 = vsel %vm4217, %v4207, 2102212464
        %v4220 = vsel %vm4216, %v4204, %v4219
        %v4221 = vsel %vm4215, %v4218, %v4220
        %v4222 = vsel %vm4214, %v4201, %v4204
        %v4223 = vsel %vm4217, %v4210, 920167782
        %v4224 = vsel %vm4216, %v4207, %v4223
        %v4225 = vsel %vm4215, %v4222, %v4224
        %v4226 = vsel %vm4214, %v4204, %v4207
        %v4227 = vsel %vm4217, %v4213, 1326507024
        %v4228 = vsel %vm4216, %v4210, %v4227
        %v4229 = vsel %vm4215, %v4226, %v4228
        %v4230 = vshll.u32 %v4190, 8
        %v4231 = vmul.u32.u64.compose %v4230, %v4229
        %v4232 = vextract.low.u32 %v4231
        %v4233 = vextract.high.u32 %v4231
        %v4234 = vmul.u32.u64.compose %v4230, %v4225
        %v4235 = vextract.low.u32 %v4234
        %v4236 = vextract.high.u32 %v4234
        %v4237 = vmul.u32 %v4230, %v4221
        %v4238 = vadd.s32 %v4233, %v4235
        %vm4239 = vc.u32 %v4233, %v4235
        %v4240 = vadd.s32 %v4236, 1
        %v4241 = vsel %vm4239, %v4240, %v4236
        %v4242 = vadd.s32 %v4237, %v4241
        %v4243 = vadd.s32 %v4242, 536870912
        %v4244 = vshrl.u32 %v4243, 30
        %v4245 = vshll.u32 %v4244, 30
        %v4246 = vsub.s32 %v4242, %v4245
        %vm4247 = vcmp.lt.s32.totalorder %v4246, 0
        %v4248 = vsub.s32 0, %v4246
        %v4249 = vsel %vm4247, %v4248, %v4246
        %v4250 = vclz %v4249
        %v4251 = vsub.s32 %v4250, 2
        %vm4252 = vcmp.gt.s32.totalorder 0, %v4251
        %v4253 = vsel %vm4252, 0, %v4251
        %v4254 = vsub.s32 32, %v4253
        %v4255 = vshll.u32 %v4246, %v4253
        %v4256 = vshrl.u32 %v4238, %v4254
        %v4257 = vor.u32 %v4255, %v4256
        %v4258 = vsub.s32 4294967266, %v4253
        %v4259 = vadd.s32 %v4258, 127
        %v4260 = vshll.u32 %v4259, 23
        %v4261 = vor.u32 4788187, %v4260
        %v4262 = vand.u32 2147483647, %v4261
        %v4264 = vcvt.s32.f32 %v4257
        %v4265 = vmul.f32 %v4264, %v4262
        %v4266 = vxor.u32 %v4265, 2147483648
        %v4267 = vsel %vm4184, %v4266, %v4265
        %v4268 = vsub.s32 4, %v4244
        %v4269 = vsel %vm4184, %v4268, %v4244
        %v4270 = vsel %vm4183, %v2797, %v4267
        %v4271 = vsel %vm4183, 0, %v4269
        %v4272 = vcosq.f32.pop %v4270
        %v4273 = vsinq.f32.pop %v4270
        %vm4274 = vweird.f32 %v2797
        %v4275 = vadd.s32 %v4271, 3
        %v4276 = vand.u32 %v4275, 3
        %vm4277 = vcmp.lt.s32.totalorder %v4276, 2
        %vm4278 = vcmp.eq.s32.totalorder %v4276, 0
        %v4279 = vxor.u32 %v4273, 2147483648
        %v4280 = vsel %vm4278, %v4272, %v4279
        %vm4281 = vcmp.eq.s32.totalorder %v4276, 2
        %v4282 = vxor.u32 %v4272, 2147483648
        %v4283 = vsel %vm4281, %v4282, %v4273
        %v4284 = vsel %vm4277, %v4280, %v4283
        %v4285 = vsel %vm4274, nan, %v4284
        %v4286 = vand.u32 2147483647, %v2802
        %vm4287 = vcmp.le.f32.partialorder %v4286, 0.7853982
        %vm4288 = vcmp.lt.s32.totalorder %v2802, 0
        %v4289 = vand.u32 %v2802, 2139095040
        %v4290 = vshrl.u32 %v4289, 23
        %v4291 = vsub.s32 %v4290, 127
        %v4292 = vand.u32 2147483647, %v2802
        %v4293 = vand.u32 %v4292, 8388607
        %v4294 = vor.u32 %v4293, 8388608
        %v4295 = vsub.s32 0, %v4294
        %v4296 = vadd.s32 %v4291, 1
        %vm4297 = vcmp.gt.s32.totalorder %v4296, 0
        %v4298 = vsel %vm4297, %v4296, 0
        %v4299 = vshrl.u32 %v4298, 5
        %v4300 = vand.u32 %v4298, 31
        %v4301 = vsub.s32 32, %v4300
        %v4302 = vshrl.u32 683565275, %v4301
        %v4303 = vshll.u32 683565275, %v4300
        %v4304 = vshrl.u32 2475754826, %v4301
        %v4305 = vor.u32 %v4303, %v4304
        %v4306 = vshll.u32 2475754826, %v4300
        %v4307 = vshrl.u32 2131351028, %v4301
        %v4308 = vor.u32 %v4306, %v4307
        %v4309 = vshll.u32 2131351028, %v4300
        %v4310 = vshrl.u32 2102212464, %v4301
        %v4311 = vor.u32 %v4309, %v4310
        %v4312 = vshll.u32 2102212464, %v4300
        %v4313 = vshrl.u32 920167782, %v4301
        %v4314 = vor.u32 %v4312, %v4313
        %v4315 = vshll.u32 920167782, %v4300
        %v4316 = vshrl.u32 1326507024, %v4301
        %v4317 = vor.u32 %v4315, %v4316
        %vm4318 = vcmp.lt.s32.totalorder %v4299, 1
        %vm4319 = vcmp.lt.s32.totalorder %v4299, 2
        %vm4320 = vcmp.lt.s32.totalorder %v4299, 3
        %vm4321 = vcmp.lt.s32.totalorder %v4299, 4
        %v4322 = vsel %vm4318, %v4302, %v4305
        %v4323 = vsel %vm4321, %v4311, 2102212464
        %v4324 = vsel %vm4320, %v4308, %v4323
        %v4325 = vsel %vm4319, %v4322, %v4324
        %v4326 = vsel %vm4318, %v4305, %v4308
        %v4327 = vsel %vm4321, %v4314, 920167782
        %v4328 = vsel %vm4320, %v4311, %v4327
        %v4329 = vsel %vm4319, %v4326, %v4328
        %v4330 = vsel %vm4318, %v4308, %v4311
        %v4331 = vsel %vm4321, %v4317, 1326507024
        %v4332 = vsel %vm4320, %v4314, %v4331
        %v4333 = vsel %vm4319, %v4330, %v4332
        %v4334 = vshll.u32 %v4294, 8
        %v4335 = vmul.u32.u64.compose %v4334, %v4333
        %v4336 = vextract.low.u32 %v4335
        %v4337 = vextract.high.u32 %v4335
        %v4338 = vmul.u32.u64.compose %v4334, %v4329
        %v4339 = vextract.low.u32 %v4338
        %v4340 = vextract.high.u32 %v4338
        %v4341 = vmul.u32 %v4334, %v4325
        %v4342 = vadd.s32 %v4337, %v4339
        %vm4343 = vc.u32 %v4337, %v4339
        %v4344 = vadd.s32 %v4340, 1
        %v4345 = vsel %vm4343, %v4344, %v4340
        %v4346 = vadd.s32 %v4341, %v4345
        %v4347 = vadd.s32 %v4346, 536870912
        %v4348 = vshrl.u32 %v4347, 30
        %v4349 = vshll.u32 %v4348, 30
        %v4350 = vsub.s32 %v4346, %v4349
        %vm4351 = vcmp.lt.s32.totalorder %v4350, 0
        %v4352 = vsub.s32 0, %v4350
        %v4353 = vsel %vm4351, %v4352, %v4350
        %v4354 = vclz %v4353
        %v4355 = vsub.s32 %v4354, 2
        %vm4356 = vcmp.gt.s32.totalorder 0, %v4355
        %v4357 = vsel %vm4356, 0, %v4355
        %v4358 = vsub.s32 32, %v4357
        %v4359 = vshll.u32 %v4350, %v4357
        %v4360 = vshrl.u32 %v4342, %v4358
        %v4361 = vor.u32 %v4359, %v4360
        %v4362 = vsub.s32 4294967266, %v4357
        %v4363 = vadd.s32 %v4362, 127
        %v4364 = vshll.u32 %v4363, 23
        %v4365 = vor.u32 4788187, %v4364
        %v4366 = vand.u32 2147483647, %v4365
        %v4368 = vcvt.s32.f32 %v4361
        %v4369 = vmul.f32 %v4368, %v4366
        %v4370 = vxor.u32 %v4369, 2147483648
        %v4371 = vsel %vm4288, %v4370, %v4369
        %v4372 = vsub.s32 4, %v4348
        %v4373 = vsel %vm4288, %v4372, %v4348
        %v4374 = vsel %vm4287, %v2802, %v4371
        %v4375 = vsel %vm4287, 0, %v4373
        %v4376 = vcosq.f32.pop %v4374
        %v4377 = vsinq.f32.pop %v4374
        %vm4378 = vweird.f32 %v2802
        %v4379 = vadd.s32 %v4375, 3
        %v4380 = vand.u32 %v4379, 3
        %vm4381 = vcmp.lt.s32.totalorder %v4380, 2
        %vm4382 = vcmp.eq.s32.totalorder %v4380, 0
        %v4383 = vxor.u32 %v4377, 2147483648
        %v4384 = vsel %vm4382, %v4376, %v4383
        %vm4385 = vcmp.eq.s32.totalorder %v4380, 2
        %v4386 = vxor.u32 %v4376, 2147483648
        %v4387 = vsel %vm4385, %v4386, %v4377
        %v4388 = vsel %vm4381, %v4384, %v4387
        %v4389 = vsel %vm4378, nan, %v4388
        %v4390 = vand.u32 2147483647, %v2807
        %vm4391 = vcmp.le.f32.partialorder %v4390, 0.7853982
        %vm4392 = vcmp.lt.s32.totalorder %v2807, 0
        %v4393 = vand.u32 %v2807, 2139095040
        %v4394 = vshrl.u32 %v4393, 23
        %v4395 = vsub.s32 %v4394, 127
        %v4396 = vand.u32 2147483647, %v2807
        %v4397 = vand.u32 %v4396, 8388607
        %v4398 = vor.u32 %v4397, 8388608
        %v4399 = vsub.s32 0, %v4398
        %v4400 = vadd.s32 %v4395, 1
        %vm4401 = vcmp.gt.s32.totalorder %v4400, 0
        %v4402 = vsel %vm4401, %v4400, 0
        %v4403 = vshrl.u32 %v4402, 5
        %v4404 = vand.u32 %v4402, 31
        %v4405 = vsub.s32 32, %v4404
        %v4406 = vshrl.u32 683565275, %v4405
        %v4407 = vshll.u32 683565275, %v4404
        %v4408 = vshrl.u32 2475754826, %v4405
        %v4409 = vor.u32 %v4407, %v4408
        %v4410 = vshll.u32 2475754826, %v4404
        %v4411 = vshrl.u32 2131351028, %v4405
        %v4412 = vor.u32 %v4410, %v4411
        %v4413 = vshll.u32 2131351028, %v4404
        %v4414 = vshrl.u32 2102212464, %v4405
        %v4415 = vor.u32 %v4413, %v4414
        %v4416 = vshll.u32 2102212464, %v4404
        %v4417 = vshrl.u32 920167782, %v4405
        %v4418 = vor.u32 %v4416, %v4417
        %v4419 = vshll.u32 920167782, %v4404
        %v4420 = vshrl.u32 1326507024, %v4405
        %v4421 = vor.u32 %v4419, %v4420
        %vm4422 = vcmp.lt.s32.totalorder %v4403, 1
        %vm4423 = vcmp.lt.s32.totalorder %v4403, 2
        %vm4424 = vcmp.lt.s32.totalorder %v4403, 3
        %vm4425 = vcmp.lt.s32.totalorder %v4403, 4
        %v4426 = vsel %vm4422, %v4406, %v4409
        %v4427 = vsel %vm4425, %v4415, 2102212464
        %v4428 = vsel %vm4424, %v4412, %v4427
        %v4429 = vsel %vm4423, %v4426, %v4428
        %v4430 = vsel %vm4422, %v4409, %v4412
        %v4431 = vsel %vm4425, %v4418, 920167782
        %v4432 = vsel %vm4424, %v4415, %v4431
        %v4433 = vsel %vm4423, %v4430, %v4432
        %v4434 = vsel %vm4422, %v4412, %v4415
        %v4435 = vsel %vm4425, %v4421, 1326507024
        %v4436 = vsel %vm4424, %v4418, %v4435
        %v4437 = vsel %vm4423, %v4434, %v4436
        %v4438 = vshll.u32 %v4398, 8
        %v4439 = vmul.u32.u64.compose %v4438, %v4437
        %v4440 = vextract.low.u32 %v4439
        %v4441 = vextract.high.u32 %v4439
        %v4442 = vmul.u32.u64.compose %v4438, %v4433
        %v4443 = vextract.low.u32 %v4442
        %v4444 = vextract.high.u32 %v4442
        %v4445 = vmul.u32 %v4438, %v4429
        %v4446 = vadd.s32 %v4441, %v4443
        %vm4447 = vc.u32 %v4441, %v4443
        %v4448 = vadd.s32 %v4444, 1
        %v4449 = vsel %vm4447, %v4448, %v4444
        %v4450 = vadd.s32 %v4445, %v4449
        %v4451 = vadd.s32 %v4450, 536870912
        %v4452 = vshrl.u32 %v4451, 30
        %v4453 = vshll.u32 %v4452, 30
        %v4454 = vsub.s32 %v4450, %v4453
        %vm4455 = vcmp.lt.s32.totalorder %v4454, 0
        %v4456 = vsub.s32 0, %v4454
        %v4457 = vsel %vm4455, %v4456, %v4454
        %v4458 = vclz %v4457
        %v4459 = vsub.s32 %v4458, 2
        %vm4460 = vcmp.gt.s32.totalorder 0, %v4459
        %v4461 = vsel %vm4460, 0, %v4459
        %v4462 = vsub.s32 32, %v4461
        %v4463 = vshll.u32 %v4454, %v4461
        %v4464 = vshrl.u32 %v4446, %v4462
        %v4465 = vor.u32 %v4463, %v4464
        %v4466 = vsub.s32 4294967266, %v4461
        %v4467 = vadd.s32 %v4466, 127
        %v4468 = vshll.u32 %v4467, 23
        %v4469 = vor.u32 4788187, %v4468
        %v4470 = vand.u32 2147483647, %v4469
        %v4472 = vcvt.s32.f32 %v4465
        %v4473 = vmul.f32 %v4472, %v4470
        %v4474 = vxor.u32 %v4473, 2147483648
        %v4475 = vsel %vm4392, %v4474, %v4473
        %v4476 = vsub.s32 4, %v4452
        %v4477 = vsel %vm4392, %v4476, %v4452
        %v4478 = vsel %vm4391, %v2807, %v4475
        %v4479 = vsel %vm4391, 0, %v4477
        %v4480 = vcosq.f32.pop %v4478
        %v4481 = vsinq.f32.pop %v4478
        %vm4482 = vweird.f32 %v2807
        %v4483 = vadd.s32 %v4479, 3
        %v4484 = vand.u32 %v4483, 3
        %vm4485 = vcmp.lt.s32.totalorder %v4484, 2
        %vm4486 = vcmp.eq.s32.totalorder %v4484, 0
        %v4487 = vxor.u32 %v4481, 2147483648
        %v4488 = vsel %vm4486, %v4480, %v4487
        %vm4489 = vcmp.eq.s32.totalorder %v4484, 2
        %v4490 = vxor.u32 %v4480, 2147483648
        %v4491 = vsel %vm4489, %v4490, %v4481
        %v4492 = vsel %vm4485, %v4488, %v4491
        %v4493 = vsel %vm4482, nan, %v4492
        %v4494 = vand.u32 2147483647, %v2812
        %vm4495 = vcmp.le.f32.partialorder %v4494, 0.7853982
        %vm4496 = vcmp.lt.s32.totalorder %v2812, 0
        %v4497 = vand.u32 %v2812, 2139095040
        %v4498 = vshrl.u32 %v4497, 23
        %v4499 = vsub.s32 %v4498, 127
        %v4500 = vand.u32 2147483647, %v2812
        %v4501 = vand.u32 %v4500, 8388607
        %v4502 = vor.u32 %v4501, 8388608
        %v4503 = vsub.s32 0, %v4502
        %v4504 = vadd.s32 %v4499, 1
        %vm4505 = vcmp.gt.s32.totalorder %v4504, 0
        %v4506 = vsel %vm4505, %v4504, 0
        %v4507 = vshrl.u32 %v4506, 5
        %v4508 = vand.u32 %v4506, 31
        %v4509 = vsub.s32 32, %v4508
        %v4510 = vshrl.u32 683565275, %v4509
        %v4511 = vshll.u32 683565275, %v4508
        %v4512 = vshrl.u32 2475754826, %v4509
        %v4513 = vor.u32 %v4511, %v4512
        %v4514 = vshll.u32 2475754826, %v4508
        %v4515 = vshrl.u32 2131351028, %v4509
        %v4516 = vor.u32 %v4514, %v4515
        %v4517 = vshll.u32 2131351028, %v4508
        %v4518 = vshrl.u32 2102212464, %v4509
        %v4519 = vor.u32 %v4517, %v4518
        %v4520 = vshll.u32 2102212464, %v4508
        %v4521 = vshrl.u32 920167782, %v4509
        %v4522 = vor.u32 %v4520, %v4521
        %v4523 = vshll.u32 920167782, %v4508
        %v4524 = vshrl.u32 1326507024, %v4509
        %v4525 = vor.u32 %v4523, %v4524
        %vm4526 = vcmp.lt.s32.totalorder %v4507, 1
        %vm4527 = vcmp.lt.s32.totalorder %v4507, 2
        %vm4528 = vcmp.lt.s32.totalorder %v4507, 3
        %vm4529 = vcmp.lt.s32.totalorder %v4507, 4
        %v4530 = vsel %vm4526, %v4510, %v4513
        %v4531 = vsel %vm4529, %v4519, 2102212464
        %v4532 = vsel %vm4528, %v4516, %v4531
        %v4533 = vsel %vm4527, %v4530, %v4532
        %v4534 = vsel %vm4526, %v4513, %v4516
        %v4535 = vsel %vm4529, %v4522, 920167782
        %v4536 = vsel %vm4528, %v4519, %v4535
        %v4537 = vsel %vm4527, %v4534, %v4536
        %v4538 = vsel %vm4526, %v4516, %v4519
        %v4539 = vsel %vm4529, %v4525, 1326507024
        %v4540 = vsel %vm4528, %v4522, %v4539
        %v4541 = vsel %vm4527, %v4538, %v4540
        %v4542 = vshll.u32 %v4502, 8
        %v4543 = vmul.u32.u64.compose %v4542, %v4541
        %v4544 = vextract.low.u32 %v4543
        %v4545 = vextract.high.u32 %v4543
        %v4546 = vmul.u32.u64.compose %v4542, %v4537
        %v4547 = vextract.low.u32 %v4546
        %v4548 = vextract.high.u32 %v4546
        %v4549 = vmul.u32 %v4542, %v4533
        %v4550 = vadd.s32 %v4545, %v4547
        %vm4551 = vc.u32 %v4545, %v4547
        %v4552 = vadd.s32 %v4548, 1
        %v4553 = vsel %vm4551, %v4552, %v4548
        %v4554 = vadd.s32 %v4549, %v4553
        %v4555 = vadd.s32 %v4554, 536870912
        %v4556 = vshrl.u32 %v4555, 30
        %v4557 = vshll.u32 %v4556, 30
        %v4558 = vsub.s32 %v4554, %v4557
        %vm4559 = vcmp.lt.s32.totalorder %v4558, 0
        %v4560 = vsub.s32 0, %v4558
        %v4561 = vsel %vm4559, %v4560, %v4558
        %v4562 = vclz %v4561
        %v4563 = vsub.s32 %v4562, 2
        %vm4564 = vcmp.gt.s32.totalorder 0, %v4563
        %v4565 = vsel %vm4564, 0, %v4563
        %v4566 = vsub.s32 32, %v4565
        %v4567 = vshll.u32 %v4558, %v4565
        %v4568 = vshrl.u32 %v4550, %v4566
        %v4569 = vor.u32 %v4567, %v4568
        %v4570 = vsub.s32 4294967266, %v4565
        %v4571 = vadd.s32 %v4570, 127
        %v4572 = vshll.u32 %v4571, 23
        %v4573 = vor.u32 4788187, %v4572
        %v4574 = vand.u32 2147483647, %v4573
        %v4576 = vcvt.s32.f32 %v4569
        %v4577 = vmul.f32 %v4576, %v4574
        %v4578 = vxor.u32 %v4577, 2147483648
        %v4579 = vsel %vm4496, %v4578, %v4577
        %v4580 = vsub.s32 4, %v4556
        %v4581 = vsel %vm4496, %v4580, %v4556
        %v4582 = vsel %vm4495, %v2812, %v4579
        %v4583 = vsel %vm4495, 0, %v4581
        %v4584 = vcosq.f32.pop %v4582
        %v4585 = vsinq.f32.pop %v4582
        %vm4586 = vweird.f32 %v2812
        %v4587 = vadd.s32 %v4583, 3
        %v4588 = vand.u32 %v4587, 3
        %vm4589 = vcmp.lt.s32.totalorder %v4588, 2
        %vm4590 = vcmp.eq.s32.totalorder %v4588, 0
        %v4591 = vxor.u32 %v4585, 2147483648
        %v4592 = vsel %vm4590, %v4584, %v4591
        %vm4593 = vcmp.eq.s32.totalorder %v4588, 2
        %v4594 = vxor.u32 %v4584, 2147483648
        %v4595 = vsel %vm4593, %v4594, %v4585
        %v4596 = vsel %vm4589, %v4592, %v4595
        %v4597 = vsel %vm4586, nan, %v4596
        %v4598 = vand.u32 2147483647, %v2817
        %vm4599 = vcmp.le.f32.partialorder %v4598, 0.7853982
        %vm4600 = vcmp.lt.s32.totalorder %v2817, 0
        %v4601 = vand.u32 %v2817, 2139095040
        %v4602 = vshrl.u32 %v4601, 23
        %v4603 = vsub.s32 %v4602, 127
        %v4604 = vand.u32 2147483647, %v2817
        %v4605 = vand.u32 %v4604, 8388607
        %v4606 = vor.u32 %v4605, 8388608
        %v4607 = vsub.s32 0, %v4606
        %v4608 = vadd.s32 %v4603, 1
        %vm4609 = vcmp.gt.s32.totalorder %v4608, 0
        %v4610 = vsel %vm4609, %v4608, 0
        %v4611 = vshrl.u32 %v4610, 5
        %v4612 = vand.u32 %v4610, 31
        %v4613 = vsub.s32 32, %v4612
        %v4614 = vshrl.u32 683565275, %v4613
        %v4615 = vshll.u32 683565275, %v4612
        %v4616 = vshrl.u32 2475754826, %v4613
        %v4617 = vor.u32 %v4615, %v4616
        %v4618 = vshll.u32 2475754826, %v4612
        %v4619 = vshrl.u32 2131351028, %v4613
        %v4620 = vor.u32 %v4618, %v4619
        %v4621 = vshll.u32 2131351028, %v4612
        %v4622 = vshrl.u32 2102212464, %v4613
        %v4623 = vor.u32 %v4621, %v4622
        %v4624 = vshll.u32 2102212464, %v4612
        %v4625 = vshrl.u32 920167782, %v4613
        %v4626 = vor.u32 %v4624, %v4625
        %v4627 = vshll.u32 920167782, %v4612
        %v4628 = vshrl.u32 1326507024, %v4613
        %v4629 = vor.u32 %v4627, %v4628
        %vm4630 = vcmp.lt.s32.totalorder %v4611, 1
        %vm4631 = vcmp.lt.s32.totalorder %v4611, 2
        %vm4632 = vcmp.lt.s32.totalorder %v4611, 3
        %vm4633 = vcmp.lt.s32.totalorder %v4611, 4
        %v4634 = vsel %vm4630, %v4614, %v4617
        %v4635 = vsel %vm4633, %v4623, 2102212464
        %v4636 = vsel %vm4632, %v4620, %v4635
        %v4637 = vsel %vm4631, %v4634, %v4636
        %v4638 = vsel %vm4630, %v4617, %v4620
        %v4639 = vsel %vm4633, %v4626, 920167782
        %v4640 = vsel %vm4632, %v4623, %v4639
        %v4641 = vsel %vm4631, %v4638, %v4640
        %v4642 = vsel %vm4630, %v4620, %v4623
        %v4643 = vsel %vm4633, %v4629, 1326507024
        %v4644 = vsel %vm4632, %v4626, %v4643
        %v4645 = vsel %vm4631, %v4642, %v4644
        %v4646 = vshll.u32 %v4606, 8
        %v4647 = vmul.u32.u64.compose %v4646, %v4645
        %v4648 = vextract.low.u32 %v4647
        %v4649 = vextract.high.u32 %v4647
        %v4650 = vmul.u32.u64.compose %v4646, %v4641
        %v4651 = vextract.low.u32 %v4650
        %v4652 = vextract.high.u32 %v4650
        %v4653 = vmul.u32 %v4646, %v4637
        %v4654 = vadd.s32 %v4649, %v4651
        %vm4655 = vc.u32 %v4649, %v4651
        %v4656 = vadd.s32 %v4652, 1
        %v4657 = vsel %vm4655, %v4656, %v4652
        %v4658 = vadd.s32 %v4653, %v4657
        %v4659 = vadd.s32 %v4658, 536870912
        %v4660 = vshrl.u32 %v4659, 30
        %v4661 = vshll.u32 %v4660, 30
        %v4662 = vsub.s32 %v4658, %v4661
        %vm4663 = vcmp.lt.s32.totalorder %v4662, 0
        %v4664 = vsub.s32 0, %v4662
        %v4665 = vsel %vm4663, %v4664, %v4662
        %v4666 = vclz %v4665
        %v4667 = vsub.s32 %v4666, 2
        %vm4668 = vcmp.gt.s32.totalorder 0, %v4667
        %v4669 = vsel %vm4668, 0, %v4667
        %v4670 = vsub.s32 32, %v4669
        %v4671 = vshll.u32 %v4662, %v4669
        %v4672 = vshrl.u32 %v4654, %v4670
        %v4673 = vor.u32 %v4671, %v4672
        %v4674 = vsub.s32 4294967266, %v4669
        %v4675 = vadd.s32 %v4674, 127
        %v4676 = vshll.u32 %v4675, 23
        %v4677 = vor.u32 4788187, %v4676
        %v4678 = vand.u32 2147483647, %v4677
        %v4680 = vcvt.s32.f32 %v4673
        %v4681 = vmul.f32 %v4680, %v4678
        %v4682 = vxor.u32 %v4681, 2147483648
        %v4683 = vsel %vm4600, %v4682, %v4681
        %v4684 = vsub.s32 4, %v4660
        %v4685 = vsel %vm4600, %v4684, %v4660
        %v4686 = vsel %vm4599, %v2817, %v4683
        %v4687 = vsel %vm4599, 0, %v4685
        %v4688 = vcosq.f32.pop %v4686
        %v4689 = vsinq.f32.pop %v4686
        %vm4690 = vweird.f32 %v2817
        %v4691 = vadd.s32 %v4687, 3
        %v4692 = vand.u32 %v4691, 3
        %vm4693 = vcmp.lt.s32.totalorder %v4692, 2
        %vm4694 = vcmp.eq.s32.totalorder %v4692, 0
        %v4695 = vxor.u32 %v4689, 2147483648
        %v4696 = vsel %vm4694, %v4688, %v4695
        %vm4697 = vcmp.eq.s32.totalorder %v4692, 2
        %v4698 = vxor.u32 %v4688, 2147483648
        %v4699 = vsel %vm4697, %v4698, %v4689
        %v4700 = vsel %vm4693, %v4696, %v4699
        %v4701 = vsel %vm4690, nan, %v4700
        %v4702 = vand.u32 2147483647, %v2822
        %vm4703 = vcmp.le.f32.partialorder %v4702, 0.7853982
        %vm4704 = vcmp.lt.s32.totalorder %v2822, 0
        %v4705 = vand.u32 %v2822, 2139095040
        %v4706 = vshrl.u32 %v4705, 23
        %v4707 = vsub.s32 %v4706, 127
        %v4708 = vand.u32 2147483647, %v2822
        %v4709 = vand.u32 %v4708, 8388607
        %v4710 = vor.u32 %v4709, 8388608
        %v4711 = vsub.s32 0, %v4710
        %v4712 = vadd.s32 %v4707, 1
        %vm4713 = vcmp.gt.s32.totalorder %v4712, 0
        %v4714 = vsel %vm4713, %v4712, 0
        %v4715 = vshrl.u32 %v4714, 5
        %v4716 = vand.u32 %v4714, 31
        %v4717 = vsub.s32 32, %v4716
        %v4718 = vshrl.u32 683565275, %v4717
        %v4719 = vshll.u32 683565275, %v4716
        %v4720 = vshrl.u32 2475754826, %v4717
        %v4721 = vor.u32 %v4719, %v4720
        %v4722 = vshll.u32 2475754826, %v4716
        %v4723 = vshrl.u32 2131351028, %v4717
        %v4724 = vor.u32 %v4722, %v4723
        %v4725 = vshll.u32 2131351028, %v4716
        %v4726 = vshrl.u32 2102212464, %v4717
        %v4727 = vor.u32 %v4725, %v4726
        %v4728 = vshll.u32 2102212464, %v4716
        %v4729 = vshrl.u32 920167782, %v4717
        %v4730 = vor.u32 %v4728, %v4729
        %v4731 = vshll.u32 920167782, %v4716
        %v4732 = vshrl.u32 1326507024, %v4717
        %v4733 = vor.u32 %v4731, %v4732
        %vm4734 = vcmp.lt.s32.totalorder %v4715, 1
        %vm4735 = vcmp.lt.s32.totalorder %v4715, 2
        %vm4736 = vcmp.lt.s32.totalorder %v4715, 3
        %vm4737 = vcmp.lt.s32.totalorder %v4715, 4
        %v4738 = vsel %vm4734, %v4718, %v4721
        %v4739 = vsel %vm4737, %v4727, 2102212464
        %v4740 = vsel %vm4736, %v4724, %v4739
        %v4741 = vsel %vm4735, %v4738, %v4740
        %v4742 = vsel %vm4734, %v4721, %v4724
        %v4743 = vsel %vm4737, %v4730, 920167782
        %v4744 = vsel %vm4736, %v4727, %v4743
        %v4745 = vsel %vm4735, %v4742, %v4744
        %v4746 = vsel %vm4734, %v4724, %v4727
        %v4747 = vsel %vm4737, %v4733, 1326507024
        %v4748 = vsel %vm4736, %v4730, %v4747
        %v4749 = vsel %vm4735, %v4746, %v4748
        %v4750 = vshll.u32 %v4710, 8
        %v4751 = vmul.u32.u64.compose %v4750, %v4749
        %v4752 = vextract.low.u32 %v4751
        %v4753 = vextract.high.u32 %v4751
        %v4754 = vmul.u32.u64.compose %v4750, %v4745
        %v4755 = vextract.low.u32 %v4754
        %v4756 = vextract.high.u32 %v4754
        %v4757 = vmul.u32 %v4750, %v4741
        %v4758 = vadd.s32 %v4753, %v4755
        %vm4759 = vc.u32 %v4753, %v4755
        %v4760 = vadd.s32 %v4756, 1
        %v4761 = vsel %vm4759, %v4760, %v4756
        %v4762 = vadd.s32 %v4757, %v4761
        %v4763 = vadd.s32 %v4762, 536870912
        %v4764 = vshrl.u32 %v4763, 30
        %v4765 = vshll.u32 %v4764, 30
        %v4766 = vsub.s32 %v4762, %v4765
        %vm4767 = vcmp.lt.s32.totalorder %v4766, 0
        %v4768 = vsub.s32 0, %v4766
        %v4769 = vsel %vm4767, %v4768, %v4766
        %v4770 = vclz %v4769
        %v4771 = vsub.s32 %v4770, 2
        %vm4772 = vcmp.gt.s32.totalorder 0, %v4771
        %v4773 = vsel %vm4772, 0, %v4771
        %v4774 = vsub.s32 32, %v4773
        %v4775 = vshll.u32 %v4766, %v4773
        %v4776 = vshrl.u32 %v4758, %v4774
        %v4777 = vor.u32 %v4775, %v4776
        %v4778 = vsub.s32 4294967266, %v4773
        %v4779 = vadd.s32 %v4778, 127
        %v4780 = vshll.u32 %v4779, 23
        %v4781 = vor.u32 4788187, %v4780
        %v4782 = vand.u32 2147483647, %v4781
        %v4784 = vcvt.s32.f32 %v4777
        %v4785 = vmul.f32 %v4784, %v4782
        %v4786 = vxor.u32 %v4785, 2147483648
        %v4787 = vsel %vm4704, %v4786, %v4785
        %v4788 = vsub.s32 4, %v4764
        %v4789 = vsel %vm4704, %v4788, %v4764
        %v4790 = vsel %vm4703, %v2822, %v4787
        %v4791 = vsel %vm4703, 0, %v4789
        %v4792 = vcosq.f32.pop %v4790
        %v4793 = vsinq.f32.pop %v4790
        %vm4794 = vweird.f32 %v2822
        %v4795 = vadd.s32 %v4791, 3
        %v4796 = vand.u32 %v4795, 3
        %vm4797 = vcmp.lt.s32.totalorder %v4796, 2
        %vm4798 = vcmp.eq.s32.totalorder %v4796, 0
        %v4799 = vxor.u32 %v4793, 2147483648
        %v4800 = vsel %vm4798, %v4792, %v4799
        %vm4801 = vcmp.eq.s32.totalorder %v4796, 2
        %v4802 = vxor.u32 %v4792, 2147483648
        %v4803 = vsel %vm4801, %v4802, %v4793
        %v4804 = vsel %vm4797, %v4800, %v4803
        %v4805 = vsel %vm4794, nan, %v4804
        %v4806 = vand.u32 2147483647, %v2827
        %vm4807 = vcmp.le.f32.partialorder %v4806, 0.7853982
        %vm4808 = vcmp.lt.s32.totalorder %v2827, 0
        %v4809 = vand.u32 %v2827, 2139095040
        %v4810 = vshrl.u32 %v4809, 23
        %v4811 = vsub.s32 %v4810, 127
        %v4812 = vand.u32 2147483647, %v2827
        %v4813 = vand.u32 %v4812, 8388607
        %v4814 = vor.u32 %v4813, 8388608
        %v4815 = vsub.s32 0, %v4814
        %v4816 = vadd.s32 %v4811, 1
        %vm4817 = vcmp.gt.s32.totalorder %v4816, 0
        %v4818 = vsel %vm4817, %v4816, 0
        %v4819 = vshrl.u32 %v4818, 5
        %v4820 = vand.u32 %v4818, 31
        %v4821 = vsub.s32 32, %v4820
        %v4822 = vshrl.u32 683565275, %v4821
        %v4823 = vshll.u32 683565275, %v4820
        %v4824 = vshrl.u32 2475754826, %v4821
        %v4825 = vor.u32 %v4823, %v4824
        %v4826 = vshll.u32 2475754826, %v4820
        %v4827 = vshrl.u32 2131351028, %v4821
        %v4828 = vor.u32 %v4826, %v4827
        %v4829 = vshll.u32 2131351028, %v4820
        %v4830 = vshrl.u32 2102212464, %v4821
        %v4831 = vor.u32 %v4829, %v4830
        %v4832 = vshll.u32 2102212464, %v4820
        %v4833 = vshrl.u32 920167782, %v4821
        %v4834 = vor.u32 %v4832, %v4833
        %v4835 = vshll.u32 920167782, %v4820
        %v4836 = vshrl.u32 1326507024, %v4821
        %v4837 = vor.u32 %v4835, %v4836
        %vm4838 = vcmp.lt.s32.totalorder %v4819, 1
        %vm4839 = vcmp.lt.s32.totalorder %v4819, 2
        %vm4840 = vcmp.lt.s32.totalorder %v4819, 3
        %vm4841 = vcmp.lt.s32.totalorder %v4819, 4
        %v4842 = vsel %vm4838, %v4822, %v4825
        %v4843 = vsel %vm4841, %v4831, 2102212464
        %v4844 = vsel %vm4840, %v4828, %v4843
        %v4845 = vsel %vm4839, %v4842, %v4844
        %v4846 = vsel %vm4838, %v4825, %v4828
        %v4847 = vsel %vm4841, %v4834, 920167782
        %v4848 = vsel %vm4840, %v4831, %v4847
        %v4849 = vsel %vm4839, %v4846, %v4848
        %v4850 = vsel %vm4838, %v4828, %v4831
        %v4851 = vsel %vm4841, %v4837, 1326507024
        %v4852 = vsel %vm4840, %v4834, %v4851
        %v4853 = vsel %vm4839, %v4850, %v4852
        %v4854 = vshll.u32 %v4814, 8
        %v4855 = vmul.u32.u64.compose %v4854, %v4853
        %v4856 = vextract.low.u32 %v4855
        %v4857 = vextract.high.u32 %v4855
        %v4858 = vmul.u32.u64.compose %v4854, %v4849
        %v4859 = vextract.low.u32 %v4858
        %v4860 = vextract.high.u32 %v4858
        %v4861 = vmul.u32 %v4854, %v4845
        %v4862 = vadd.s32 %v4857, %v4859
        %vm4863 = vc.u32 %v4857, %v4859
        %v4864 = vadd.s32 %v4860, 1
        %v4865 = vsel %vm4863, %v4864, %v4860
        %v4866 = vadd.s32 %v4861, %v4865
        %v4867 = vadd.s32 %v4866, 536870912
        %v4868 = vshrl.u32 %v4867, 30
        %v4869 = vshll.u32 %v4868, 30
        %v4870 = vsub.s32 %v4866, %v4869
        %vm4871 = vcmp.lt.s32.totalorder %v4870, 0
        %v4872 = vsub.s32 0, %v4870
        %v4873 = vsel %vm4871, %v4872, %v4870
        %v4874 = vclz %v4873
        %v4875 = vsub.s32 %v4874, 2
        %vm4876 = vcmp.gt.s32.totalorder 0, %v4875
        %v4877 = vsel %vm4876, 0, %v4875
        %v4878 = vsub.s32 32, %v4877
        %v4879 = vshll.u32 %v4870, %v4877
        %v4880 = vshrl.u32 %v4862, %v4878
        %v4881 = vor.u32 %v4879, %v4880
        %v4882 = vsub.s32 4294967266, %v4877
        %v4883 = vadd.s32 %v4882, 127
        %v4884 = vshll.u32 %v4883, 23
        %v4885 = vor.u32 4788187, %v4884
        %v4886 = vand.u32 2147483647, %v4885
        %v4888 = vcvt.s32.f32 %v4881
        %v4889 = vmul.f32 %v4888, %v4886
        %v4890 = vxor.u32 %v4889, 2147483648
        %v4891 = vsel %vm4808, %v4890, %v4889
        %v4892 = vsub.s32 4, %v4868
        %v4893 = vsel %vm4808, %v4892, %v4868
        %v4894 = vsel %vm4807, %v2827, %v4891
        %v4895 = vsel %vm4807, 0, %v4893
        %v4896 = vcosq.f32.pop %v4894
        %v4897 = vsinq.f32.pop %v4894
        %vm4898 = vweird.f32 %v2827
        %v4899 = vadd.s32 %v4895, 3
        %v4900 = vand.u32 %v4899, 3
        %vm4901 = vcmp.lt.s32.totalorder %v4900, 2
        %vm4902 = vcmp.eq.s32.totalorder %v4900, 0
        %v4903 = vxor.u32 %v4897, 2147483648
        %v4904 = vsel %vm4902, %v4896, %v4903
        %vm4905 = vcmp.eq.s32.totalorder %v4900, 2
        %v4906 = vxor.u32 %v4896, 2147483648
        %v4907 = vsel %vm4905, %v4906, %v4897
        %v4908 = vsel %vm4901, %v4904, %v4907
        %v4909 = vsel %vm4898, nan, %v4908
        %v4910 = vadd.f32 %v246, %v2933
        %v4911 = vadd.f32 %v247, %v3037
        %v4912 = vadd.f32 %v248, %v3141
        %v4913 = vadd.f32 %v249, %v3245
        %v4914 = vadd.f32 %v250, %v3349
        %v4915 = vadd.f32 %v251, %v3453
        %v4916 = vadd.f32 %v252, %v3557
        %v4917 = vadd.f32 %v253, %v3661
        %v4918 = vadd.f32 %v254, %v3765
        %v4919 = vadd.f32 %v255, %v3869
        %v4920 = vadd.f32 %v256, %v3973
        %v4921 = vadd.f32 %v257, %v4077
        %v4922 = vadd.f32 %v258, %v4181
        %v4923 = vadd.f32 %v259, %v4285
        %v4924 = vadd.f32 %v260, %v4389
        %v4925 = vadd.f32 %v261, %v4493
        %v4926 = vadd.f32 %v262, %v4597
        %v4927 = vadd.f32 %v263, %v4701
        %v4928 = vadd.f32 %v264, %v4805
        %v4929 = vadd.f32 %v265, %v4909
        %4930 = vst.msk [vmem:[%s226] sm:$0xff] %vm279, %v4910
        %4931 = vst.msk [vmem:[%s226 + $0x8] sm:$0xff] %vm279, %v4911
        %4932 = vst.msk [vmem:[%s226 + $0x10] sm:$0xff] %vm279, %v4912
        %4933 = vst.msk [vmem:[%s226 + $0x18] sm:$0xff] %vm279, %v4913
        %4934 = vst.msk [vmem:[%s226 + $0x20] sm:$0xff] %vm279, %v4914
        %4935 = vst.msk [vmem:[%s226 + $0x28] sm:$0xff] %vm279, %v4915
        %4936 = vst.msk [vmem:[%s226 + $0x30] sm:$0xff] %vm279, %v4916
        %4937 = vst.msk [vmem:[%s226 + $0x38] sm:$0xff] %vm279, %v4917
        %4938 = vst.msk [vmem:[%s226 + $0x40] sm:$0xff] %vm279, %v4918
        %4939 = vst.msk [vmem:[%s226 + $0x48] sm:$0xff] %vm279, %v4919
        %4940 = vst.msk [vmem:[%s226 + $0x50] sm:$0xff] %vm279, %v4920
        %4941 = vst.msk [vmem:[%s226 + $0x58] sm:$0xff] %vm279, %v4921
        %4942 = vst.msk [vmem:[%s226 + $0x60] sm:$0xff] %vm279, %v4922
        %4943 = vst.msk [vmem:[%s226 + $0x68] sm:$0xff] %vm279, %v4923
        %4944 = vst.msk [vmem:[%s226 + $0x70] sm:$0xff] %vm279, %v4924
        %4945 = vst.msk [vmem:[%s226 + $0x78] sm:$0xff] %vm279, %v4925
        %4946 = vst.msk [vmem:[%s226 + $0x80] sm:$0xff] %vm279, %v4926
        %4947 = vst.msk [vmem:[%s226 + $0x88] sm:$0xff] %vm279, %v4927
        %4948 = vst.msk [vmem:[%s226 + $0x90] sm:$0xff] %vm279, %v4928
        %4949 = vst.msk [vmem:[%s226 + $0x98] sm:$0xff] %vm279, %v4929
        %s4950 = sand.u32 %s134, 1
        %s4951 = sand.u32 %s134, 1
        %s4952 = smul.addr %s4951, 160
        %s4953 = scalar_lea.vmem [#allocation2], %s4952
        // Predicated region
        $region41: #{tpu_custom_call.1} parent=39 // pred_check
          %p4954 = pneg %p144
        $region42: #{tpu_custom_call.1} parent=39 // pred_check_branch
          %4956 = sbr.rel (%p4954) target = $region44
        $region43: #{tpu_custom_call.1} parent=39 // pred_region
          %s4957 = smul.u32 20, %s16
          %s4958 = ssub.s32 38, %s4957
          %p4959 = scmp.lt.s32.totalorder %s4958, 20
          %s4960 = scalar_select %p4959, %s4958, 20
          %s4961 = smul.u32 128, %s4960
          %p4962 = scmp.ne.s32.totalorder 0, %s4961
          %s4963 = smul.addr %s4957, 8
          %s4964 = scalar_lea.vmem %s5, %s4963
          // Predicated region
          $region45: #{tpu_custom_call.1} parent=43 // pred_check
            %p4965 = pneg %p4962
          $region46: #{tpu_custom_call.1} parent=43 // pred_check_branch
            %4967 = sbr.rel (%p4965) target = $region48
          $region47: #{tpu_custom_call.1} parent=43 // pred_region
            // Predicated region
            $region49: #{tpu_custom_call.1} parent=47 // pred_check
              _
            $region50: #{tpu_custom_call.1} parent=47 // pred_check_branch
              %4969 = sbr.rel (0) target = $region52
            $region51: #{tpu_custom_call.1} parent=47 // pred_region
              // Predicated region
              $region71: #{tpu_custom_call.1} parent=51 // pred_check
                _
              $region72: #{tpu_custom_call.1} parent=51 // pred_check_branch
                %5057 = sbr.rel (0) target = $region74
              $region73: #{tpu_custom_call.1} parent=51 // pred_region
                %s5058 = sdiv.u32.pop %s4960, 20
                %s5059 = srem.u32.pop %s4960, 20
                // While loop
                $region75: #{tpu_custom_call.1} parent=73 // loop_pre_header
                  _
                $region76: #{tpu_custom_call.1} parent=73 // loop_header
                  %s5061 = sphi 0, %s5063
                  %p5062 = scmp.ge.s32.totalorder %s5061, %s5058
                  %s5066 = sphi 0, %s5111
                  %s5067 = sphi %s4953, %s5114
                  %s5068 = sphi %s4964, %s5115
                $region77: #{tpu_custom_call.1} parent=73 // loop_header_branch
                  %5065 = sbr.rel (%p5062) target = $region81
                $region78: #{tpu_custom_call.1} parent=73 // loop_body
                  %v5069 = vld [vmem:[%s5067] sm:$0xff]
                  %5070 = vst [vmem:[%s5068] sm:$0xff] %v5069
                  %v5071 = vld [vmem:[%s5067 + $0x8] sm:$0xff]
                  %5072 = vst [vmem:[%s5068 + $0x8] sm:$0xff] %v5071
                  %v5073 = vld [vmem:[%s5067 + $0x10] sm:$0xff]
                  %5074 = vst [vmem:[%s5068 + $0x10] sm:$0xff] %v5073
                  %v5075 = vld [vmem:[%s5067 + $0x18] sm:$0xff]
                  %5076 = vst [vmem:[%s5068 + $0x18] sm:$0xff] %v5075
                  %v5077 = vld [vmem:[%s5067 + $0x20] sm:$0xff]
                  %5078 = vst [vmem:[%s5068 + $0x20] sm:$0xff] %v5077
                  %v5079 = vld [vmem:[%s5067 + $0x28] sm:$0xff]
                  %5080 = vst [vmem:[%s5068 + $0x28] sm:$0xff] %v5079
                  %v5081 = vld [vmem:[%s5067 + $0x30] sm:$0xff]
                  %5082 = vst [vmem:[%s5068 + $0x30] sm:$0xff] %v5081
                  %v5083 = vld [vmem:[%s5067 + $0x38] sm:$0xff]
                  %5084 = vst [vmem:[%s5068 + $0x38] sm:$0xff] %v5083
                  %v5085 = vld [vmem:[%s5067 + $0x40] sm:$0xff]
                  %5086 = vst [vmem:[%s5068 + $0x40] sm:$0xff] %v5085
                  %v5087 = vld [vmem:[%s5067 + $0x48] sm:$0xff]
                  %5088 = vst [vmem:[%s5068 + $0x48] sm:$0xff] %v5087
                  %v5089 = vld [vmem:[%s5067 + $0x50] sm:$0xff]
                  %5090 = vst [vmem:[%s5068 + $0x50] sm:$0xff] %v5089
                  %v5091 = vld [vmem:[%s5067 + $0x58] sm:$0xff]
                  %5092 = vst [vmem:[%s5068 + $0x58] sm:$0xff] %v5091
                  %v5093 = vld [vmem:[%s5067 + $0x60] sm:$0xff]
                  %5094 = vst [vmem:[%s5068 + $0x60] sm:$0xff] %v5093
                  %v5095 = vld [vmem:[%s5067 + $0x68] sm:$0xff]
                  %5096 = vst [vmem:[%s5068 + $0x68] sm:$0xff] %v5095
                  %v5097 = vld [vmem:[%s5067 + $0x70] sm:$0xff]
                  %5098 = vst [vmem:[%s5068 + $0x70] sm:$0xff] %v5097
                  %v5099 = vld [vmem:[%s5067 + $0x78] sm:$0xff]
                  %5100 = vst [vmem:[%s5068 + $0x78] sm:$0xff] %v5099
                  %v5101 = vld [vmem:[%s5067 + $0x80] sm:$0xff]
                  %5102 = vst [vmem:[%s5068 + $0x80] sm:$0xff] %v5101
                  %v5103 = vld [vmem:[%s5067 + $0x88] sm:$0xff]
                  %5104 = vst [vmem:[%s5068 + $0x88] sm:$0xff] %v5103
                  %v5105 = vld [vmem:[%s5067 + $0x90] sm:$0xff]
                  %5106 = vst [vmem:[%s5068 + $0x90] sm:$0xff] %v5105
                  %v5107 = vld [vmem:[%s5067 + $0x98] sm:$0xff]
                  %5108 = vst [vmem:[%s5068 + $0x98] sm:$0xff] %v5107
                  %s5109 = sadd.s32 1, %s5066
                  %p5110 = scmp.ge.s32.totalorder %s5109, %s5058
                  %s5111 = scalar_select %p5110, 0, %s5109
                  %s5112 = smul.u32 %s5111, 160
                  %s5113 = smul.u32 %s5111, 160
                  %s5114 = scalar_lea.vmem %s4953, %s5112 [#allocation2]
                  %s5115 = scalar_lea.vmem %s4964, %s5113
                $region79: #{tpu_custom_call.1} parent=73 // loop_footer
                  %s5063 = sadd.s32 %s5061, 1
                $region80: #{tpu_custom_call.1} parent=73 // loop_footer_branch
                  %5060 = sbr.rel target = $region76
                $region81: #{tpu_custom_call.1} parent=73 // loop_exit
                  _
                %s5116 = sdiv.u32.pop %s4960, 20
                %s5117 = srem.u32.pop %s4960, 20
                %s5118 = smul.u32 %s5116, 20
                %s5119 = smul.u32 8, %s5118
                %s5120 = scalar_lea.vmem %s4953, %s5119 [#allocation2]
                %s5121 = smul.u32 8, %s5118
                %s5122 = scalar_lea.vmem %s4964, %s5121
                // While loop
                $region82: #{tpu_custom_call.1} parent=73 // loop_pre_header
                  _
                $region83: #{tpu_custom_call.1} parent=73 // loop_header
                  %s5124 = sphi 0, %s5126
                  %p5125 = scmp.ge.s32.totalorder %s5124, %s5117
                  %s5129 = sphi 0, %s5136
                  %s5130 = sphi %s5120, %s5139
                  %s5131 = sphi %s5122, %s5140
                $region84: #{tpu_custom_call.1} parent=73 // loop_header_branch
                  %5128 = sbr.rel (%p5125) target = $region88
                $region85: #{tpu_custom_call.1} parent=73 // loop_body
                  %v5132 = vld [vmem:[%s5130] sm:$0xff]
                  %5133 = vst [vmem:[%s5131] sm:$0xff] %v5132
                  %s5134 = sadd.s32 1, %s5129
                  %p5135 = scmp.ge.s32.totalorder %s5134, %s5117
                  %s5136 = scalar_select %p5135, 0, %s5134
                  %s5137 = smul.u32 %s5136, 8
                  %s5138 = smul.u32 %s5136, 8
                  %s5139 = scalar_lea.vmem %s5120, %s5137 [#allocation2]
                  %s5140 = scalar_lea.vmem %s5122, %s5138
                $region86: #{tpu_custom_call.1} parent=73 // loop_footer
                  %s5126 = sadd.s32 %s5124, 1
                $region87: #{tpu_custom_call.1} parent=73 // loop_footer_branch
                  %5123 = sbr.rel target = $region83
                $region88: #{tpu_custom_call.1} parent=73 // loop_exit
                  _
              $region74: #{tpu_custom_call.1} parent=51 // pred_fallthru
                _
              // Predicated region
              $region89: #{tpu_custom_call.1} parent=51 // pred_check
                _
              $region90: #{tpu_custom_call.1} parent=51 // pred_check_branch
                %5142 = sbr.rel target = $region92
              $region91: #{tpu_custom_call.1} parent=51 // pred_region
                _
              $region92: #{tpu_custom_call.1} parent=51 // pred_fallthru
                _
            $region52: #{tpu_custom_call.1} parent=47 // pred_fallthru
              _
            // Predicated region
            $region53: #{tpu_custom_call.1} parent=47 // pred_check
              _
            $region54: #{tpu_custom_call.1} parent=47 // pred_check_branch
              %4971 = sbr.rel target = $region56
            $region55: #{tpu_custom_call.1} parent=47 // pred_region
              %s4973 = sdiv.u32.pop %s4960, 20
              %s4974 = srem.u32.pop %s4960, 20
              // While loop
              $region57: #{tpu_custom_call.1} parent=55 // loop_pre_header
                _
              $region58: #{tpu_custom_call.1} parent=55 // loop_header
                %s4976 = sphi 0, %s4978
                %p4977 = scmp.ge.s32.totalorder %s4976, %s4973
                %s4981 = sphi 0, %s5026
                %s4982 = sphi %s4953, %s5029
                %s4983 = sphi %s4964, %s5030
              $region59: #{tpu_custom_call.1} parent=55 // loop_header_branch
                %4980 = sbr.rel (%p4977) target = $region63
              $region60: #{tpu_custom_call.1} parent=55 // loop_body
                %v4984 = vld [vmem:[%s4982] sm:$0xff]
                %4985 = vst [vmem:[%s4983] sm:$0xff] %v4984
                %v4986 = vld [vmem:[%s4982 + $0x8] sm:$0xff]
                %4987 = vst [vmem:[%s4983 + $0x8] sm:$0xff] %v4986
                %v4988 = vld [vmem:[%s4982 + $0x10] sm:$0xff]
                %4989 = vst [vmem:[%s4983 + $0x10] sm:$0xff] %v4988
                %v4990 = vld [vmem:[%s4982 + $0x18] sm:$0xff]
                %4991 = vst [vmem:[%s4983 + $0x18] sm:$0xff] %v4990
                %v4992 = vld [vmem:[%s4982 + $0x20] sm:$0xff]
                %4993 = vst [vmem:[%s4983 + $0x20] sm:$0xff] %v4992
                %v4994 = vld [vmem:[%s4982 + $0x28] sm:$0xff]
                %4995 = vst [vmem:[%s4983 + $0x28] sm:$0xff] %v4994
                %v4996 = vld [vmem:[%s4982 + $0x30] sm:$0xff]
                %4997 = vst [vmem:[%s4983 + $0x30] sm:$0xff] %v4996
                %v4998 = vld [vmem:[%s4982 + $0x38] sm:$0xff]
                %4999 = vst [vmem:[%s4983 + $0x38] sm:$0xff] %v4998
                %v5000 = vld [vmem:[%s4982 + $0x40] sm:$0xff]
                %5001 = vst [vmem:[%s4983 + $0x40] sm:$0xff] %v5000
                %v5002 = vld [vmem:[%s4982 + $0x48] sm:$0xff]
                %5003 = vst [vmem:[%s4983 + $0x48] sm:$0xff] %v5002
                %v5004 = vld [vmem:[%s4982 + $0x50] sm:$0xff]
                %5005 = vst [vmem:[%s4983 + $0x50] sm:$0xff] %v5004
                %v5006 = vld [vmem:[%s4982 + $0x58] sm:$0xff]
                %5007 = vst [vmem:[%s4983 + $0x58] sm:$0xff] %v5006
                %v5008 = vld [vmem:[%s4982 + $0x60] sm:$0xff]
                %5009 = vst [vmem:[%s4983 + $0x60] sm:$0xff] %v5008
                %v5010 = vld [vmem:[%s4982 + $0x68] sm:$0xff]
                %5011 = vst [vmem:[%s4983 + $0x68] sm:$0xff] %v5010
                %v5012 = vld [vmem:[%s4982 + $0x70] sm:$0xff]
                %5013 = vst [vmem:[%s4983 + $0x70] sm:$0xff] %v5012
                %v5014 = vld [vmem:[%s4982 + $0x78] sm:$0xff]
                %5015 = vst [vmem:[%s4983 + $0x78] sm:$0xff] %v5014
                %v5016 = vld [vmem:[%s4982 + $0x80] sm:$0xff]
                %5017 = vst [vmem:[%s4983 + $0x80] sm:$0xff] %v5016
                %v5018 = vld [vmem:[%s4982 + $0x88] sm:$0xff]
                %5019 = vst [vmem:[%s4983 + $0x88] sm:$0xff] %v5018
                %v5020 = vld [vmem:[%s4982 + $0x90] sm:$0xff]
                %5021 = vst [vmem:[%s4983 + $0x90] sm:$0xff] %v5020
                %v5022 = vld [vmem:[%s4982 + $0x98] sm:$0xff]
                %5023 = vst [vmem:[%s4983 + $0x98] sm:$0xff] %v5022
                %s5024 = sadd.s32 1, %s4981
                %p5025 = scmp.ge.s32.totalorder %s5024, %s4973
                %s5026 = scalar_select %p5025, 0, %s5024
                %s5027 = smul.u32 %s5026, 160
                %s5028 = smul.u32 %s5026, 160
                %s5029 = scalar_lea.vmem %s4953, %s5027 [#allocation2]
                %s5030 = scalar_lea.vmem %s4964, %s5028
              $region61: #{tpu_custom_call.1} parent=55 // loop_footer
                %s4978 = sadd.s32 %s4976, 1
              $region62: #{tpu_custom_call.1} parent=55 // loop_footer_branch
                %4975 = sbr.rel target = $region58
              $region63: #{tpu_custom_call.1} parent=55 // loop_exit
                _
              %s5031 = sdiv.u32.pop %s4960, 20
              %s5032 = srem.u32.pop %s4960, 20
              %s5033 = smul.u32 %s5031, 20
              %s5034 = smul.u32 8, %s5033
              %s5035 = scalar_lea.vmem %s4953, %s5034 [#allocation2]
              %s5036 = smul.u32 8, %s5033
              %s5037 = scalar_lea.vmem %s4964, %s5036
              // While loop
              $region64: #{tpu_custom_call.1} parent=55 // loop_pre_header
                _
              $region65: #{tpu_custom_call.1} parent=55 // loop_header
                %s5039 = sphi 0, %s5041
                %p5040 = scmp.ge.s32.totalorder %s5039, %s5032
                %s5044 = sphi 0, %s5051
                %s5045 = sphi %s5035, %s5054
                %s5046 = sphi %s5037, %s5055
              $region66: #{tpu_custom_call.1} parent=55 // loop_header_branch
                %5043 = sbr.rel (%p5040) target = $region70
              $region67: #{tpu_custom_call.1} parent=55 // loop_body
                %v5047 = vld [vmem:[%s5045] sm:$0xff]
                %5048 = vst [vmem:[%s5046] sm:$0xff] %v5047
                %s5049 = sadd.s32 1, %s5044
                %p5050 = scmp.ge.s32.totalorder %s5049, %s5032
                %s5051 = scalar_select %p5050, 0, %s5049
                %s5052 = smul.u32 %s5051, 8
                %s5053 = smul.u32 %s5051, 8
                %s5054 = scalar_lea.vmem %s5035, %s5052 [#allocation2]
                %s5055 = scalar_lea.vmem %s5037, %s5053
              $region68: #{tpu_custom_call.1} parent=55 // loop_footer
                %s5041 = sadd.s32 %s5039, 1
              $region69: #{tpu_custom_call.1} parent=55 // loop_footer_branch
                %5038 = sbr.rel target = $region65
              $region70: #{tpu_custom_call.1} parent=55 // loop_exit
                _
            $region56: #{tpu_custom_call.1} parent=47 // pred_fallthru
              _
          $region48: #{tpu_custom_call.1} parent=43 // pred_fallthru
            _
          %5143 = vnop
        $region44: #{tpu_custom_call.1} parent=39 // pred_fallthru
          _
      $region40: #{tpu_custom_call.1} parent=5 // pred_fallthru
        _
      %p5144 = scmp.le.s32.totalorder 2, %s11
      // Predicated region
      $region93: #{tpu_custom_call.1} parent=5 // pred_check
        %p5145 = pneg %p5144
      $region94: #{tpu_custom_call.1} parent=5 // pred_check_branch
        %5147 = sbr.rel (%p5145) target = $region96
      $region95: #{tpu_custom_call.1} parent=5 // pred_region
        %s5148 = ssub.s32 %s11, 2
        // Predicated region
        $region97: #{tpu_custom_call.1} parent=95 // pred_check
          %p5149 = pneg %p150
        $region98: #{tpu_custom_call.1} parent=95 // pred_check_branch
          %5151 = sbr.rel (%p5149) target = $region100
        $region99: #{tpu_custom_call.1} parent=95 // pred_region
          %s5152 = sand.u32 %s135, 1
          %s5153 = sand.u32 %s135, 1
          %s5154 = smul.addr %s5153, 160
          %s5155 = scalar_lea.vmem [#allocation2], %s5154
        $region100: #{tpu_custom_call.1} parent=95 // pred_fallthru
          _
      $region96: #{tpu_custom_call.1} parent=5 // pred_fallthru
        _
    $region6: #{tpu_custom_call.1} parent=1 // loop_footer
      %s15 = sadd.s32 1, %s11
    $region7: #{tpu_custom_call.1} parent=1 // loop_footer_branch
      %10 = sbr.rel target = $region3
    $region8: #{tpu_custom_call.1} parent=1 // loop_exit
      _

</llo_original>
